<compile_context>
chip_gen: v7x
topology: tpu7x:2x2x1
jax: 0.10.0
libtpu: 0.0.40
codegen_flags: <defaults>
</compile_context>

<pallas_src>
import jax
import jax.numpy as jnp
import numpy as np
from jax.experimental import pallas as pl
from jax.experimental.pallas import tpu as pltpu

# ---- hyperparameters (synthetic "hp") ----
H = 32     # hp.num_hidden_nodes  (LSTM input size)
NB = 32    # hp.num_baseline_nodes (LSTM hidden size per direction)
NE = 4     # hp.num_emotion
B = 2      # batch
T = 8      # text sequence length
TH = 8     # acoustic sequence length

GW = 8 * NB      # fused gate width (2 directions x 4 gates)       = 256
SW = 2 * NB      # fused state width (fwd | bwd)                    = 64
NSIG = 6 * NB    # sigmoid lanes: i_f,i_b,f_f,f_b,o_f,o_b           = 192


def wordlevel_kernel(
    xg0_ref,      # (T, B, 8*NB)  layer-0 input gates (arranged, bias folded)
    hbatch_ref,   # (B, TH, 2*NB)
    wbd0_ref,     # (2*NB, 8*NB)  layer-0 block-diagonal recurrent weights
    wbd1_ref,     # (2*NB, 8*NB)  layer-1 block-diagonal recurrent weights
    w1p_ref,      # (2*NB, 8*NB)  layer-1 input weights, same-index term
    w1q_ref,      # (2*NB, 8*NB)  layer-1 input weights, reversed-index term
    b1_ref,       # (1, 8*NB)     layer-1 combined bias (arranged)
    wta_ref,      # (4*NB, 2*NB)  fused fc_text|fc_acoustic (mean scales folded)
    bta_ref,      # (1, 2*NB)
    wd_ref,       # (2*NB, NB)    dense
    bd_ref,       # (1, NB)
    wo_ref,       # (NB, NE)      output
    bo_ref,       # (1, NE)
    out_ref,      # (B, NE)
    hstk_ref,     # scratch (T, B, 2*NB): layer-0 fused hidden states
):
    t_len, batch, _ = xg0_ref.shape

    def cell(gates, h, c):
        # gate lanes: [i_f,i_b | f_f,f_b | o_f,o_b | g_f,g_b], each NB wide.
        sig = jax.nn.sigmoid(gates[:, :NSIG])         # one wide EUP pass
        g = jnp.tanh(gates[:, NSIG:])                 # one tanh pass
        i = sig[:, 0:SW]
        f = sig[:, SW:2 * SW]
        o = sig[:, 2 * SW:3 * SW]
        c_new = f * c + i * g
        h_new = o * jnp.tanh(c_new)
        return h_new, c_new

    # Hoist weight/bias reads & broadcasts out of the recurrent loops.
    wbd0 = wbd0_ref[...]
    wbd1 = wbd1_ref[...]
    w1p = w1p_ref[...]
    w1q = w1q_ref[...]
    b1 = jnp.broadcast_to(b1_ref[...], (batch, GW))

    zeros_s = jnp.zeros((batch, SW), jnp.float32)

    # -------- layer 0: fused fwd/bwd recurrence (fully unrolled) --------
    h, c = zeros_s, zeros_s
    for t in range(t_len):
        gates = xg0_ref[t] + jnp.dot(h, wbd0, preferred_element_type=jnp.float32)
        h, c = cell(gates, h, c)
        hstk_ref[t] = h          # lanes [:NB] = fwd h(t), [NB:] = bwd h(T-1-t)

    # -------- layer 1: fused fwd/bwd recurrence + time-sum (unrolled) --------
    h, c = zeros_s, zeros_s
    acc = zeros_s
    for s in range(t_len):
        # Input projection: independent of the recurrent carry -> overlappable.
        xin = (jnp.dot(hstk_ref[s], w1p, preferred_element_type=jnp.float32)
               + jnp.dot(hstk_ref[t_len - 1 - s], w1q,
                         preferred_element_type=jnp.float32)
               + b1)
        gates = xin + jnp.dot(h, wbd1, preferred_element_type=jnp.float32)
        h, c = cell(gates, h, c)
        acc = acc + h            # sums fwd outputs over t and bwd outputs over t

    # -------- tail MLP (1/T and 1/TH folded into wta) --------
    acoustic_sum = jnp.sum(hbatch_ref[...], axis=1)            # (B, 2*NB)
    ta = jnp.concatenate([acc, acoustic_sum], axis=-1)         # (B, 4*NB)
    maxp = jnp.dot(ta, wta_ref[...], preferred_element_type=jnp.float32) + bta_ref[...]
    res = jnp.maximum(
        jnp.dot(maxp, wd_ref[...], preferred_element_type=jnp.float32) + bd_ref[...],
        0.0)
    out_ref[...] = (jnp.dot(res, wo_ref[...], preferred_element_type=jnp.float32)
                    + bo_ref[...])


def _arrange_dir(w, direction):
    """Map a per-direction (..., 4*NB) weight/bias from PyTorch gate order
    (i, f, g, o) to the fused lane layout [i_f,i_b, f_f,f_b, o_f,o_b, g_f,g_b]
    (each NB lanes); the other direction's lanes are zero."""
    i = w[..., 0 * NB:1 * NB]
    f = w[..., 1 * NB:2 * NB]
    g = w[..., 2 * NB:3 * NB]
    o = w[..., 3 * NB:4 * NB]
    z = jnp.zeros_like(i)
    if direction == 0:       # forward direction
        parts = (i, z, f, z, o, z, g, z)
    else:                    # backward direction
        parts = (z, i, z, f, z, o, z, g)
    return jnp.concatenate(parts, axis=-1)


@jax.jit
def wordlevel_encoder(sbatch, hbatch, params):
    """sbatch: (B, T, H), hbatch: (B, TH, 2*NB) -> emotion logits (B, NE)."""
    batch, t_len, _ = sbatch.shape
    th_len = hbatch.shape[1]

    # ---- layer-0 input projection, hoisted out of the recurrence ----
    wf0 = _arrange_dir(params["w_ih_l0"][0], 0)                  # (H, 8*NB)
    wb0 = _arrange_dir(params["w_ih_l0"][1], 1)                  # (H, 8*NB)
    b0 = _arrange_dir(params["b_l0"][0], 0) + _arrange_dir(params["b_l0"][1], 1)
    proj_f = jnp.einsum('bth,hg->tbg', sbatch, wf0)              # fwd dir @ t
    proj_b = jnp.einsum('bth,hg->tbg', sbatch, wb0)              # bwd dir @ t
    xg0 = proj_f + proj_b[::-1] + b0                             # (T, B, 8*NB)

    # ---- block-diagonal recurrent weights (fwd rows | bwd rows) ----
    wbd0 = jnp.concatenate([_arrange_dir(params["w_hh_l0"][0], 0),
                            _arrange_dir(params["w_hh_l0"][1], 1)], axis=0)
    wbd1 = jnp.concatenate([_arrange_dir(params["w_hh_l1"][0], 0),
                            _arrange_dir(params["w_hh_l1"][1], 1)], axis=0)

    # ---- layer-1 input weights split into same-index / reversed-index terms.
    # hstk[s] = [f0(s) | b0(T-1-s)], so
    #   hstk[s] @ w1p + hstk[T-1-s] @ w1q
    #     = [ concat(f0(s), b0(s)) @ w_ih_l1_fwd          -> fwd gate lanes
    #       | concat(f0(T-1-s), b0(T-1-s)) @ w_ih_l1_bwd  -> bwd gate lanes ]
    w_ih1_f, w_ih1_b = params["w_ih_l1"][0], params["w_ih_l1"][1]
    w1p = jnp.concatenate([_arrange_dir(w_ih1_f[:NB], 0),
                           _arrange_dir(w_ih1_b[NB:], 1)], axis=0)
    w1q = jnp.concatenate([_arrange_dir(w_ih1_b[:NB], 1),
                           _arrange_dir(w_ih1_f[NB:], 0)], axis=0)
    b1 = _arrange_dir(params["b_l1"][0], 0) + _arrange_dir(params["b_l1"][1], 1)

    # ---- fused fc_text | fc_acoustic with the mean scales folded in ----
    zero_blk = jnp.zeros((2 * NB, NB), jnp.float32)
    wta = jnp.concatenate(
        [jnp.concatenate([params["w_ft"] / t_len, zero_blk], axis=1),
         jnp.concatenate([zero_blk, params["w_fa"] / th_len], axis=1)], axis=0)
    bta = jnp.concatenate([params["b_ft"], params["b_fa"]], axis=-1)

    args = (xg0, hbatch, wbd0, wbd1, w1p, w1q, b1, wta, bta,
            params["w_d"], params["b_d"], params["w_o"], params["b_o"])

    vmem = pl.BlockSpec(memory_space=pltpu.MemorySpace.VMEM)
    return pl.pallas_call(
        wordlevel_kernel,
        out_shape=jax.ShapeDtypeStruct((batch, NE), jnp.float32),
        in_specs=[vmem] * len(args),
        out_specs=vmem,
        scratch_shapes=[pltpu.VMEM((t_len, batch, 2 * NB), jnp.float32)],
    )(*args)


# ------------------------- pure-JAX reference -------------------------------
def reference_forward(sbatch, hbatch, p):
    x = jnp.transpose(sbatch, (1, 0, 2))  # (T, B, in)

    def run_dir(x_seq, w_ih, w_hh, b, reverse):
        t_len, batch, _ = x_seq.shape
        h = jnp.zeros((batch, NB), jnp.float32)
        c = jnp.zeros((batch, NB), jnp.float32)
        outs = [None] * t_len
        order = range(t_len - 1, -1, -1) if reverse else range(t_len)
        for t in order:
            gates = x_seq[t] @ w_ih + h @ w_hh + b
            i = jax.nn.sigmoid(gates[:, :NB])
            f = jax.nn.sigmoid(gates[:, NB:2 * NB])
            g = jnp.tanh(gates[:, 2 * NB:3 * NB])
            o = jax.nn.sigmoid(gates[:, 3 * NB:])
            c = f * c + i * g
            h = o * jnp.tanh(c)
            outs[t] = h
        return jnp.stack(outs)  # (T, B, NB)

    f0 = run_dir(x, p["w_ih_l0"][0], p["w_hh_l0"][0], p["b_l0"][0], False)
    b0 = run_dir(x, p["w_ih_l0"][1], p["w_hh_l0"][1], p["b_l0"][1], True)
    x1 = jnp.concatenate([f0, b0], axis=-1)
    f1 = run_dir(x1, p["w_ih_l1"][0], p["w_hh_l1"][0], p["b_l1"][0], False)
    b1 = run_dir(x1, p["w_ih_l1"][1], p["w_hh_l1"][1], p["b_l1"][1], True)
    g = jnp.concatenate([f1, b1], axis=-1)          # (T, B, 2*NB)
    text = jnp.mean(g, axis=0)                      # (B, 2*NB)
    acoustic = jnp.mean(hbatch, axis=1)             # (B, 2*NB)
    maxp = jnp.concatenate(
        [text @ p["w_ft"] + p["b_ft"], acoustic @ p["w_fa"] + p["b_fa"]], axis=-1)
    res = jnp.maximum(maxp @ p["w_d"] + p["b_d"], 0.0)
    return res @ p["w_o"] + p["b_o"]


def init_params(key):
    ks = jax.random.split(key, 16)
    s = 0.1
    p = {
        "w_ih_l0": s * jax.random.normal(ks[0], (2, H, 4 * NB), jnp.float32),
        "w_hh_l0": s * jax.random.normal(ks[1], (2, NB, 4 * NB), jnp.float32),
        "b_l0":    s * jax.random.normal(ks[2], (2, 1, 4 * NB), jnp.float32),
        "w_ih_l1": s * jax.random.normal(ks[3], (2, 2 * NB, 4 * NB), jnp.float32),
        "w_hh_l1": s * jax.random.normal(ks[4], (2, NB, 4 * NB), jnp.float32),
        "b_l1":    s * jax.random.normal(ks[5], (2, 1, 4 * NB), jnp.float32),
        "w_ft":    s * jax.random.normal(ks[6], (2 * NB, NB), jnp.float32),
        "b_ft":    s * jax.random.normal(ks[7], (1, NB), jnp.float32),
        "w_fa":    s * jax.random.normal(ks[8], (2 * NB, NB), jnp.float32),
        "b_fa":    s * jax.random.normal(ks[9], (1, NB), jnp.float32),
        "w_d":     s * jax.random.normal(ks[10], (2 * NB, NB), jnp.float32),
        "b_d":     s * jax.random.normal(ks[11], (1, NB), jnp.float32),
        "w_o":     s * jax.random.normal(ks[12], (NB, NE), jnp.float32),
        "b_o":     s * jax.random.normal(ks[13], (1, NE), jnp.float32),
    }
    return p


if __name__ == "__main__":
    key = jax.random.PRNGKey(0)
    k_s, k_h, k_p = jax.random.split(key, 3)

    sbatch = jax.random.normal(k_s, (B, T, H), jnp.float32)          # (B, T, H)
    hbatch = jax.random.normal(k_h, (B, TH, 2 * NB), jnp.float32)    # (B, Th, 2*NB)
    params = init_params(k_p)

    emotion = wordlevel_encoder(sbatch, hbatch, params)
    emotion = jax.block_until_ready(emotion)

    ref = reference_forward(sbatch, hbatch, params)
    np.testing.assert_allclose(np.asarray(emotion), np.asarray(ref),
                               rtol=2e-3, atol=2e-3)

    print("KERNEL_OK")
</pallas_src>

<mosaic_0001>
module attributes {stable_mosaic.version = 11 : i64} {
  func.func @wordlevel_kernel(%arg0: memref<8x2x256xf32, #tpu.memory_space<vmem>>, %arg1: memref<2x8x64xf32, #tpu.memory_space<vmem>>, %arg2: memref<64x256xf32, #tpu.memory_space<vmem>>, %arg3: memref<64x256xf32, #tpu.memory_space<vmem>>, %arg4: memref<64x256xf32, #tpu.memory_space<vmem>>, %arg5: memref<64x256xf32, #tpu.memory_space<vmem>>, %arg6: memref<1x256xf32, #tpu.memory_space<vmem>>, %arg7: memref<128x64xf32, #tpu.memory_space<vmem>>, %arg8: memref<1x64xf32, #tpu.memory_space<vmem>>, %arg9: memref<64x32xf32, #tpu.memory_space<vmem>>, %arg10: memref<1x32xf32, #tpu.memory_space<vmem>>, %arg11: memref<32x4xf32, #tpu.memory_space<vmem>>, %arg12: memref<1x4xf32, #tpu.memory_space<vmem>>, %arg13: memref<2x4xf32, #tpu.memory_space<vmem>>, %arg14: memref<8x2x64xf32, #tpu.memory_space<vmem>>) attributes {dimension_semantics = [], scalar_prefetch = 0 : i64, scratch_operands = 1 : i64, tpu.core_type = #tpu.core_type<tc>} {
    %c0 = arith.constant 0 : index
    %c0_0 = arith.constant 0 : index
    %0 = vector.load %arg2[%c0, %c0_0] : memref<64x256xf32, #tpu.memory_space<vmem>>, vector<64x256xf32>
    %c0_1 = arith.constant 0 : index
    %c0_2 = arith.constant 0 : index
    %1 = vector.load %arg3[%c0_1, %c0_2] : memref<64x256xf32, #tpu.memory_space<vmem>>, vector<64x256xf32>
    %c0_3 = arith.constant 0 : index
    %c0_4 = arith.constant 0 : index
    %2 = vector.load %arg4[%c0_3, %c0_4] : memref<64x256xf32, #tpu.memory_space<vmem>>, vector<64x256xf32>
    %c0_5 = arith.constant 0 : index
    %c0_6 = arith.constant 0 : index
    %3 = vector.load %arg5[%c0_5, %c0_6] : memref<64x256xf32, #tpu.memory_space<vmem>>, vector<64x256xf32>
    %c0_7 = arith.constant 0 : index
    %c0_8 = arith.constant 0 : index
    %4 = vector.load %arg6[%c0_7, %c0_8] : memref<1x256xf32, #tpu.memory_space<vmem>>, vector<1x256xf32>
    %5 = vector.shape_cast %4 : vector<1x256xf32> to vector<1x256xf32>
    %6 = vector.broadcast %5 : vector<1x256xf32> to vector<2x256xf32>
    %cst = arith.constant 0.000000e+00 : f32
    %7 = vector.broadcast %cst : f32 to vector<2x64xf32>
    %c0_9 = arith.constant 0 : index
    %c0_10 = arith.constant 0 : index
    %c0_11 = arith.constant 0 : index
    %8 = vector.load %arg0[%c0_9, %c0_10, %c0_11] : memref<8x2x256xf32, #tpu.memory_space<vmem>>, vector<1x2x256xf32>
    %9 = vector.shape_cast %8 : vector<1x2x256xf32> to vector<2x256xf32>
    %cst_12 = arith.constant dense<0.000000e+00> : vector<2x256xf32>
    %10 = tpu.matmul %7, %0, %cst_12 {dimension_numbers = #tpu.dot_dimension_numbers<[1], [0], [0], [1], [0, 0, 1, 1], [], []>} : vector<2x64xf32>, vector<64x256xf32>, vector<2x256xf32> -> vector<2x256xf32>
    %11 = arith.addf %9, %10 : vector<2x256xf32>
    %12 = vector.extract_strided_slice %11 {offsets = [0, 0], sizes = [2, 192], strides = [1, 1]} : vector<2x256xf32> to vector<2x192xf32>
    %13 = arith.negf %12 : vector<2x192xf32>
    %14 = math.exp %13 : vector<2x192xf32>
    %cst_13 = arith.constant 1.000000e+00 : f32
    %15 = vector.broadcast %cst_13 : f32 to vector<2x192xf32>
    %16 = arith.addf %15, %14 : vector<2x192xf32>
    %17 = arith.divf %15, %16 : vector<2x192xf32>
    %18 = vector.extract_strided_slice %11 {offsets = [0, 192], sizes = [2, 64], strides = [1, 1]} : vector<2x256xf32> to vector<2x64xf32>
    %19 = math.tanh %18 : vector<2x64xf32>
    %20 = vector.extract_strided_slice %17 {offsets = [0, 0], sizes = [2, 64], strides = [1, 1]} : vector<2x192xf32> to vector<2x64xf32>
    %21 = vector.extract_strided_slice %17 {offsets = [0, 64], sizes = [2, 64], strides = [1, 1]} : vector<2x192xf32> to vector<2x64xf32>
    %22 = vector.extract_strided_slice %17 {offsets = [0, 128], sizes = [2, 64], strides = [1, 1]} : vector<2x192xf32> to vector<2x64xf32>
    %23 = arith.mulf %21, %7 : vector<2x64xf32>
    %24 = arith.mulf %20, %19 : vector<2x64xf32>
    %25 = arith.addf %23, %24 : vector<2x64xf32>
    %26 = math.tanh %25 : vector<2x64xf32>
    %27 = arith.mulf %22, %26 : vector<2x64xf32>
    %c0_14 = arith.constant 0 : index
    %c0_15 = arith.constant 0 : index
    %c0_16 = arith.constant 0 : index
    %28 = vector.load %arg14[%c0_14, %c0_15, %c0_16] : memref<8x2x64xf32, #tpu.memory_space<vmem>>, vector<1x2x64xf32>
    %29 = vector.shape_cast %28 : vector<1x2x64xf32> to vector<2x64xf32>
    %30 = vector.shape_cast %27 : vector<2x64xf32> to vector<1x2x64xf32>
    tpu.vector_store %arg14[%c0_14, %c0_15, %c0_16], %30 {strides = array<i32>} : memref<8x2x64xf32, #tpu.memory_space<vmem>>, vector<1x2x64xf32>,
    %c1 = arith.constant 1 : index
    %c0_17 = arith.constant 0 : index
    %c0_18 = arith.constant 0 : index
    %31 = vector.load %arg0[%c1, %c0_17, %c0_18] : memref<8x2x256xf32, #tpu.memory_space<vmem>>, vector<1x2x256xf32>
    %32 = vector.shape_cast %31 : vector<1x2x256xf32> to vector<2x256xf32>
    %cst_19 = arith.constant dense<0.000000e+00> : vector<2x256xf32>
    %33 = tpu.matmul %27, %0, %cst_19 {dimension_numbers = #tpu.dot_dimension_numbers<[1], [0], [0], [1], [0, 0, 1, 1], [], []>} : vector<2x64xf32>, vector<64x256xf32>, vector<2x256xf32> -> vector<2x256xf32>
    %34 = arith.addf %32, %33 : vector<2x256xf32>
    %35 = vector.extract_strided_slice %34 {offsets = [0, 0], sizes = [2, 192], strides = [1, 1]} : vector<2x256xf32> to vector<2x192xf32>
    %36 = arith.negf %35 : vector<2x192xf32>
    %37 = math.exp %36 : vector<2x192xf32>
    %cst_20 = arith.constant 1.000000e+00 : f32
    %38 = vector.broadcast %cst_20 : f32 to vector<2x192xf32>
    %39 = arith.addf %38, %37 : vector<2x192xf32>
    %40 = arith.divf %38, %39 : vector<2x192xf32>
    %41 = vector.extract_strided_slice %34 {offsets = [0, 192], sizes = [2, 64], strides = [1, 1]} : vector<2x256xf32> to vector<2x64xf32>
    %42 = math.tanh %41 : vector<2x64xf32>
    %43 = vector.extract_strided_slice %40 {offsets = [0, 0], sizes = [2, 64], strides = [1, 1]} : vector<2x192xf32> to vector<2x64xf32>
    %44 = vector.extract_strided_slice %40 {offsets = [0, 64], sizes = [2, 64], strides = [1, 1]} : vector<2x192xf32> to vector<2x64xf32>
    %45 = vector.extract_strided_slice %40 {offsets = [0, 128], sizes = [2, 64], strides = [1, 1]} : vector<2x192xf32> to vector<2x64xf32>
    %46 = arith.mulf %44, %25 : vector<2x64xf32>
    %47 = arith.mulf %43, %42 : vector<2x64xf32>
    %48 = arith.addf %46, %47 : vector<2x64xf32>
    %49 = math.tanh %48 : vector<2x64xf32>
    %50 = arith.mulf %45, %49 : vector<2x64xf32>
    %c1_21 = arith.constant 1 : index
    %c0_22 = arith.constant 0 : index
    %c0_23 = arith.constant 0 : index
    %51 = vector.load %arg14[%c1_21, %c0_22, %c0_23] : memref<8x2x64xf32, #tpu.memory_space<vmem>>, vector<1x2x64xf32>
    %52 = vector.shape_cast %51 : vector<1x2x64xf32> to vector<2x64xf32>
    %53 = vector.shape_cast %50 : vector<2x64xf32> to vector<1x2x64xf32>
    tpu.vector_store %arg14[%c1_21, %c0_22, %c0_23], %53 {strides = array<i32>} : memref<8x2x64xf32, #tpu.memory_space<vmem>>, vector<1x2x64xf32>,
    %c2 = arith.constant 2 : index
    %c0_24 = arith.constant 0 : index
    %c0_25 = arith.constant 0 : index
    %54 = vector.load %arg0[%c2, %c0_24, %c0_25] : memref<8x2x256xf32, #tpu.memory_space<vmem>>, vector<1x2x256xf32>
    %55 = vector.shape_cast %54 : vector<1x2x256xf32> to vector<2x256xf32>
    %cst_26 = arith.constant dense<0.000000e+00> : vector<2x256xf32>
    %56 = tpu.matmul %50, %0, %cst_26 {dimension_numbers = #tpu.dot_dimension_numbers<[1], [0], [0], [1], [0, 0, 1, 1], [], []>} : vector<2x64xf32>, vector<64x256xf32>, vector<2x256xf32> -> vector<2x256xf32>
    %57 = arith.addf %55, %56 : vector<2x256xf32>
    %58 = vector.extract_strided_slice %57 {offsets = [0, 0], sizes = [2, 192], strides = [1, 1]} : vector<2x256xf32> to vector<2x192xf32>
    %59 = arith.negf %58 : vector<2x192xf32>
    %60 = math.exp %59 : vector<2x192xf32>
    %cst_27 = arith.constant 1.000000e+00 : f32
    %61 = vector.broadcast %cst_27 : f32 to vector<2x192xf32>
    %62 = arith.addf %61, %60 : vector<2x192xf32>
    %63 = arith.divf %61, %62 : vector<2x192xf32>
    %64 = vector.extract_strided_slice %57 {offsets = [0, 192], sizes = [2, 64], strides = [1, 1]} : vector<2x256xf32> to vector<2x64xf32>
    %65 = math.tanh %64 : vector<2x64xf32>
    %66 = vector.extract_strided_slice %63 {offsets = [0, 0], sizes = [2, 64], strides = [1, 1]} : vector<2x192xf32> to vector<2x64xf32>
    %67 = vector.extract_strided_slice %63 {offsets = [0, 64], sizes = [2, 64], strides = [1, 1]} : vector<2x192xf32> to vector<2x64xf32>
    %68 = vector.extract_strided_slice %63 {offsets = [0, 128], sizes = [2, 64], strides = [1, 1]} : vector<2x192xf32> to vector<2x64xf32>
    %69 = arith.mulf %67, %48 : vector<2x64xf32>
    %70 = arith.mulf %66, %65 : vector<2x64xf32>
    %71 = arith.addf %69, %70 : vector<2x64xf32>
    %72 = math.tanh %71 : vector<2x64xf32>
    %73 = arith.mulf %68, %72 : vector<2x64xf32>
    %c2_28 = arith.constant 2 : index
    %c0_29 = arith.constant 0 : index
    %c0_30 = arith.constant 0 : index
    %74 = vector.load %arg14[%c2_28, %c0_29, %c0_30] : memref<8x2x64xf32, #tpu.memory_space<vmem>>, vector<1x2x64xf32>
    %75 = vector.shape_cast %74 : vector<1x2x64xf32> to vector<2x64xf32>
    %76 = vector.shape_cast %73 : vector<2x64xf32> to vector<1x2x64xf32>
    tpu.vector_store %arg14[%c2_28, %c0_29, %c0_30], %76 {strides = array<i32>} : memref<8x2x64xf32, #tpu.memory_space<vmem>>, vector<1x2x64xf32>,
    %c3 = arith.constant 3 : index
    %c0_31 = arith.constant 0 : index
    %c0_32 = arith.constant 0 : index
    %77 = vector.load %arg0[%c3, %c0_31, %c0_32] : memref<8x2x256xf32, #tpu.memory_space<vmem>>, vector<1x2x256xf32>
    %78 = vector.shape_cast %77 : vector<1x2x256xf32> to vector<2x256xf32>
    %cst_33 = arith.constant dense<0.000000e+00> : vector<2x256xf32>
    %79 = tpu.matmul %73, %0, %cst_33 {dimension_numbers = #tpu.dot_dimension_numbers<[1], [0], [0], [1], [0, 0, 1, 1], [], []>} : vector<2x64xf32>, vector<64x256xf32>, vector<2x256xf32> -> vector<2x256xf32>
    %80 = arith.addf %78, %79 : vector<2x256xf32>
    %81 = vector.extract_strided_slice %80 {offsets = [0, 0], sizes = [2, 192], strides = [1, 1]} : vector<2x256xf32> to vector<2x192xf32>
    %82 = arith.negf %81 : vector<2x192xf32>
    %83 = math.exp %82 : vector<2x192xf32>
    %cst_34 = arith.constant 1.000000e+00 : f32
    %84 = vector.broadcast %cst_34 : f32 to vector<2x192xf32>
    %85 = arith.addf %84, %83 : vector<2x192xf32>
    %86 = arith.divf %84, %85 : vector<2x192xf32>
    %87 = vector.extract_strided_slice %80 {offsets = [0, 192], sizes = [2, 64], strides = [1, 1]} : vector<2x256xf32> to vector<2x64xf32>
    %88 = math.tanh %87 : vector<2x64xf32>
    %89 = vector.extract_strided_slice %86 {offsets = [0, 0], sizes = [2, 64], strides = [1, 1]} : vector<2x192xf32> to vector<2x64xf32>
    %90 = vector.extract_strided_slice %86 {offsets = [0, 64], sizes = [2, 64], strides = [1, 1]} : vector<2x192xf32> to vector<2x64xf32>
    %91 = vector.extract_strided_slice %86 {offsets = [0, 128], sizes = [2, 64], strides = [1, 1]} : vector<2x192xf32> to vector<2x64xf32>
    %92 = arith.mulf %90, %71 : vector<2x64xf32>
    %93 = arith.mulf %89, %88 : vector<2x64xf32>
    %94 = arith.addf %92, %93 : vector<2x64xf32>
    %95 = math.tanh %94 : vector<2x64xf32>
    %96 = arith.mulf %91, %95 : vector<2x64xf32>
    %c3_35 = arith.constant 3 : index
    %c0_36 = arith.constant 0 : index
    %c0_37 = arith.constant 0 : index
    %97 = vector.load %arg14[%c3_35, %c0_36, %c0_37] : memref<8x2x64xf32, #tpu.memory_space<vmem>>, vector<1x2x64xf32>
    %98 = vector.shape_cast %97 : vector<1x2x64xf32> to vector<2x64xf32>
    %99 = vector.shape_cast %96 : vector<2x64xf32> to vector<1x2x64xf32>
    tpu.vector_store %arg14[%c3_35, %c0_36, %c0_37], %99 {strides = array<i32>} : memref<8x2x64xf32, #tpu.memory_space<vmem>>, vector<1x2x64xf32>,
    %c4 = arith.constant 4 : index
    %c0_38 = arith.constant 0 : index
    %c0_39 = arith.constant 0 : index
    %100 = vector.load %arg0[%c4, %c0_38, %c0_39] : memref<8x2x256xf32, #tpu.memory_space<vmem>>, vector<1x2x256xf32>
    %101 = vector.shape_cast %100 : vector<1x2x256xf32> to vector<2x256xf32>
    %cst_40 = arith.constant dense<0.000000e+00> : vector<2x256xf32>
    %102 = tpu.matmul %96, %0, %cst_40 {dimension_numbers = #tpu.dot_dimension_numbers<[1], [0], [0], [1], [0, 0, 1, 1], [], []>} : vector<2x64xf32>, vector<64x256xf32>, vector<2x256xf32> -> vector<2x256xf32>
    %103 = arith.addf %101, %102 : vector<2x256xf32>
    %104 = vector.extract_strided_slice %103 {offsets = [0, 0], sizes = [2, 192], strides = [1, 1]} : vector<2x256xf32> to vector<2x192xf32>
    %105 = arith.negf %104 : vector<2x192xf32>
    %106 = math.exp %105 : vector<2x192xf32>
    %cst_41 = arith.constant 1.000000e+00 : f32
    %107 = vector.broadcast %cst_41 : f32 to vector<2x192xf32>
    %108 = arith.addf %107, %106 : vector<2x192xf32>
    %109 = arith.divf %107, %108 : vector<2x192xf32>
    %110 = vector.extract_strided_slice %103 {offsets = [0, 192], sizes = [2, 64], strides = [1, 1]} : vector<2x256xf32> to vector<2x64xf32>
    %111 = math.tanh %110 : vector<2x64xf32>
    %112 = vector.extract_strided_slice %109 {offsets = [0, 0], sizes = [2, 64], strides = [1, 1]} : vector<2x192xf32> to vector<2x64xf32>
    %113 = vector.extract_strided_slice %109 {offsets = [0, 64], sizes = [2, 64], strides = [1, 1]} : vector<2x192xf32> to vector<2x64xf32>
    %114 = vector.extract_strided_slice %109 {offsets = [0, 128], sizes = [2, 64], strides = [1, 1]} : vector<2x192xf32> to vector<2x64xf32>
    %115 = arith.mulf %113, %94 : vector<2x64xf32>
    %116 = arith.mulf %112, %111 : vector<2x64xf32>
    %117 = arith.addf %115, %116 : vector<2x64xf32>
    %118 = math.tanh %117 : vector<2x64xf32>
    %119 = arith.mulf %114, %118 : vector<2x64xf32>
    %c4_42 = arith.constant 4 : index
    %c0_43 = arith.constant 0 : index
    %c0_44 = arith.constant 0 : index
    %120 = vector.load %arg14[%c4_42, %c0_43, %c0_44] : memref<8x2x64xf32, #tpu.memory_space<vmem>>, vector<1x2x64xf32>
    %121 = vector.shape_cast %120 : vector<1x2x64xf32> to vector<2x64xf32>
    %122 = vector.shape_cast %119 : vector<2x64xf32> to vector<1x2x64xf32>
    tpu.vector_store %arg14[%c4_42, %c0_43, %c0_44], %122 {strides = array<i32>} : memref<8x2x64xf32, #tpu.memory_space<vmem>>, vector<1x2x64xf32>,
    %c5 = arith.constant 5 : index
    %c0_45 = arith.constant 0 : index
    %c0_46 = arith.constant 0 : index
    %123 = vector.load %arg0[%c5, %c0_45, %c0_46] : memref<8x2x256xf32, #tpu.memory_space<vmem>>, vector<1x2x256xf32>
    %124 = vector.shape_cast %123 : vector<1x2x256xf32> to vector<2x256xf32>
    %cst_47 = arith.constant dense<0.000000e+00> : vector<2x256xf32>
    %125 = tpu.matmul %119, %0, %cst_47 {dimension_numbers = #tpu.dot_dimension_numbers<[1], [0], [0], [1], [0, 0, 1, 1], [], []>} : vector<2x64xf32>, vector<64x256xf32>, vector<2x256xf32> -> vector<2x256xf32>
    %126 = arith.addf %124, %125 : vector<2x256xf32>
    %127 = vector.extract_strided_slice %126 {offsets = [0, 0], sizes = [2, 192], strides = [1, 1]} : vector<2x256xf32> to vector<2x192xf32>
    %128 = arith.negf %127 : vector<2x192xf32>
    %129 = math.exp %128 : vector<2x192xf32>
    %cst_48 = arith.constant 1.000000e+00 : f32
    %130 = vector.broadcast %cst_48 : f32 to vector<2x192xf32>
    %131 = arith.addf %130, %129 : vector<2x192xf32>
    %132 = arith.divf %130, %131 : vector<2x192xf32>
    %133 = vector.extract_strided_slice %126 {offsets = [0, 192], sizes = [2, 64], strides = [1, 1]} : vector<2x256xf32> to vector<2x64xf32>
    %134 = math.tanh %133 : vector<2x64xf32>
    %135 = vector.extract_strided_slice %132 {offsets = [0, 0], sizes = [2, 64], strides = [1, 1]} : vector<2x192xf32> to vector<2x64xf32>
    %136 = vector.extract_strided_slice %132 {offsets = [0, 64], sizes = [2, 64], strides = [1, 1]} : vector<2x192xf32> to vector<2x64xf32>
    %137 = vector.extract_strided_slice %132 {offsets = [0, 128], sizes = [2, 64], strides = [1, 1]} : vector<2x192xf32> to vector<2x64xf32>
    %138 = arith.mulf %136, %117 : vector<2x64xf32>
    %139 = arith.mulf %135, %134 : vector<2x64xf32>
    %140 = arith.addf %138, %139 : vector<2x64xf32>
    %141 = math.tanh %140 : vector<2x64xf32>
    %142 = arith.mulf %137, %141 : vector<2x64xf32>
    %c5_49 = arith.constant 5 : index
    %c0_50 = arith.constant 0 : index
    %c0_51 = arith.constant 0 : index
    %143 = vector.load %arg14[%c5_49, %c0_50, %c0_51] : memref<8x2x64xf32, #tpu.memory_space<vmem>>, vector<1x2x64xf32>
    %144 = vector.shape_cast %143 : vector<1x2x64xf32> to vector<2x64xf32>
    %145 = vector.shape_cast %142 : vector<2x64xf32> to vector<1x2x64xf32>
    tpu.vector_store %arg14[%c5_49, %c0_50, %c0_51], %145 {strides = array<i32>} : memref<8x2x64xf32, #tpu.memory_space<vmem>>, vector<1x2x64xf32>,
    %c6 = arith.constant 6 : index
    %c0_52 = arith.constant 0 : index
    %c0_53 = arith.constant 0 : index
    %146 = vector.load %arg0[%c6, %c0_52, %c0_53] : memref<8x2x256xf32, #tpu.memory_space<vmem>>, vector<1x2x256xf32>
    %147 = vector.shape_cast %146 : vector<1x2x256xf32> to vector<2x256xf32>
    %cst_54 = arith.constant dense<0.000000e+00> : vector<2x256xf32>
    %148 = tpu.matmul %142, %0, %cst_54 {dimension_numbers = #tpu.dot_dimension_numbers<[1], [0], [0], [1], [0, 0, 1, 1], [], []>} : vector<2x64xf32>, vector<64x256xf32>, vector<2x256xf32> -> vector<2x256xf32>
    %149 = arith.addf %147, %148 : vector<2x256xf32>
    %150 = vector.extract_strided_slice %149 {offsets = [0, 0], sizes = [2, 192], strides = [1, 1]} : vector<2x256xf32> to vector<2x192xf32>
    %151 = arith.negf %150 : vector<2x192xf32>
    %152 = math.exp %151 : vector<2x192xf32>
    %cst_55 = arith.constant 1.000000e+00 : f32
    %153 = vector.broadcast %cst_55 : f32 to vector<2x192xf32>
    %154 = arith.addf %153, %152 : vector<2x192xf32>
    %155 = arith.divf %153, %154 : vector<2x192xf32>
    %156 = vector.extract_strided_slice %149 {offsets = [0, 192], sizes = [2, 64], strides = [1, 1]} : vector<2x256xf32> to vector<2x64xf32>
    %157 = math.tanh %156 : vector<2x64xf32>
    %158 = vector.extract_strided_slice %155 {offsets = [0, 0], sizes = [2, 64], strides = [1, 1]} : vector<2x192xf32> to vector<2x64xf32>
    %159 = vector.extract_strided_slice %155 {offsets = [0, 64], sizes = [2, 64], strides = [1, 1]} : vector<2x192xf32> to vector<2x64xf32>
    %160 = vector.extract_strided_slice %155 {offsets = [0, 128], sizes = [2, 64], strides = [1, 1]} : vector<2x192xf32> to vector<2x64xf32>
    %161 = arith.mulf %159, %140 : vector<2x64xf32>
    %162 = arith.mulf %158, %157 : vector<2x64xf32>
    %163 = arith.addf %161, %162 : vector<2x64xf32>
    %164 = math.tanh %163 : vector<2x64xf32>
    %165 = arith.mulf %160, %164 : vector<2x64xf32>
    %c6_56 = arith.constant 6 : index
    %c0_57 = arith.constant 0 : index
    %c0_58 = arith.constant 0 : index
    %166 = vector.load %arg14[%c6_56, %c0_57, %c0_58] : memref<8x2x64xf32, #tpu.memory_space<vmem>>, vector<1x2x64xf32>
    %167 = vector.shape_cast %166 : vector<1x2x64xf32> to vector<2x64xf32>
    %168 = vector.shape_cast %165 : vector<2x64xf32> to vector<1x2x64xf32>
    tpu.vector_store %arg14[%c6_56, %c0_57, %c0_58], %168 {strides = array<i32>} : memref<8x2x64xf32, #tpu.memory_space<vmem>>, vector<1x2x64xf32>,
    %c7 = arith.constant 7 : index
    %c0_59 = arith.constant 0 : index
    %c0_60 = arith.constant 0 : index
    %169 = vector.load %arg0[%c7, %c0_59, %c0_60] : memref<8x2x256xf32, #tpu.memory_space<vmem>>, vector<1x2x256xf32>
    %170 = vector.shape_cast %169 : vector<1x2x256xf32> to vector<2x256xf32>
    %cst_61 = arith.constant dense<0.000000e+00> : vector<2x256xf32>
    %171 = tpu.matmul %165, %0, %cst_61 {dimension_numbers = #tpu.dot_dimension_numbers<[1], [0], [0], [1], [0, 0, 1, 1], [], []>} : vector<2x64xf32>, vector<64x256xf32>, vector<2x256xf32> -> vector<2x256xf32>
    %172 = arith.addf %170, %171 : vector<2x256xf32>
    %173 = vector.extract_strided_slice %172 {offsets = [0, 0], sizes = [2, 192], strides = [1, 1]} : vector<2x256xf32> to vector<2x192xf32>
    %174 = arith.negf %173 : vector<2x192xf32>
    %175 = math.exp %174 : vector<2x192xf32>
    %cst_62 = arith.constant 1.000000e+00 : f32
    %176 = vector.broadcast %cst_62 : f32 to vector<2x192xf32>
    %177 = arith.addf %176, %175 : vector<2x192xf32>
    %178 = arith.divf %176, %177 : vector<2x192xf32>
    %179 = vector.extract_strided_slice %172 {offsets = [0, 192], sizes = [2, 64], strides = [1, 1]} : vector<2x256xf32> to vector<2x64xf32>
    %180 = math.tanh %179 : vector<2x64xf32>
    %181 = vector.extract_strided_slice %178 {offsets = [0, 0], sizes = [2, 64], strides = [1, 1]} : vector<2x192xf32> to vector<2x64xf32>
    %182 = vector.extract_strided_slice %178 {offsets = [0, 64], sizes = [2, 64], strides = [1, 1]} : vector<2x192xf32> to vector<2x64xf32>
    %183 = vector.extract_strided_slice %178 {offsets = [0, 128], sizes = [2, 64], strides = [1, 1]} : vector<2x192xf32> to vector<2x64xf32>
    %184 = arith.mulf %182, %163 : vector<2x64xf32>
    %185 = arith.mulf %181, %180 : vector<2x64xf32>
    %186 = arith.addf %184, %185 : vector<2x64xf32>
    %187 = math.tanh %186 : vector<2x64xf32>
    %188 = arith.mulf %183, %187 : vector<2x64xf32>
    %c7_63 = arith.constant 7 : index
    %c0_64 = arith.constant 0 : index
    %c0_65 = arith.constant 0 : index
    %189 = vector.load %arg14[%c7_63, %c0_64, %c0_65] : memref<8x2x64xf32, #tpu.memory_space<vmem>>, vector<1x2x64xf32>
    %190 = vector.shape_cast %189 : vector<1x2x64xf32> to vector<2x64xf32>
    %191 = vector.shape_cast %188 : vector<2x64xf32> to vector<1x2x64xf32>
    tpu.vector_store %arg14[%c7_63, %c0_64, %c0_65], %191 {strides = array<i32>} : memref<8x2x64xf32, #tpu.memory_space<vmem>>, vector<1x2x64xf32>,
    %c0_66 = arith.constant 0 : index
    %c0_67 = arith.constant 0 : index
    %c0_68 = arith.constant 0 : index
    %192 = vector.load %arg14[%c0_66, %c0_67, %c0_68] : memref<8x2x64xf32, #tpu.memory_space<vmem>>, vector<1x2x64xf32>
    %193 = vector.shape_cast %192 : vector<1x2x64xf32> to vector<2x64xf32>
    %cst_69 = arith.constant dense<0.000000e+00> : vector<2x256xf32>
    %194 = tpu.matmul %193, %2, %cst_69 {dimension_numbers = #tpu.dot_dimension_numbers<[1], [0], [0], [1], [0, 0, 1, 1], [], []>} : vector<2x64xf32>, vector<64x256xf32>, vector<2x256xf32> -> vector<2x256xf32>
    %c7_70 = arith.constant 7 : index
    %c0_71 = arith.constant 0 : index
    %c0_72 = arith.constant 0 : index
    %195 = vector.load %arg14[%c7_70, %c0_71, %c0_72] : memref<8x2x64xf32, #tpu.memory_space<vmem>>, vector<1x2x64xf32>
    %196 = vector.shape_cast %195 : vector<1x2x64xf32> to vector<2x64xf32>
    %cst_73 = arith.constant dense<0.000000e+00> : vector<2x256xf32>
    %197 = tpu.matmul %196, %3, %cst_73 {dimension_numbers = #tpu.dot_dimension_numbers<[1], [0], [0], [1], [0, 0, 1, 1], [], []>} : vector<2x64xf32>, vector<64x256xf32>, vector<2x256xf32> -> vector<2x256xf32>
    %198 = arith.addf %194, %197 : vector<2x256xf32>
    %199 = arith.addf %198, %6 : vector<2x256xf32>
    %cst_74 = arith.constant dense<0.000000e+00> : vector<2x256xf32>
    %200 = tpu.matmul %7, %1, %cst_74 {dimension_numbers = #tpu.dot_dimension_numbers<[1], [0], [0], [1], [0, 0, 1, 1], [], []>} : vector<2x64xf32>, vector<64x256xf32>, vector<2x256xf32> -> vector<2x256xf32>
    %201 = arith.addf %199, %200 : vector<2x256xf32>
    %202 = vector.extract_strided_slice %201 {offsets = [0, 0], sizes = [2, 192], strides = [1, 1]} : vector<2x256xf32> to vector<2x192xf32>
    %203 = arith.negf %202 : vector<2x192xf32>
    %204 = math.exp %203 : vector<2x192xf32>
    %cst_75 = arith.constant 1.000000e+00 : f32
    %205 = vector.broadcast %cst_75 : f32 to vector<2x192xf32>
    %206 = arith.addf %205, %204 : vector<2x192xf32>
    %207 = arith.divf %205, %206 : vector<2x192xf32>
    %208 = vector.extract_strided_slice %201 {offsets = [0, 192], sizes = [2, 64], strides = [1, 1]} : vector<2x256xf32> to vector<2x64xf32>
    %209 = math.tanh %208 : vector<2x64xf32>
    %210 = vector.extract_strided_slice %207 {offsets = [0, 0], sizes = [2, 64], strides = [1, 1]} : vector<2x192xf32> to vector<2x64xf32>
    %211 = vector.extract_strided_slice %207 {offsets = [0, 64], sizes = [2, 64], strides = [1, 1]} : vector<2x192xf32> to vector<2x64xf32>
    %212 = vector.extract_strided_slice %207 {offsets = [0, 128], sizes = [2, 64], strides = [1, 1]} : vector<2x192xf32> to vector<2x64xf32>
    %213 = arith.mulf %211, %7 : vector<2x64xf32>
    %214 = arith.mulf %210, %209 : vector<2x64xf32>
    %215 = arith.addf %213, %214 : vector<2x64xf32>
    %216 = math.tanh %215 : vector<2x64xf32>
    %217 = arith.mulf %212, %216 : vector<2x64xf32>
    %218 = arith.addf %7, %217 : vector<2x64xf32>
    %c1_76 = arith.constant 1 : index
    %c0_77 = arith.constant 0 : index
    %c0_78 = arith.constant 0 : index
    %219 = vector.load %arg14[%c1_76, %c0_77, %c0_78] : memref<8x2x64xf32, #tpu.memory_space<vmem>>, vector<1x2x64xf32>
    %220 = vector.shape_cast %219 : vector<1x2x64xf32> to vector<2x64xf32>
    %cst_79 = arith.constant dense<0.000000e+00> : vector<2x256xf32>
    %221 = tpu.matmul %220, %2, %cst_79 {dimension_numbers = #tpu.dot_dimension_numbers<[1], [0], [0], [1], [0, 0, 1, 1], [], []>} : vector<2x64xf32>, vector<64x256xf32>, vector<2x256xf32> -> vector<2x256xf32>
    %c6_80 = arith.constant 6 : index
    %c0_81 = arith.constant 0 : index
    %c0_82 = arith.constant 0 : index
    %222 = vector.load %arg14[%c6_80, %c0_81, %c0_82] : memref<8x2x64xf32, #tpu.memory_space<vmem>>, vector<1x2x64xf32>
    %223 = vector.shape_cast %222 : vector<1x2x64xf32> to vector<2x64xf32>
    %cst_83 = arith.constant dense<0.000000e+00> : vector<2x256xf32>
    %224 = tpu.matmul %223, %3, %cst_83 {dimension_numbers = #tpu.dot_dimension_numbers<[1], [0], [0], [1], [0, 0, 1, 1], [], []>} : vector<2x64xf32>, vector<64x256xf32>, vector<2x256xf32> -> vector<2x256xf32>
    %225 = arith.addf %221, %224 : vector<2x256xf32>
    %226 = arith.addf %225, %6 : vector<2x256xf32>
    %cst_84 = arith.constant dense<0.000000e+00> : vector<2x256xf32>
    %227 = tpu.matmul %217, %1, %cst_84 {dimension_numbers = #tpu.dot_dimension_numbers<[1], [0], [0], [1], [0, 0, 1, 1], [], []>} : vector<2x64xf32>, vector<64x256xf32>, vector<2x256xf32> -> vector<2x256xf32>
    %228 = arith.addf %226, %227 : vector<2x256xf32>
    %229 = vector.extract_strided_slice %228 {offsets = [0, 0], sizes = [2, 192], strides = [1, 1]} : vector<2x256xf32> to vector<2x192xf32>
    %230 = arith.negf %229 : vector<2x192xf32>
    %231 = math.exp %230 : vector<2x192xf32>
    %cst_85 = arith.constant 1.000000e+00 : f32
    %232 = vector.broadcast %cst_85 : f32 to vector<2x192xf32>
    %233 = arith.addf %232, %231 : vector<2x192xf32>
    %234 = arith.divf %232, %233 : vector<2x192xf32>
    %235 = vector.extract_strided_slice %228 {offsets = [0, 192], sizes = [2, 64], strides = [1, 1]} : vector<2x256xf32> to vector<2x64xf32>
    %236 = math.tanh %235 : vector<2x64xf32>
    %237 = vector.extract_strided_slice %234 {offsets = [0, 0], sizes = [2, 64], strides = [1, 1]} : vector<2x192xf32> to vector<2x64xf32>
    %238 = vector.extract_strided_slice %234 {offsets = [0, 64], sizes = [2, 64], strides = [1, 1]} : vector<2x192xf32> to vector<2x64xf32>
    %239 = vector.extract_strided_slice %234 {offsets = [0, 128], sizes = [2, 64], strides = [1, 1]} : vector<2x192xf32> to vector<2x64xf32>
    %240 = arith.mulf %238, %215 : vector<2x64xf32>
    %241 = arith.mulf %237, %236 : vector<2x64xf32>
    %242 = arith.addf %240, %241 : vector<2x64xf32>
    %243 = math.tanh %242 : vector<2x64xf32>
    %244 = arith.mulf %239, %243 : vector<2x64xf32>
    %245 = arith.addf %218, %244 : vector<2x64xf32>
    %c2_86 = arith.constant 2 : index
    %c0_87 = arith.constant 0 : index
    %c0_88 = arith.constant 0 : index
    %246 = vector.load %arg14[%c2_86, %c0_87, %c0_88] : memref<8x2x64xf32, #tpu.memory_space<vmem>>, vector<1x2x64xf32>
    %247 = vector.shape_cast %246 : vector<1x2x64xf32> to vector<2x64xf32>
    %cst_89 = arith.constant dense<0.000000e+00> : vector<2x256xf32>
    %248 = tpu.matmul %247, %2, %cst_89 {dimension_numbers = #tpu.dot_dimension_numbers<[1], [0], [0], [1], [0, 0, 1, 1], [], []>} : vector<2x64xf32>, vector<64x256xf32>, vector<2x256xf32> -> vector<2x256xf32>
    %c5_90 = arith.constant 5 : index
    %c0_91 = arith.constant 0 : index
    %c0_92 = arith.constant 0 : index
    %249 = vector.load %arg14[%c5_90, %c0_91, %c0_92] : memref<8x2x64xf32, #tpu.memory_space<vmem>>, vector<1x2x64xf32>
    %250 = vector.shape_cast %249 : vector<1x2x64xf32> to vector<2x64xf32>
    %cst_93 = arith.constant dense<0.000000e+00> : vector<2x256xf32>
    %251 = tpu.matmul %250, %3, %cst_93 {dimension_numbers = #tpu.dot_dimension_numbers<[1], [0], [0], [1], [0, 0, 1, 1], [], []>} : vector<2x64xf32>, vector<64x256xf32>, vector<2x256xf32> -> vector<2x256xf32>
    %252 = arith.addf %248, %251 : vector<2x256xf32>
    %253 = arith.addf %252, %6 : vector<2x256xf32>
    %cst_94 = arith.constant dense<0.000000e+00> : vector<2x256xf32>
    %254 = tpu.matmul %244, %1, %cst_94 {dimension_numbers = #tpu.dot_dimension_numbers<[1], [0], [0], [1], [0, 0, 1, 1], [], []>} : vector<2x64xf32>, vector<64x256xf32>, vector<2x256xf32> -> vector<2x256xf32>
    %255 = arith.addf %253, %254 : vector<2x256xf32>
    %256 = vector.extract_strided_slice %255 {offsets = [0, 0], sizes = [2, 192], strides = [1, 1]} : vector<2x256xf32> to vector<2x192xf32>
    %257 = arith.negf %256 : vector<2x192xf32>
    %258 = math.exp %257 : vector<2x192xf32>
    %cst_95 = arith.constant 1.000000e+00 : f32
    %259 = vector.broadcast %cst_95 : f32 to vector<2x192xf32>
    %260 = arith.addf %259, %258 : vector<2x192xf32>
    %261 = arith.divf %259, %260 : vector<2x192xf32>
    %262 = vector.extract_strided_slice %255 {offsets = [0, 192], sizes = [2, 64], strides = [1, 1]} : vector<2x256xf32> to vector<2x64xf32>
    %263 = math.tanh %262 : vector<2x64xf32>
    %264 = vector.extract_strided_slice %261 {offsets = [0, 0], sizes = [2, 64], strides = [1, 1]} : vector<2x192xf32> to vector<2x64xf32>
    %265 = vector.extract_strided_slice %261 {offsets = [0, 64], sizes = [2, 64], strides = [1, 1]} : vector<2x192xf32> to vector<2x64xf32>
    %266 = vector.extract_strided_slice %261 {offsets = [0, 128], sizes = [2, 64], strides = [1, 1]} : vector<2x192xf32> to vector<2x64xf32>
    %267 = arith.mulf %265, %242 : vector<2x64xf32>
    %268 = arith.mulf %264, %263 : vector<2x64xf32>
    %269 = arith.addf %267, %268 : vector<2x64xf32>
    %270 = math.tanh %269 : vector<2x64xf32>
    %271 = arith.mulf %266, %270 : vector<2x64xf32>
    %272 = arith.addf %245, %271 : vector<2x64xf32>
    %c3_96 = arith.constant 3 : index
    %c0_97 = arith.constant 0 : index
    %c0_98 = arith.constant 0 : index
    %273 = vector.load %arg14[%c3_96, %c0_97, %c0_98] : memref<8x2x64xf32, #tpu.memory_space<vmem>>, vector<1x2x64xf32>
    %274 = vector.shape_cast %273 : vector<1x2x64xf32> to vector<2x64xf32>
    %cst_99 = arith.constant dense<0.000000e+00> : vector<2x256xf32>
    %275 = tpu.matmul %274, %2, %cst_99 {dimension_numbers = #tpu.dot_dimension_numbers<[1], [0], [0], [1], [0, 0, 1, 1], [], []>} : vector<2x64xf32>, vector<64x256xf32>, vector<2x256xf32> -> vector<2x256xf32>
    %c4_100 = arith.constant 4 : index
    %c0_101 = arith.constant 0 : index
    %c0_102 = arith.constant 0 : index
    %276 = vector.load %arg14[%c4_100, %c0_101, %c0_102] : memref<8x2x64xf32, #tpu.memory_space<vmem>>, vector<1x2x64xf32>
    %277 = vector.shape_cast %276 : vector<1x2x64xf32> to vector<2x64xf32>
    %cst_103 = arith.constant dense<0.000000e+00> : vector<2x256xf32>
    %278 = tpu.matmul %277, %3, %cst_103 {dimension_numbers = #tpu.dot_dimension_numbers<[1], [0], [0], [1], [0, 0, 1, 1], [], []>} : vector<2x64xf32>, vector<64x256xf32>, vector<2x256xf32> -> vector<2x256xf32>
    %279 = arith.addf %275, %278 : vector<2x256xf32>
    %280 = arith.addf %279, %6 : vector<2x256xf32>
    %cst_104 = arith.constant dense<0.000000e+00> : vector<2x256xf32>
    %281 = tpu.matmul %271, %1, %cst_104 {dimension_numbers = #tpu.dot_dimension_numbers<[1], [0], [0], [1], [0, 0, 1, 1], [], []>} : vector<2x64xf32>, vector<64x256xf32>, vector<2x256xf32> -> vector<2x256xf32>
    %282 = arith.addf %280, %281 : vector<2x256xf32>
    %283 = vector.extract_strided_slice %282 {offsets = [0, 0], sizes = [2, 192], strides = [1, 1]} : vector<2x256xf32> to vector<2x192xf32>
    %284 = arith.negf %283 : vector<2x192xf32>
    %285 = math.exp %284 : vector<2x192xf32>
    %cst_105 = arith.constant 1.000000e+00 : f32
    %286 = vector.broadcast %cst_105 : f32 to vector<2x192xf32>
    %287 = arith.addf %286, %285 : vector<2x192xf32>
    %288 = arith.divf %286, %287 : vector<2x192xf32>
    %289 = vector.extract_strided_slice %282 {offsets = [0, 192], sizes = [2, 64], strides = [1, 1]} : vector<2x256xf32> to vector<2x64xf32>
    %290 = math.tanh %289 : vector<2x64xf32>
    %291 = vector.extract_strided_slice %288 {offsets = [0, 0], sizes = [2, 64], strides = [1, 1]} : vector<2x192xf32> to vector<2x64xf32>
    %292 = vector.extract_strided_slice %288 {offsets = [0, 64], sizes = [2, 64], strides = [1, 1]} : vector<2x192xf32> to vector<2x64xf32>
    %293 = vector.extract_strided_slice %288 {offsets = [0, 128], sizes = [2, 64], strides = [1, 1]} : vector<2x192xf32> to vector<2x64xf32>
    %294 = arith.mulf %292, %269 : vector<2x64xf32>
    %295 = arith.mulf %291, %290 : vector<2x64xf32>
    %296 = arith.addf %294, %295 : vector<2x64xf32>
    %297 = math.tanh %296 : vector<2x64xf32>
    %298 = arith.mulf %293, %297 : vector<2x64xf32>
    %299 = arith.addf %272, %298 : vector<2x64xf32>
    %c4_106 = arith.constant 4 : index
    %c0_107 = arith.constant 0 : index
    %c0_108 = arith.constant 0 : index
    %300 = vector.load %arg14[%c4_106, %c0_107, %c0_108] : memref<8x2x64xf32, #tpu.memory_space<vmem>>, vector<1x2x64xf32>
    %301 = vector.shape_cast %300 : vector<1x2x64xf32> to vector<2x64xf32>
    %cst_109 = arith.constant dense<0.000000e+00> : vector<2x256xf32>
    %302 = tpu.matmul %301, %2, %cst_109 {dimension_numbers = #tpu.dot_dimension_numbers<[1], [0], [0], [1], [0, 0, 1, 1], [], []>} : vector<2x64xf32>, vector<64x256xf32>, vector<2x256xf32> -> vector<2x256xf32>
    %c3_110 = arith.constant 3 : index
    %c0_111 = arith.constant 0 : index
    %c0_112 = arith.constant 0 : index
    %303 = vector.load %arg14[%c3_110, %c0_111, %c0_112] : memref<8x2x64xf32, #tpu.memory_space<vmem>>, vector<1x2x64xf32>
    %304 = vector.shape_cast %303 : vector<1x2x64xf32> to vector<2x64xf32>
    %cst_113 = arith.constant dense<0.000000e+00> : vector<2x256xf32>
    %305 = tpu.matmul %304, %3, %cst_113 {dimension_numbers = #tpu.dot_dimension_numbers<[1], [0], [0], [1], [0, 0, 1, 1], [], []>} : vector<2x64xf32>, vector<64x256xf32>, vector<2x256xf32> -> vector<2x256xf32>
    %306 = arith.addf %302, %305 : vector<2x256xf32>
    %307 = arith.addf %306, %6 : vector<2x256xf32>
    %cst_114 = arith.constant dense<0.000000e+00> : vector<2x256xf32>
    %308 = tpu.matmul %298, %1, %cst_114 {dimension_numbers = #tpu.dot_dimension_numbers<[1], [0], [0], [1], [0, 0, 1, 1], [], []>} : vector<2x64xf32>, vector<64x256xf32>, vector<2x256xf32> -> vector<2x256xf32>
    %309 = arith.addf %307, %308 : vector<2x256xf32>
    %310 = vector.extract_strided_slice %309 {offsets = [0, 0], sizes = [2, 192], strides = [1, 1]} : vector<2x256xf32> to vector<2x192xf32>
    %311 = arith.negf %310 : vector<2x192xf32>
    %312 = math.exp %311 : vector<2x192xf32>
    %cst_115 = arith.constant 1.000000e+00 : f32
    %313 = vector.broadcast %cst_115 : f32 to vector<2x192xf32>
    %314 = arith.addf %313, %312 : vector<2x192xf32>
    %315 = arith.divf %313, %314 : vector<2x192xf32>
    %316 = vector.extract_strided_slice %309 {offsets = [0, 192], sizes = [2, 64], strides = [1, 1]} : vector<2x256xf32> to vector<2x64xf32>
    %317 = math.tanh %316 : vector<2x64xf32>
    %318 = vector.extract_strided_slice %315 {offsets = [0, 0], sizes = [2, 64], strides = [1, 1]} : vector<2x192xf32> to vector<2x64xf32>
    %319 = vector.extract_strided_slice %315 {offsets = [0, 64], sizes = [2, 64], strides = [1, 1]} : vector<2x192xf32> to vector<2x64xf32>
    %320 = vector.extract_strided_slice %315 {offsets = [0, 128], sizes = [2, 64], strides = [1, 1]} : vector<2x192xf32> to vector<2x64xf32>
    %321 = arith.mulf %319, %296 : vector<2x64xf32>
    %322 = arith.mulf %318, %317 : vector<2x64xf32>
    %323 = arith.addf %321, %322 : vector<2x64xf32>
    %324 = math.tanh %323 : vector<2x64xf32>
    %325 = arith.mulf %320, %324 : vector<2x64xf32>
    %326 = arith.addf %299, %325 : vector<2x64xf32>
    %c5_116 = arith.constant 5 : index
    %c0_117 = arith.constant 0 : index
    %c0_118 = arith.constant 0 : index
    %327 = vector.load %arg14[%c5_116, %c0_117, %c0_118] : memref<8x2x64xf32, #tpu.memory_space<vmem>>, vector<1x2x64xf32>
    %328 = vector.shape_cast %327 : vector<1x2x64xf32> to vector<2x64xf32>
    %cst_119 = arith.constant dense<0.000000e+00> : vector<2x256xf32>
    %329 = tpu.matmul %328, %2, %cst_119 {dimension_numbers = #tpu.dot_dimension_numbers<[1], [0], [0], [1], [0, 0, 1, 1], [], []>} : vector<2x64xf32>, vector<64x256xf32>, vector<2x256xf32> -> vector<2x256xf32>
    %c2_120 = arith.constant 2 : index
    %c0_121 = arith.constant 0 : index
    %c0_122 = arith.constant 0 : index
    %330 = vector.load %arg14[%c2_120, %c0_121, %c0_122] : memref<8x2x64xf32, #tpu.memory_space<vmem>>, vector<1x2x64xf32>
    %331 = vector.shape_cast %330 : vector<1x2x64xf32> to vector<2x64xf32>
    %cst_123 = arith.constant dense<0.000000e+00> : vector<2x256xf32>
    %332 = tpu.matmul %331, %3, %cst_123 {dimension_numbers = #tpu.dot_dimension_numbers<[1], [0], [0], [1], [0, 0, 1, 1], [], []>} : vector<2x64xf32>, vector<64x256xf32>, vector<2x256xf32> -> vector<2x256xf32>
    %333 = arith.addf %329, %332 : vector<2x256xf32>
    %334 = arith.addf %333, %6 : vector<2x256xf32>
    %cst_124 = arith.constant dense<0.000000e+00> : vector<2x256xf32>
    %335 = tpu.matmul %325, %1, %cst_124 {dimension_numbers = #tpu.dot_dimension_numbers<[1], [0], [0], [1], [0, 0, 1, 1], [], []>} : vector<2x64xf32>, vector<64x256xf32>, vector<2x256xf32> -> vector<2x256xf32>
    %336 = arith.addf %334, %335 : vector<2x256xf32>
    %337 = vector.extract_strided_slice %336 {offsets = [0, 0], sizes = [2, 192], strides = [1, 1]} : vector<2x256xf32> to vector<2x192xf32>
    %338 = arith.negf %337 : vector<2x192xf32>
    %339 = math.exp %338 : vector<2x192xf32>
    %cst_125 = arith.constant 1.000000e+00 : f32
    %340 = vector.broadcast %cst_125 : f32 to vector<2x192xf32>
    %341 = arith.addf %340, %339 : vector<2x192xf32>
    %342 = arith.divf %340, %341 : vector<2x192xf32>
    %343 = vector.extract_strided_slice %336 {offsets = [0, 192], sizes = [2, 64], strides = [1, 1]} : vector<2x256xf32> to vector<2x64xf32>
    %344 = math.tanh %343 : vector<2x64xf32>
    %345 = vector.extract_strided_slice %342 {offsets = [0, 0], sizes = [2, 64], strides = [1, 1]} : vector<2x192xf32> to vector<2x64xf32>
    %346 = vector.extract_strided_slice %342 {offsets = [0, 64], sizes = [2, 64], strides = [1, 1]} : vector<2x192xf32> to vector<2x64xf32>
    %347 = vector.extract_strided_slice %342 {offsets = [0, 128], sizes = [2, 64], strides = [1, 1]} : vector<2x192xf32> to vector<2x64xf32>
    %348 = arith.mulf %346, %323 : vector<2x64xf32>
    %349 = arith.mulf %345, %344 : vector<2x64xf32>
    %350 = arith.addf %348, %349 : vector<2x64xf32>
    %351 = math.tanh %350 : vector<2x64xf32>
    %352 = arith.mulf %347, %351 : vector<2x64xf32>
    %353 = arith.addf %326, %352 : vector<2x64xf32>
    %c6_126 = arith.constant 6 : index
    %c0_127 = arith.constant 0 : index
    %c0_128 = arith.constant 0 : index
    %354 = vector.load %arg14[%c6_126, %c0_127, %c0_128] : memref<8x2x64xf32, #tpu.memory_space<vmem>>, vector<1x2x64xf32>
    %355 = vector.shape_cast %354 : vector<1x2x64xf32> to vector<2x64xf32>
    %cst_129 = arith.constant dense<0.000000e+00> : vector<2x256xf32>
    %356 = tpu.matmul %355, %2, %cst_129 {dimension_numbers = #tpu.dot_dimension_numbers<[1], [0], [0], [1], [0, 0, 1, 1], [], []>} : vector<2x64xf32>, vector<64x256xf32>, vector<2x256xf32> -> vector<2x256xf32>
    %c1_130 = arith.constant 1 : index
    %c0_131 = arith.constant 0 : index
    %c0_132 = arith.constant 0 : index
    %357 = vector.load %arg14[%c1_130, %c0_131, %c0_132] : memref<8x2x64xf32, #tpu.memory_space<vmem>>, vector<1x2x64xf32>
    %358 = vector.shape_cast %357 : vector<1x2x64xf32> to vector<2x64xf32>
    %cst_133 = arith.constant dense<0.000000e+00> : vector<2x256xf32>
    %359 = tpu.matmul %358, %3, %cst_133 {dimension_numbers = #tpu.dot_dimension_numbers<[1], [0], [0], [1], [0, 0, 1, 1], [], []>} : vector<2x64xf32>, vector<64x256xf32>, vector<2x256xf32> -> vector<2x256xf32>
    %360 = arith.addf %356, %359 : vector<2x256xf32>
    %361 = arith.addf %360, %6 : vector<2x256xf32>
    %cst_134 = arith.constant dense<0.000000e+00> : vector<2x256xf32>
    %362 = tpu.matmul %352, %1, %cst_134 {dimension_numbers = #tpu.dot_dimension_numbers<[1], [0], [0], [1], [0, 0, 1, 1], [], []>} : vector<2x64xf32>, vector<64x256xf32>, vector<2x256xf32> -> vector<2x256xf32>
    %363 = arith.addf %361, %362 : vector<2x256xf32>
    %364 = vector.extract_strided_slice %363 {offsets = [0, 0], sizes = [2, 192], strides = [1, 1]} : vector<2x256xf32> to vector<2x192xf32>
    %365 = arith.negf %364 : vector<2x192xf32>
    %366 = math.exp %365 : vector<2x192xf32>
    %cst_135 = arith.constant 1.000000e+00 : f32
    %367 = vector.broadcast %cst_135 : f32 to vector<2x192xf32>
    %368 = arith.addf %367, %366 : vector<2x192xf32>
    %369 = arith.divf %367, %368 : vector<2x192xf32>
    %370 = vector.extract_strided_slice %363 {offsets = [0, 192], sizes = [2, 64], strides = [1, 1]} : vector<2x256xf32> to vector<2x64xf32>
    %371 = math.tanh %370 : vector<2x64xf32>
    %372 = vector.extract_strided_slice %369 {offsets = [0, 0], sizes = [2, 64], strides = [1, 1]} : vector<2x192xf32> to vector<2x64xf32>
    %373 = vector.extract_strided_slice %369 {offsets = [0, 64], sizes = [2, 64], strides = [1, 1]} : vector<2x192xf32> to vector<2x64xf32>
    %374 = vector.extract_strided_slice %369 {offsets = [0, 128], sizes = [2, 64], strides = [1, 1]} : vector<2x192xf32> to vector<2x64xf32>
    %375 = arith.mulf %373, %350 : vector<2x64xf32>
    %376 = arith.mulf %372, %371 : vector<2x64xf32>
    %377 = arith.addf %375, %376 : vector<2x64xf32>
    %378 = math.tanh %377 : vector<2x64xf32>
    %379 = arith.mulf %374, %378 : vector<2x64xf32>
    %380 = arith.addf %353, %379 : vector<2x64xf32>
    %c7_136 = arith.constant 7 : index
    %c0_137 = arith.constant 0 : index
    %c0_138 = arith.constant 0 : index
    %381 = vector.load %arg14[%c7_136, %c0_137, %c0_138] : memref<8x2x64xf32, #tpu.memory_space<vmem>>, vector<1x2x64xf32>
    %382 = vector.shape_cast %381 : vector<1x2x64xf32> to vector<2x64xf32>
    %cst_139 = arith.constant dense<0.000000e+00> : vector<2x256xf32>
    %383 = tpu.matmul %382, %2, %cst_139 {dimension_numbers = #tpu.dot_dimension_numbers<[1], [0], [0], [1], [0, 0, 1, 1], [], []>} : vector<2x64xf32>, vector<64x256xf32>, vector<2x256xf32> -> vector<2x256xf32>
    %c0_140 = arith.constant 0 : index
    %c0_141 = arith.constant 0 : index
    %c0_142 = arith.constant 0 : index
    %384 = vector.load %arg14[%c0_140, %c0_141, %c0_142] : memref<8x2x64xf32, #tpu.memory_space<vmem>>, vector<1x2x64xf32>
    %385 = vector.shape_cast %384 : vector<1x2x64xf32> to vector<2x64xf32>
    %cst_143 = arith.constant dense<0.000000e+00> : vector<2x256xf32>
    %386 = tpu.matmul %385, %3, %cst_143 {dimension_numbers = #tpu.dot_dimension_numbers<[1], [0], [0], [1], [0, 0, 1, 1], [], []>} : vector<2x64xf32>, vector<64x256xf32>, vector<2x256xf32> -> vector<2x256xf32>
    %387 = arith.addf %383, %386 : vector<2x256xf32>
    %388 = arith.addf %387, %6 : vector<2x256xf32>
    %cst_144 = arith.constant dense<0.000000e+00> : vector<2x256xf32>
    %389 = tpu.matmul %379, %1, %cst_144 {dimension_numbers = #tpu.dot_dimension_numbers<[1], [0], [0], [1], [0, 0, 1, 1], [], []>} : vector<2x64xf32>, vector<64x256xf32>, vector<2x256xf32> -> vector<2x256xf32>
    %390 = arith.addf %388, %389 : vector<2x256xf32>
    %391 = vector.extract_strided_slice %390 {offsets = [0, 0], sizes = [2, 192], strides = [1, 1]} : vector<2x256xf32> to vector<2x192xf32>
    %392 = arith.negf %391 : vector<2x192xf32>
    %393 = math.exp %392 : vector<2x192xf32>
    %cst_145 = arith.constant 1.000000e+00 : f32
    %394 = vector.broadcast %cst_145 : f32 to vector<2x192xf32>
    %395 = arith.addf %394, %393 : vector<2x192xf32>
    %396 = arith.divf %394, %395 : vector<2x192xf32>
    %397 = vector.extract_strided_slice %390 {offsets = [0, 192], sizes = [2, 64], strides = [1, 1]} : vector<2x256xf32> to vector<2x64xf32>
    %398 = math.tanh %397 : vector<2x64xf32>
    %399 = vector.extract_strided_slice %396 {offsets = [0, 0], sizes = [2, 64], strides = [1, 1]} : vector<2x192xf32> to vector<2x64xf32>
    %400 = vector.extract_strided_slice %396 {offsets = [0, 64], sizes = [2, 64], strides = [1, 1]} : vector<2x192xf32> to vector<2x64xf32>
    %401 = vector.extract_strided_slice %396 {offsets = [0, 128], sizes = [2, 64], strides = [1, 1]} : vector<2x192xf32> to vector<2x64xf32>
    %402 = arith.mulf %400, %377 : vector<2x64xf32>
    %403 = arith.mulf %399, %398 : vector<2x64xf32>
    %404 = arith.addf %402, %403 : vector<2x64xf32>
    %405 = math.tanh %404 : vector<2x64xf32>
    %406 = arith.mulf %401, %405 : vector<2x64xf32>
    %407 = arith.addf %380, %406 : vector<2x64xf32>
    %c0_146 = arith.constant 0 : index
    %c0_147 = arith.constant 0 : index
    %c0_148 = arith.constant 0 : index
    %408 = vector.load %arg1[%c0_146, %c0_147, %c0_148] : memref<2x8x64xf32, #tpu.memory_space<vmem>>, vector<2x8x64xf32>
    %cst_149 = arith.constant dense<0.000000e+00> : vector<2x64xf32>
    %409 = vector.multi_reduction <add>, %408, %cst_149 [1] : vector<2x8x64xf32> to vector<2x64xf32>
    %410 = tpu.concatenate %407, %409 in 1 : vector<2x64xf32>, vector<2x64xf32> -> vector<2x128xf32>
    %c0_150 = arith.constant 0 : index
    %c0_151 = arith.constant 0 : index
    %411 = vector.load %arg7[%c0_150, %c0_151] : memref<128x64xf32, #tpu.memory_space<vmem>>, vector<128x64xf32>
    %cst_152 = arith.constant dense<0.000000e+00> : vector<2x64xf32>
    %412 = tpu.matmul %410, %411, %cst_152 {dimension_numbers = #tpu.dot_dimension_numbers<[1], [0], [0], [1], [0, 0, 1, 1], [], []>} : vector<2x128xf32>, vector<128x64xf32>, vector<2x64xf32> -> vector<2x64xf32>
    %c0_153 = arith.constant 0 : index
    %c0_154 = arith.constant 0 : index
    %413 = vector.load %arg8[%c0_153, %c0_154] : memref<1x64xf32, #tpu.memory_space<vmem>>, vector<1x64xf32>
    %414 = vector.broadcast %413 : vector<1x64xf32> to vector<2x64xf32>
    %415 = arith.addf %412, %414 : vector<2x64xf32>
    %c0_155 = arith.constant 0 : index
    %c0_156 = arith.constant 0 : index
    %416 = vector.load %arg9[%c0_155, %c0_156] : memref<64x32xf32, #tpu.memory_space<vmem>>, vector<64x32xf32>
    %cst_157 = arith.constant dense<0.000000e+00> : vector<2x32xf32>
    %417 = tpu.matmul %415, %416, %cst_157 {dimension_numbers = #tpu.dot_dimension_numbers<[1], [0], [0], [1], [0, 0, 1, 1], [], []>} : vector<2x64xf32>, vector<64x32xf32>, vector<2x32xf32> -> vector<2x32xf32>
    %c0_158 = arith.constant 0 : index
    %c0_159 = arith.constant 0 : index
    %418 = vector.load %arg10[%c0_158, %c0_159] : memref<1x32xf32, #tpu.memory_space<vmem>>, vector<1x32xf32>
    %419 = vector.broadcast %418 : vector<1x32xf32> to vector<2x32xf32>
    %420 = arith.addf %417, %419 : vector<2x32xf32>
    %cst_160 = arith.constant 0.000000e+00 : f32
    %421 = vector.broadcast %cst_160 : f32 to vector<2x32xf32>
    %422 = arith.maximumf %420, %421 : vector<2x32xf32>
    %c0_161 = arith.constant 0 : index
    %c0_162 = arith.constant 0 : index
    %423 = vector.load %arg11[%c0_161, %c0_162] : memref<32x4xf32, #tpu.memory_space<vmem>>, vector<32x4xf32>
    %cst_163 = arith.constant dense<0.000000e+00> : vector<2x4xf32>
    %424 = tpu.matmul %422, %423, %cst_163 {dimension_numbers = #tpu.dot_dimension_numbers<[1], [0], [0], [1], [0, 0, 1, 1], [], []>} : vector<2x32xf32>, vector<32x4xf32>, vector<2x4xf32> -> vector<2x4xf32>
    %c0_164 = arith.constant 0 : index
    %c0_165 = arith.constant 0 : index
    %425 = vector.load %arg12[%c0_164, %c0_165] : memref<1x4xf32, #tpu.memory_space<vmem>>, vector<1x4xf32>
    %426 = vector.broadcast %425 : vector<1x4xf32> to vector<2x4xf32>
    %427 = arith.addf %424, %426 : vector<2x4xf32>
    %c0_166 = arith.constant 0 : index
    %c0_167 = arith.constant 0 : index
    %428 = vector.load %arg13[%c0_166, %c0_167] : memref<2x4xf32, #tpu.memory_space<vmem>>, vector<2x4xf32>
    tpu.vector_store %arg13[%c0_166, %c0_167], %427 {strides = array<i32>} : memref<2x4xf32, #tpu.memory_space<vmem>>, vector<2x4xf32>,
    return
  }
}

</mosaic_0001>

<llo_original>
// kernel: wordlevel_encoder.1
$region0: #{wordlevel_encoder.1}
  #allocation0 [shape = 'u32[]', space=smem, size = 0x4, offset = 0x4, fixed_abs, tag = 'smem constant byte address 0x4 - core index']
  #allocation1 [shape = 'u32[144,128]{1,0:T(1,128)}', space=vmem, size = 0x12000, scoped, tag = 'internal scratch']
  #allocation2 [shape = 'f32[8,2,64]{2,1,0:T(2,128)}', space=vmem, size = 0x2000, scoped, tag = 'scratch operand']
  %s0 = inlined_call_operand.vmem [shape: f32[8,2,256], index: 0, kind: input, shape index: {}]
  %s1 = inlined_call_operand.vmem [shape: f32[2,8,64], index: 1, kind: input, shape index: {}]
  %s2 = inlined_call_operand.vmem [shape: f32[64,256], index: 2, kind: input, shape index: {}]
  %s3 = inlined_call_operand.vmem [shape: f32[64,256], index: 3, kind: input, shape index: {}]
  %s4 = inlined_call_operand.vmem [shape: f32[64,256], index: 4, kind: input, shape index: {}]
  %s5 = inlined_call_operand.vmem [shape: f32[64,256], index: 5, kind: input, shape index: {}]
  %s6 = inlined_call_operand.vmem [shape: f32[1,256], index: 6, kind: input, shape index: {}]
  %s7 = inlined_call_operand.vmem [shape: f32[128,64], index: 7, kind: input, shape index: {}]
  %s8 = inlined_call_operand.vmem [shape: f32[1,64], index: 8, kind: input, shape index: {}]
  %s9 = inlined_call_operand.vmem [shape: f32[64,32], index: 9, kind: input, shape index: {}]
  %s10 = inlined_call_operand.vmem [shape: f32[1,32], index: 10, kind: input, shape index: {}]
  %s11 = inlined_call_operand.vmem [shape: f32[32,4], index: 11, kind: input, shape index: {}]
  %s12 = inlined_call_operand.vmem [shape: f32[1,4], index: 12, kind: input, shape index: {}]
  %s13 = inlined_call_operand.hbm [shape: f32[2,4], index: 13, kind: output, shape index: {}]
  %s14 = sld [smem:[#allocation0]]
  $region62: #{wordlevel_encoder.1} parent=0
    _
  %s16 = ssub.s32 1, %s14
  %s17 = scalar_select 0, %s16, %s14
  $region1: #{wordlevel_encoder.1} parent=0
    #allocation3 [shape = 'u8[1024]{0}', space=vmem, size = 0x400, scoped, tag = 'output window, operand 0, single buffered']
    #allocation4 [shape = 's32[1]{0}', space=sflag, size = 0x4, scoped, tag = 'scoped memory for wordlevel_encoder.1']
    %18 = vsyncpa [#allocation4], 0
    // Predicated region
    $region2: #{wordlevel_encoder.1} parent=1 // pred_check
      _
    $region3: #{wordlevel_encoder.1} parent=1 // pred_check_branch
      %20 = sbr.rel (0) target = $region5
    $region4: #{wordlevel_encoder.1} parent=1 // pred_region
      _
    $region5: #{wordlevel_encoder.1} parent=1 // pred_fallthru
      _
    // Predicated region
    $region6: #{wordlevel_encoder.1} parent=1 // pred_check
      _
    $region7: #{wordlevel_encoder.1} parent=1 // pred_check_branch
      %22 = sbr.rel (0) target = $region9
    $region8: #{wordlevel_encoder.1} parent=1 // pred_region
      _
    $region9: #{wordlevel_encoder.1} parent=1 // pred_fallthru
      _
    // Predicated region
    $region10: #{wordlevel_encoder.1} parent=1 // pred_check
      _
    $region11: #{wordlevel_encoder.1} parent=1 // pred_check_branch
      %24 = sbr.rel (0) target = $region13
    $region12: #{wordlevel_encoder.1} parent=1 // pred_region
      _
    $region13: #{wordlevel_encoder.1} parent=1 // pred_fallthru
      _
    // Predicated region
    $region14: #{wordlevel_encoder.1} parent=1 // pred_check
      _
    $region15: #{wordlevel_encoder.1} parent=1 // pred_check_branch
      %26 = sbr.rel (0) target = $region17
    $region16: #{wordlevel_encoder.1} parent=1 // pred_region
      _
    $region17: #{wordlevel_encoder.1} parent=1 // pred_fallthru
      _
    // Predicated region
    $region18: #{wordlevel_encoder.1} parent=1 // pred_check
      _
    $region19: #{wordlevel_encoder.1} parent=1 // pred_check_branch
      %28 = sbr.rel (0) target = $region21
    $region20: #{wordlevel_encoder.1} parent=1 // pred_region
      _
    $region21: #{wordlevel_encoder.1} parent=1 // pred_fallthru
      _
    // Predicated region
    $region22: #{wordlevel_encoder.1} parent=1 // pred_check
      _
    $region23: #{wordlevel_encoder.1} parent=1 // pred_check_branch
      %30 = sbr.rel (0) target = $region25
    $region24: #{wordlevel_encoder.1} parent=1 // pred_region
      _
    $region25: #{wordlevel_encoder.1} parent=1 // pred_fallthru
      _
    // Predicated region
    $region26: #{wordlevel_encoder.1} parent=1 // pred_check
      _
    $region27: #{wordlevel_encoder.1} parent=1 // pred_check_branch
      %32 = sbr.rel (0) target = $region29
    $region28: #{wordlevel_encoder.1} parent=1 // pred_region
      _
    $region29: #{wordlevel_encoder.1} parent=1 // pred_fallthru
      _
    // Predicated region
    $region30: #{wordlevel_encoder.1} parent=1 // pred_check
      _
    $region31: #{wordlevel_encoder.1} parent=1 // pred_check_branch
      %34 = sbr.rel (0) target = $region33
    $region32: #{wordlevel_encoder.1} parent=1 // pred_region
      _
    $region33: #{wordlevel_encoder.1} parent=1 // pred_fallthru
      _
    // Predicated region
    $region34: #{wordlevel_encoder.1} parent=1 // pred_check
      _
    $region35: #{wordlevel_encoder.1} parent=1 // pred_check_branch
      %36 = sbr.rel (0) target = $region37
    $region36: #{wordlevel_encoder.1} parent=1 // pred_region
      _
    $region37: #{wordlevel_encoder.1} parent=1 // pred_fallthru
      _
    // Predicated region
    $region38: #{wordlevel_encoder.1} parent=1 // pred_check
      _
    $region39: #{wordlevel_encoder.1} parent=1 // pred_check_branch
      %38 = sbr.rel (0) target = $region41
    $region40: #{wordlevel_encoder.1} parent=1 // pred_region
      _
    $region41: #{wordlevel_encoder.1} parent=1 // pred_fallthru
      _
    // Predicated region
    $region42: #{wordlevel_encoder.1} parent=1 // pred_check
      _
    $region43: #{wordlevel_encoder.1} parent=1 // pred_check_branch
      %40 = sbr.rel (0) target = $region45
    $region44: #{wordlevel_encoder.1} parent=1 // pred_region
      _
    $region45: #{wordlevel_encoder.1} parent=1 // pred_fallthru
      _
    // Predicated region
    $region46: #{wordlevel_encoder.1} parent=1 // pred_check
      _
    $region47: #{wordlevel_encoder.1} parent=1 // pred_check_branch
      %42 = sbr.rel (0) target = $region49
    $region48: #{wordlevel_encoder.1} parent=1 // pred_region
      _
    $region49: #{wordlevel_encoder.1} parent=1 // pred_fallthru
      _
    // Predicated region
    $region50: #{wordlevel_encoder.1} parent=1 // pred_check
      _
    $region51: #{wordlevel_encoder.1} parent=1 // pred_check_branch
      %44 = sbr.rel (0) target = $region53
    $region52: #{wordlevel_encoder.1} parent=1 // pred_region
      _
    $region53: #{wordlevel_encoder.1} parent=1 // pred_fallthru
      _
    %v45 = vld [vmem:[%s2] sm:$0xff]
    %v46 = vld [vmem:[%s2 + $0x8] sm:$0xff]
    %v47 = vld [vmem:[%s2 + $0x10] sm:$0xff]
    %v48 = vld [vmem:[%s2 + $0x18] sm:$0xff]
    %v49 = vld [vmem:[%s2 + $0x20] sm:$0xff]
    %v50 = vld [vmem:[%s2 + $0x28] sm:$0xff]
    %v51 = vld [vmem:[%s2 + $0x30] sm:$0xff]
    %v52 = vld [vmem:[%s2 + $0x38] sm:$0xff]
    %v53 = vld [vmem:[%s2 + $0x40] sm:$0xff]
    %v54 = vld [vmem:[%s2 + $0x48] sm:$0xff]
    %v55 = vld [vmem:[%s2 + $0x50] sm:$0xff]
    %v56 = vld [vmem:[%s2 + $0x58] sm:$0xff]
    %v57 = vld [vmem:[%s2 + $0x60] sm:$0xff]
    %v58 = vld [vmem:[%s2 + $0x68] sm:$0xff]
    %v59 = vld [vmem:[%s2 + $0x70] sm:$0xff]
    %v60 = vld [vmem:[%s2 + $0x78] sm:$0xff]
    %v61 = vld [vmem:[%s3] sm:$0xff]
    %v62 = vld [vmem:[%s3 + $0x8] sm:$0xff]
    %v63 = vld [vmem:[%s3 + $0x10] sm:$0xff]
    %v64 = vld [vmem:[%s3 + $0x18] sm:$0xff]
    %v65 = vld [vmem:[%s3 + $0x20] sm:$0xff]
    %v66 = vld [vmem:[%s3 + $0x28] sm:$0xff]
    %v67 = vld [vmem:[%s3 + $0x30] sm:$0xff]
    %v68 = vld [vmem:[%s3 + $0x38] sm:$0xff]
    %v69 = vld [vmem:[%s3 + $0x40] sm:$0xff]
    %v70 = vld [vmem:[%s3 + $0x48] sm:$0xff]
    %v71 = vld [vmem:[%s3 + $0x50] sm:$0xff]
    %v72 = vld [vmem:[%s3 + $0x58] sm:$0xff]
    %v73 = vld [vmem:[%s3 + $0x60] sm:$0xff]
    %v74 = vld [vmem:[%s3 + $0x68] sm:$0xff]
    %v75 = vld [vmem:[%s3 + $0x70] sm:$0xff]
    %v76 = vld [vmem:[%s3 + $0x78] sm:$0xff]
    %v77 = vld [vmem:[%s4] sm:$0xff]
    %v78 = vld [vmem:[%s4 + $0x8] sm:$0xff]
    %v79 = vld [vmem:[%s4 + $0x10] sm:$0xff]
    %v80 = vld [vmem:[%s4 + $0x18] sm:$0xff]
    %v81 = vld [vmem:[%s4 + $0x20] sm:$0xff]
    %v82 = vld [vmem:[%s4 + $0x28] sm:$0xff]
    %v83 = vld [vmem:[%s4 + $0x30] sm:$0xff]
    %v84 = vld [vmem:[%s4 + $0x38] sm:$0xff]
    %v85 = vld [vmem:[%s4 + $0x40] sm:$0xff]
    %v86 = vld [vmem:[%s4 + $0x48] sm:$0xff]
    %v87 = vld [vmem:[%s4 + $0x50] sm:$0xff]
    %v88 = vld [vmem:[%s4 + $0x58] sm:$0xff]
    %v89 = vld [vmem:[%s4 + $0x60] sm:$0xff]
    %v90 = vld [vmem:[%s4 + $0x68] sm:$0xff]
    %v91 = vld [vmem:[%s4 + $0x70] sm:$0xff]
    %v92 = vld [vmem:[%s4 + $0x78] sm:$0xff]
    %v93 = vld [vmem:[%s5] sm:$0xff]
    %v94 = vld [vmem:[%s5 + $0x8] sm:$0xff]
    %v95 = vld [vmem:[%s5 + $0x10] sm:$0xff]
    %v96 = vld [vmem:[%s5 + $0x18] sm:$0xff]
    %v97 = vld [vmem:[%s5 + $0x20] sm:$0xff]
    %v98 = vld [vmem:[%s5 + $0x28] sm:$0xff]
    %v99 = vld [vmem:[%s5 + $0x30] sm:$0xff]
    %v100 = vld [vmem:[%s5 + $0x38] sm:$0xff]
    %v101 = vld [vmem:[%s5 + $0x40] sm:$0xff]
    %v102 = vld [vmem:[%s5 + $0x48] sm:$0xff]
    %v103 = vld [vmem:[%s5 + $0x50] sm:$0xff]
    %v104 = vld [vmem:[%s5 + $0x58] sm:$0xff]
    %v105 = vld [vmem:[%s5 + $0x60] sm:$0xff]
    %v106 = vld [vmem:[%s5 + $0x68] sm:$0xff]
    %v107 = vld [vmem:[%s5 + $0x70] sm:$0xff]
    %v108 = vld [vmem:[%s5 + $0x78] sm:$0xff]
    %v109 = vld [vmem:[%s6] sm:$0x3]
    %v111 = vlaneseq
    %v112 = vshrl.u32 %v111, 7
    %v113 = vsub.s32 0, %v112
    %v114 = vrot.slane %v109, %v113
    %v115 = vlaneseq
    %v116 = vshrl.u32 %v115, 7
    %v117 = vsub.s32 1, %v116
    %v118 = vrot.slane %v109, %v117
    %v121 = vld [vmem:[%s0] sm:$0xf]
    %vm122 = vcmask 523264
    %v124 = vsel %vm122, 0.0, 0
    %126 = vmatprep.subr.mxu0 %v46
    %127 = vmatpush1.msra.mxu0 %v45
    %128 = vmatprep.subr.mxu0 %v48
    %129 = vmatpush1.msra.mxu0 %v47
    %130 = vmatprep.subr.mxu0 %v50
    %131 = vmatpush1.msra.mxu0 %v49
    %132 = vmatprep.subr.mxu0 %v52
    %133 = vmatpush1.msra.mxu0 %v51
    %134 = vmatprep.subr.mxu0 %v54
    %135 = vmatpush1.msra.mxu0 %v53
    %136 = vmatprep.subr.mxu0 %v56
    %137 = vmatpush1.msra.mxu0 %v55
    %138 = vmatprep.subr.mxu0 %v58
    %139 = vmatpush1.msra.mxu0 %v57
    %140 = vmatprep.subr.mxu0 %v60
    %141 = vmatpush1.msra.mxu0 %v59
    %142 = vmatprep.subr.mxu0 0.0
    %143 = vmatpush1.msra.mxu0 0.0
    %144 = vmatprep.subr.mxu0 0.0
    %145 = vmatpush1.msra.mxu0 0.0
    %146 = vmatprep.subr.mxu0 0.0
    %147 = vmatpush1.msra.mxu0 0.0
    %148 = vmatprep.subr.mxu0 0.0
    %149 = vmatpush1.msra.mxu0 0.0
    %150 = vmatprep.subr.mxu0 0.0
    %151 = vmatpush1.msra.mxu0 0.0
    %152 = vmatprep.subr.mxu0 0.0
    %153 = vmatpush1.msra.mxu0 0.0
    %154 = vmatprep.subr.mxu0 0.0
    %155 = vmatpush1.msra.mxu0 0.0
    %156 = vmatprep.subr.mxu0 0.0
    %157 = vmatpush1.msra.mxu0 0.0
    %158 = vmatprep.subr.mxu0 0.0
    %159 = vmatpush1.msra.mxu0 0.0
    %160 = vmatprep.subr.mxu0 0.0
    %161 = vmatpush1.msra.mxu0 0.0
    %162 = vmatprep.subr.mxu0 0.0
    %163 = vmatpush1.msra.mxu0 0.0
    %164 = vmatprep.subr.mxu0 0.0
    %165 = vmatpush1.msra.mxu0 0.0
    %166 = vmatprep.subr.mxu0 0.0
    %167 = vmatpush1.msra.mxu0 0.0
    %168 = vmatprep.subr.mxu0 0.0
    %169 = vmatpush1.msra.mxu0 0.0
    %170 = vmatprep.subr.mxu0 0.0
    %171 = vmatpush1.msra.mxu0 0.0
    %172 = vmatprep.subr.mxu0 0.0
    %173 = vmatpush1.msra.mxu0 0.0
    %174 = vmatprep.subr.mxu0 0.0
    %175 = vmatpush1.msra.mxu0 0.0
    %176 = vmatprep.subr.mxu0 0.0
    %177 = vmatpush1.msra.mxu0 0.0
    %178 = vmatprep.subr.mxu0 0.0
    %179 = vmatpush1.msra.mxu0 0.0
    %180 = vmatprep.subr.mxu0 0.0
    %181 = vmatpush1.msra.mxu0 0.0
    %182 = vmatprep.subr.mxu0 0.0
    %183 = vmatpush1.msra.mxu0 0.0
    %184 = vmatprep.subr.mxu0 0.0
    %185 = vmatpush1.msra.mxu0 0.0
    %186 = vmatprep.subr.mxu0 0.0
    %187 = vmatpush1.msra.mxu0 0.0
    %188 = vmatprep.subr.mxu0 0.0
    %189 = vmatpush1.msra.mxu0 0.0
    %190 = vmatprep.mubr.f32.mxu0 0.0
    %191 = vmatmul.mubr.f32.gmra.mrb[0].mxu0 %v124
    %v192 = vpop.f32.mrb[0].mxu0
    %v193 = vadd.f32 0.0, %v192
    %v194 = vpop.f32.mrb[0].mxu0
    %v195 = vadd.f32 0.0, %v194
    %196 = vdwg.mxu0
    %v199 = vcombine.low %v193, %v195
    %v201 = vunpack.c.l.s4 1983009808
    %v202 = vunpack.c.0.s8 %v201
    %v203 = vlaneseq
    %v204 = vshrl.u32 %v203, 7
    %v205 = vsub.s32 %v202, %v204
    %v206 = vrot.slane %v199, %v205
    %v208 = vadd.f32 %v121, %v206
    %v209 = vxor.u32 %v208, 2147483648
    %v210 = vmul.f32 %v209, 1.442695
    %v211 = vpow.pop %v210
    %v212 = vadd.f32 %v211, 1.0
    %v213 = vrcp.pop %v212
    %v214 = vmul.f32 1.0, %v213
    %216 = vrot.lane.b32.xlu0 %v208, 64
    %v217 = vpop.permute.xlu0 %216
    %v218 = vrot.slane %v217, 2
    %v220 = vtanh.pop %v218
    %v221 = vmul.f32 %v214, 0.0
    %v222 = vmul.f32 %v214, %v220
    %224 = vrot.lane.b32.xlu0 %v222, 64
    %v225 = vpop.permute.xlu0 %224
    %v227 = vadd.f32 %v221, %v225
    %v228 = vtanh.pop %v227
    %v230 = vrot.slane %v214, 2
    %233 = vrot.lane.b32.xlu0 %v228, 64
    %v234 = vpop.permute.xlu0 %233
    %v236 = vmul.f32 %v230, %v234
    %vm237 = vcmask 517120
    %238 = vst.msk [vmem:[#allocation2] sm:$0x3] %vm237, %v236
    %s239 = scalar_lea.vmem %s0, 4
    %v240 = vld [vmem:[%s239] sm:$0xf]
    %v242 = vsel %vm122, %v236, 0
    %244 = vmatprep.subr.mxu0 %v46
    %245 = vmatpush1.msra.mxu0 %v45
    %246 = vmatprep.subr.mxu0 %v48
    %247 = vmatpush1.msra.mxu0 %v47
    %248 = vmatprep.subr.mxu0 %v50
    %249 = vmatpush1.msra.mxu0 %v49
    %250 = vmatprep.subr.mxu0 %v52
    %251 = vmatpush1.msra.mxu0 %v51
    %252 = vmatprep.subr.mxu0 %v54
    %253 = vmatpush1.msra.mxu0 %v53
    %254 = vmatprep.subr.mxu0 %v56
    %255 = vmatpush1.msra.mxu0 %v55
    %256 = vmatprep.subr.mxu0 %v58
    %257 = vmatpush1.msra.mxu0 %v57
    %258 = vmatprep.subr.mxu0 %v60
    %259 = vmatpush1.msra.mxu0 %v59
    %260 = vmatprep.subr.mxu0 0.0
    %261 = vmatpush1.msra.mxu0 0.0
    %262 = vmatprep.subr.mxu0 0.0
    %263 = vmatpush1.msra.mxu0 0.0
    %264 = vmatprep.subr.mxu0 0.0
    %265 = vmatpush1.msra.mxu0 0.0
    %266 = vmatprep.subr.mxu0 0.0
    %267 = vmatpush1.msra.mxu0 0.0
    %268 = vmatprep.subr.mxu0 0.0
    %269 = vmatpush1.msra.mxu0 0.0
    %270 = vmatprep.subr.mxu0 0.0
    %271 = vmatpush1.msra.mxu0 0.0
    %272 = vmatprep.subr.mxu0 0.0
    %273 = vmatpush1.msra.mxu0 0.0
    %274 = vmatprep.subr.mxu0 0.0
    %275 = vmatpush1.msra.mxu0 0.0
    %276 = vmatprep.subr.mxu0 0.0
    %277 = vmatpush1.msra.mxu0 0.0
    %278 = vmatprep.subr.mxu0 0.0
    %279 = vmatpush1.msra.mxu0 0.0
    %280 = vmatprep.subr.mxu0 0.0
    %281 = vmatpush1.msra.mxu0 0.0
    %282 = vmatprep.subr.mxu0 0.0
    %283 = vmatpush1.msra.mxu0 0.0
    %284 = vmatprep.subr.mxu0 0.0
    %285 = vmatpush1.msra.mxu0 0.0
    %286 = vmatprep.subr.mxu0 0.0
    %287 = vmatpush1.msra.mxu0 0.0
    %288 = vmatprep.subr.mxu0 0.0
    %289 = vmatpush1.msra.mxu0 0.0
    %290 = vmatprep.subr.mxu0 0.0
    %291 = vmatpush1.msra.mxu0 0.0
    %292 = vmatprep.subr.mxu0 0.0
    %293 = vmatpush1.msra.mxu0 0.0
    %294 = vmatprep.subr.mxu0 0.0
    %295 = vmatpush1.msra.mxu0 0.0
    %296 = vmatprep.subr.mxu0 0.0
    %297 = vmatpush1.msra.mxu0 0.0
    %298 = vmatprep.subr.mxu0 0.0
    %299 = vmatpush1.msra.mxu0 0.0
    %300 = vmatprep.subr.mxu0 0.0
    %301 = vmatpush1.msra.mxu0 0.0
    %302 = vmatprep.subr.mxu0 0.0
    %303 = vmatpush1.msra.mxu0 0.0
    %304 = vmatprep.subr.mxu0 0.0
    %305 = vmatpush1.msra.mxu0 0.0
    %306 = vmatprep.subr.mxu0 0.0
    %307 = vmatpush1.msra.mxu0 0.0
    %308 = vmatprep.mubr.f32.mxu0 0.0
    %309 = vmatmul.mubr.f32.gmra.mrb[0].mxu0 %v242
    %v310 = vpop.f32.mrb[0].mxu0
    %v311 = vadd.f32 0.0, %v310
    %v312 = vpop.f32.mrb[0].mxu0
    %v313 = vadd.f32 0.0, %v312
    %314 = vdwg.mxu0
    %v317 = vcombine.low %v311, %v313
    %v319 = vunpack.c.l.s4 1983009808
    %v320 = vunpack.c.0.s8 %v319
    %v321 = vlaneseq
    %v322 = vshrl.u32 %v321, 7
    %v323 = vsub.s32 %v320, %v322
    %v324 = vrot.slane %v317, %v323
    %v326 = vadd.f32 %v240, %v324
    %v327 = vxor.u32 %v326, 2147483648
    %v328 = vmul.f32 %v327, 1.442695
    %v329 = vpow.pop %v328
    %v330 = vadd.f32 %v329, 1.0
    %v331 = vrcp.pop %v330
    %v332 = vmul.f32 1.0, %v331
    %334 = vrot.lane.b32.xlu0 %v326, 64
    %v335 = vpop.permute.xlu0 %334
    %v336 = vrot.slane %v335, 2
    %v338 = vtanh.pop %v336
    %v339 = vmul.f32 %v332, %v227
    %v340 = vmul.f32 %v332, %v338
    %342 = vrot.lane.b32.xlu0 %v340, 64
    %v343 = vpop.permute.xlu0 %342
    %v345 = vadd.f32 %v339, %v343
    %v346 = vtanh.pop %v345
    %v348 = vrot.slane %v332, 2
    %351 = vrot.lane.b32.xlu0 %v346, 64
    %v352 = vpop.permute.xlu0 %351
    %v354 = vmul.f32 %v348, %v352
    %s355 = scalar_lea.vmem [#allocation2], 2
    %356 = vst.msk [vmem:[%s355] sm:$0x3] %vm237, %v354
    %s357 = scalar_lea.vmem %s0, 8
    %v358 = vld [vmem:[%s357] sm:$0xf]
    %v360 = vsel %vm122, %v354, 0
    %362 = vmatprep.subr.mxu0 %v46
    %363 = vmatpush1.msra.mxu0 %v45
    %364 = vmatprep.subr.mxu0 %v48
    %365 = vmatpush1.msra.mxu0 %v47
    %366 = vmatprep.subr.mxu0 %v50
    %367 = vmatpush1.msra.mxu0 %v49
    %368 = vmatprep.subr.mxu0 %v52
    %369 = vmatpush1.msra.mxu0 %v51
    %370 = vmatprep.subr.mxu0 %v54
    %371 = vmatpush1.msra.mxu0 %v53
    %372 = vmatprep.subr.mxu0 %v56
    %373 = vmatpush1.msra.mxu0 %v55
    %374 = vmatprep.subr.mxu0 %v58
    %375 = vmatpush1.msra.mxu0 %v57
    %376 = vmatprep.subr.mxu0 %v60
    %377 = vmatpush1.msra.mxu0 %v59
    %378 = vmatprep.subr.mxu0 0.0
    %379 = vmatpush1.msra.mxu0 0.0
    %380 = vmatprep.subr.mxu0 0.0
    %381 = vmatpush1.msra.mxu0 0.0
    %382 = vmatprep.subr.mxu0 0.0
    %383 = vmatpush1.msra.mxu0 0.0
    %384 = vmatprep.subr.mxu0 0.0
    %385 = vmatpush1.msra.mxu0 0.0
    %386 = vmatprep.subr.mxu0 0.0
    %387 = vmatpush1.msra.mxu0 0.0
    %388 = vmatprep.subr.mxu0 0.0
    %389 = vmatpush1.msra.mxu0 0.0
    %390 = vmatprep.subr.mxu0 0.0
    %391 = vmatpush1.msra.mxu0 0.0
    %392 = vmatprep.subr.mxu0 0.0
    %393 = vmatpush1.msra.mxu0 0.0
    %394 = vmatprep.subr.mxu0 0.0
    %395 = vmatpush1.msra.mxu0 0.0
    %396 = vmatprep.subr.mxu0 0.0
    %397 = vmatpush1.msra.mxu0 0.0
    %398 = vmatprep.subr.mxu0 0.0
    %399 = vmatpush1.msra.mxu0 0.0
    %400 = vmatprep.subr.mxu0 0.0
    %401 = vmatpush1.msra.mxu0 0.0
    %402 = vmatprep.subr.mxu0 0.0
    %403 = vmatpush1.msra.mxu0 0.0
    %404 = vmatprep.subr.mxu0 0.0
    %405 = vmatpush1.msra.mxu0 0.0
    %406 = vmatprep.subr.mxu0 0.0
    %407 = vmatpush1.msra.mxu0 0.0
    %408 = vmatprep.subr.mxu0 0.0
    %409 = vmatpush1.msra.mxu0 0.0
    %410 = vmatprep.subr.mxu0 0.0
    %411 = vmatpush1.msra.mxu0 0.0
    %412 = vmatprep.subr.mxu0 0.0
    %413 = vmatpush1.msra.mxu0 0.0
    %414 = vmatprep.subr.mxu0 0.0
    %415 = vmatpush1.msra.mxu0 0.0
    %416 = vmatprep.subr.mxu0 0.0
    %417 = vmatpush1.msra.mxu0 0.0
    %418 = vmatprep.subr.mxu0 0.0
    %419 = vmatpush1.msra.mxu0 0.0
    %420 = vmatprep.subr.mxu0 0.0
    %421 = vmatpush1.msra.mxu0 0.0
    %422 = vmatprep.subr.mxu0 0.0
    %423 = vmatpush1.msra.mxu0 0.0
    %424 = vmatprep.subr.mxu0 0.0
    %425 = vmatpush1.msra.mxu0 0.0
    %426 = vmatprep.mubr.f32.mxu0 0.0
    %427 = vmatmul.mubr.f32.gmra.mrb[0].mxu0 %v360
    %v428 = vpop.f32.mrb[0].mxu0
    %v429 = vadd.f32 0.0, %v428
    %v430 = vpop.f32.mrb[0].mxu0
    %v431 = vadd.f32 0.0, %v430
    %432 = vdwg.mxu0
    %v435 = vcombine.low %v429, %v431
    %v437 = vunpack.c.l.s4 1983009808
    %v438 = vunpack.c.0.s8 %v437
    %v439 = vlaneseq
    %v440 = vshrl.u32 %v439, 7
    %v441 = vsub.s32 %v438, %v440
    %v442 = vrot.slane %v435, %v441
    %v444 = vadd.f32 %v358, %v442
    %v445 = vxor.u32 %v444, 2147483648
    %v446 = vmul.f32 %v445, 1.442695
    %v447 = vpow.pop %v446
    %v448 = vadd.f32 %v447, 1.0
    %v449 = vrcp.pop %v448
    %v450 = vmul.f32 1.0, %v449
    %452 = vrot.lane.b32.xlu0 %v444, 64
    %v453 = vpop.permute.xlu0 %452
    %v454 = vrot.slane %v453, 2
    %v456 = vtanh.pop %v454
    %v457 = vmul.f32 %v450, %v345
    %v458 = vmul.f32 %v450, %v456
    %460 = vrot.lane.b32.xlu0 %v458, 64
    %v461 = vpop.permute.xlu0 %460
    %v463 = vadd.f32 %v457, %v461
    %v464 = vtanh.pop %v463
    %v466 = vrot.slane %v450, 2
    %469 = vrot.lane.b32.xlu0 %v464, 64
    %v470 = vpop.permute.xlu0 %469
    %v472 = vmul.f32 %v466, %v470
    %s473 = scalar_lea.vmem [#allocation2], 4
    %474 = vst.msk [vmem:[%s473] sm:$0x3] %vm237, %v472
    %s475 = scalar_lea.vmem %s0, 12
    %v476 = vld [vmem:[%s475] sm:$0xf]
    %v478 = vsel %vm122, %v472, 0
    %480 = vmatprep.subr.mxu0 %v46
    %481 = vmatpush1.msra.mxu0 %v45
    %482 = vmatprep.subr.mxu0 %v48
    %483 = vmatpush1.msra.mxu0 %v47
    %484 = vmatprep.subr.mxu0 %v50
    %485 = vmatpush1.msra.mxu0 %v49
    %486 = vmatprep.subr.mxu0 %v52
    %487 = vmatpush1.msra.mxu0 %v51
    %488 = vmatprep.subr.mxu0 %v54
    %489 = vmatpush1.msra.mxu0 %v53
    %490 = vmatprep.subr.mxu0 %v56
    %491 = vmatpush1.msra.mxu0 %v55
    %492 = vmatprep.subr.mxu0 %v58
    %493 = vmatpush1.msra.mxu0 %v57
    %494 = vmatprep.subr.mxu0 %v60
    %495 = vmatpush1.msra.mxu0 %v59
    %496 = vmatprep.subr.mxu0 0.0
    %497 = vmatpush1.msra.mxu0 0.0
    %498 = vmatprep.subr.mxu0 0.0
    %499 = vmatpush1.msra.mxu0 0.0
    %500 = vmatprep.subr.mxu0 0.0
    %501 = vmatpush1.msra.mxu0 0.0
    %502 = vmatprep.subr.mxu0 0.0
    %503 = vmatpush1.msra.mxu0 0.0
    %504 = vmatprep.subr.mxu0 0.0
    %505 = vmatpush1.msra.mxu0 0.0
    %506 = vmatprep.subr.mxu0 0.0
    %507 = vmatpush1.msra.mxu0 0.0
    %508 = vmatprep.subr.mxu0 0.0
    %509 = vmatpush1.msra.mxu0 0.0
    %510 = vmatprep.subr.mxu0 0.0
    %511 = vmatpush1.msra.mxu0 0.0
    %512 = vmatprep.subr.mxu0 0.0
    %513 = vmatpush1.msra.mxu0 0.0
    %514 = vmatprep.subr.mxu0 0.0
    %515 = vmatpush1.msra.mxu0 0.0
    %516 = vmatprep.subr.mxu0 0.0
    %517 = vmatpush1.msra.mxu0 0.0
    %518 = vmatprep.subr.mxu0 0.0
    %519 = vmatpush1.msra.mxu0 0.0
    %520 = vmatprep.subr.mxu0 0.0
    %521 = vmatpush1.msra.mxu0 0.0
    %522 = vmatprep.subr.mxu0 0.0
    %523 = vmatpush1.msra.mxu0 0.0
    %524 = vmatprep.subr.mxu0 0.0
    %525 = vmatpush1.msra.mxu0 0.0
    %526 = vmatprep.subr.mxu0 0.0
    %527 = vmatpush1.msra.mxu0 0.0
    %528 = vmatprep.subr.mxu0 0.0
    %529 = vmatpush1.msra.mxu0 0.0
    %530 = vmatprep.subr.mxu0 0.0
    %531 = vmatpush1.msra.mxu0 0.0
    %532 = vmatprep.subr.mxu0 0.0
    %533 = vmatpush1.msra.mxu0 0.0
    %534 = vmatprep.subr.mxu0 0.0
    %535 = vmatpush1.msra.mxu0 0.0
    %536 = vmatprep.subr.mxu0 0.0
    %537 = vmatpush1.msra.mxu0 0.0
    %538 = vmatprep.subr.mxu0 0.0
    %539 = vmatpush1.msra.mxu0 0.0
    %540 = vmatprep.subr.mxu0 0.0
    %541 = vmatpush1.msra.mxu0 0.0
    %542 = vmatprep.subr.mxu0 0.0
    %543 = vmatpush1.msra.mxu0 0.0
    %544 = vmatprep.mubr.f32.mxu0 0.0
    %545 = vmatmul.mubr.f32.gmra.mrb[0].mxu0 %v478
    %v546 = vpop.f32.mrb[0].mxu0
    %v547 = vadd.f32 0.0, %v546
    %v548 = vpop.f32.mrb[0].mxu0
    %v549 = vadd.f32 0.0, %v548
    %550 = vdwg.mxu0
    %v553 = vcombine.low %v547, %v549
    %v555 = vunpack.c.l.s4 1983009808
    %v556 = vunpack.c.0.s8 %v555
    %v557 = vlaneseq
    %v558 = vshrl.u32 %v557, 7
    %v559 = vsub.s32 %v556, %v558
    %v560 = vrot.slane %v553, %v559
    %v562 = vadd.f32 %v476, %v560
    %v563 = vxor.u32 %v562, 2147483648
    %v564 = vmul.f32 %v563, 1.442695
    %v565 = vpow.pop %v564
    %v566 = vadd.f32 %v565, 1.0
    %v567 = vrcp.pop %v566
    %v568 = vmul.f32 1.0, %v567
    %570 = vrot.lane.b32.xlu0 %v562, 64
    %v571 = vpop.permute.xlu0 %570
    %v572 = vrot.slane %v571, 2
    %v574 = vtanh.pop %v572
    %v575 = vmul.f32 %v568, %v463
    %v576 = vmul.f32 %v568, %v574
    %578 = vrot.lane.b32.xlu0 %v576, 64
    %v579 = vpop.permute.xlu0 %578
    %v581 = vadd.f32 %v575, %v579
    %v582 = vtanh.pop %v581
    %v584 = vrot.slane %v568, 2
    %587 = vrot.lane.b32.xlu0 %v582, 64
    %v588 = vpop.permute.xlu0 %587
    %v590 = vmul.f32 %v584, %v588
    %s591 = scalar_lea.vmem [#allocation2], 6
    %592 = vst.msk [vmem:[%s591] sm:$0x3] %vm237, %v590
    %s593 = scalar_lea.vmem %s0, 16
    %v594 = vld [vmem:[%s593] sm:$0xf]
    %v596 = vsel %vm122, %v590, 0
    %598 = vmatprep.subr.mxu0 %v46
    %599 = vmatpush1.msra.mxu0 %v45
    %600 = vmatprep.subr.mxu0 %v48
    %601 = vmatpush1.msra.mxu0 %v47
    %602 = vmatprep.subr.mxu0 %v50
    %603 = vmatpush1.msra.mxu0 %v49
    %604 = vmatprep.subr.mxu0 %v52
    %605 = vmatpush1.msra.mxu0 %v51
    %606 = vmatprep.subr.mxu0 %v54
    %607 = vmatpush1.msra.mxu0 %v53
    %608 = vmatprep.subr.mxu0 %v56
    %609 = vmatpush1.msra.mxu0 %v55
    %610 = vmatprep.subr.mxu0 %v58
    %611 = vmatpush1.msra.mxu0 %v57
    %612 = vmatprep.subr.mxu0 %v60
    %613 = vmatpush1.msra.mxu0 %v59
    %614 = vmatprep.subr.mxu0 0.0
    %615 = vmatpush1.msra.mxu0 0.0
    %616 = vmatprep.subr.mxu0 0.0
    %617 = vmatpush1.msra.mxu0 0.0
    %618 = vmatprep.subr.mxu0 0.0
    %619 = vmatpush1.msra.mxu0 0.0
    %620 = vmatprep.subr.mxu0 0.0
    %621 = vmatpush1.msra.mxu0 0.0
    %622 = vmatprep.subr.mxu0 0.0
    %623 = vmatpush1.msra.mxu0 0.0
    %624 = vmatprep.subr.mxu0 0.0
    %625 = vmatpush1.msra.mxu0 0.0
    %626 = vmatprep.subr.mxu0 0.0
    %627 = vmatpush1.msra.mxu0 0.0
    %628 = vmatprep.subr.mxu0 0.0
    %629 = vmatpush1.msra.mxu0 0.0
    %630 = vmatprep.subr.mxu0 0.0
    %631 = vmatpush1.msra.mxu0 0.0
    %632 = vmatprep.subr.mxu0 0.0
    %633 = vmatpush1.msra.mxu0 0.0
    %634 = vmatprep.subr.mxu0 0.0
    %635 = vmatpush1.msra.mxu0 0.0
    %636 = vmatprep.subr.mxu0 0.0
    %637 = vmatpush1.msra.mxu0 0.0
    %638 = vmatprep.subr.mxu0 0.0
    %639 = vmatpush1.msra.mxu0 0.0
    %640 = vmatprep.subr.mxu0 0.0
    %641 = vmatpush1.msra.mxu0 0.0
    %642 = vmatprep.subr.mxu0 0.0
    %643 = vmatpush1.msra.mxu0 0.0
    %644 = vmatprep.subr.mxu0 0.0
    %645 = vmatpush1.msra.mxu0 0.0
    %646 = vmatprep.subr.mxu0 0.0
    %647 = vmatpush1.msra.mxu0 0.0
    %648 = vmatprep.subr.mxu0 0.0
    %649 = vmatpush1.msra.mxu0 0.0
    %650 = vmatprep.subr.mxu0 0.0
    %651 = vmatpush1.msra.mxu0 0.0
    %652 = vmatprep.subr.mxu0 0.0
    %653 = vmatpush1.msra.mxu0 0.0
    %654 = vmatprep.subr.mxu0 0.0
    %655 = vmatpush1.msra.mxu0 0.0
    %656 = vmatprep.subr.mxu0 0.0
    %657 = vmatpush1.msra.mxu0 0.0
    %658 = vmatprep.subr.mxu0 0.0
    %659 = vmatpush1.msra.mxu0 0.0
    %660 = vmatprep.subr.mxu0 0.0
    %661 = vmatpush1.msra.mxu0 0.0
    %662 = vmatprep.mubr.f32.mxu0 0.0
    %663 = vmatmul.mubr.f32.gmra.mrb[0].mxu0 %v596
    %v664 = vpop.f32.mrb[0].mxu0
    %v665 = vadd.f32 0.0, %v664
    %v666 = vpop.f32.mrb[0].mxu0
    %v667 = vadd.f32 0.0, %v666
    %668 = vdwg.mxu0
    %v671 = vcombine.low %v665, %v667
    %v673 = vunpack.c.l.s4 1983009808
    %v674 = vunpack.c.0.s8 %v673
    %v675 = vlaneseq
    %v676 = vshrl.u32 %v675, 7
    %v677 = vsub.s32 %v674, %v676
    %v678 = vrot.slane %v671, %v677
    %v680 = vadd.f32 %v594, %v678
    %v681 = vxor.u32 %v680, 2147483648
    %v682 = vmul.f32 %v681, 1.442695
    %v683 = vpow.pop %v682
    %v684 = vadd.f32 %v683, 1.0
    %v685 = vrcp.pop %v684
    %v686 = vmul.f32 1.0, %v685
    %688 = vrot.lane.b32.xlu0 %v680, 64
    %v689 = vpop.permute.xlu0 %688
    %v690 = vrot.slane %v689, 2
    %v692 = vtanh.pop %v690
    %v693 = vmul.f32 %v686, %v581
    %v694 = vmul.f32 %v686, %v692
    %696 = vrot.lane.b32.xlu0 %v694, 64
    %v697 = vpop.permute.xlu0 %696
    %v699 = vadd.f32 %v693, %v697
    %v700 = vtanh.pop %v699
    %v702 = vrot.slane %v686, 2
    %705 = vrot.lane.b32.xlu0 %v700, 64
    %v706 = vpop.permute.xlu0 %705
    %v708 = vmul.f32 %v702, %v706
    %s709 = scalar_lea.vmem [#allocation2], 8
    %710 = vst.msk [vmem:[%s709] sm:$0x3] %vm237, %v708
    %s711 = scalar_lea.vmem %s0, 20
    %v712 = vld [vmem:[%s711] sm:$0xf]
    %v714 = vsel %vm122, %v708, 0
    %716 = vmatprep.subr.mxu0 %v46
    %717 = vmatpush1.msra.mxu0 %v45
    %718 = vmatprep.subr.mxu0 %v48
    %719 = vmatpush1.msra.mxu0 %v47
    %720 = vmatprep.subr.mxu0 %v50
    %721 = vmatpush1.msra.mxu0 %v49
    %722 = vmatprep.subr.mxu0 %v52
    %723 = vmatpush1.msra.mxu0 %v51
    %724 = vmatprep.subr.mxu0 %v54
    %725 = vmatpush1.msra.mxu0 %v53
    %726 = vmatprep.subr.mxu0 %v56
    %727 = vmatpush1.msra.mxu0 %v55
    %728 = vmatprep.subr.mxu0 %v58
    %729 = vmatpush1.msra.mxu0 %v57
    %730 = vmatprep.subr.mxu0 %v60
    %731 = vmatpush1.msra.mxu0 %v59
    %732 = vmatprep.subr.mxu0 0.0
    %733 = vmatpush1.msra.mxu0 0.0
    %734 = vmatprep.subr.mxu0 0.0
    %735 = vmatpush1.msra.mxu0 0.0
    %736 = vmatprep.subr.mxu0 0.0
    %737 = vmatpush1.msra.mxu0 0.0
    %738 = vmatprep.subr.mxu0 0.0
    %739 = vmatpush1.msra.mxu0 0.0
    %740 = vmatprep.subr.mxu0 0.0
    %741 = vmatpush1.msra.mxu0 0.0
    %742 = vmatprep.subr.mxu0 0.0
    %743 = vmatpush1.msra.mxu0 0.0
    %744 = vmatprep.subr.mxu0 0.0
    %745 = vmatpush1.msra.mxu0 0.0
    %746 = vmatprep.subr.mxu0 0.0
    %747 = vmatpush1.msra.mxu0 0.0
    %748 = vmatprep.subr.mxu0 0.0
    %749 = vmatpush1.msra.mxu0 0.0
    %750 = vmatprep.subr.mxu0 0.0
    %751 = vmatpush1.msra.mxu0 0.0
    %752 = vmatprep.subr.mxu0 0.0
    %753 = vmatpush1.msra.mxu0 0.0
    %754 = vmatprep.subr.mxu0 0.0
    %755 = vmatpush1.msra.mxu0 0.0
    %756 = vmatprep.subr.mxu0 0.0
    %757 = vmatpush1.msra.mxu0 0.0
    %758 = vmatprep.subr.mxu0 0.0
    %759 = vmatpush1.msra.mxu0 0.0
    %760 = vmatprep.subr.mxu0 0.0
    %761 = vmatpush1.msra.mxu0 0.0
    %762 = vmatprep.subr.mxu0 0.0
    %763 = vmatpush1.msra.mxu0 0.0
    %764 = vmatprep.subr.mxu0 0.0
    %765 = vmatpush1.msra.mxu0 0.0
    %766 = vmatprep.subr.mxu0 0.0
    %767 = vmatpush1.msra.mxu0 0.0
    %768 = vmatprep.subr.mxu0 0.0
    %769 = vmatpush1.msra.mxu0 0.0
    %770 = vmatprep.subr.mxu0 0.0
    %771 = vmatpush1.msra.mxu0 0.0
    %772 = vmatprep.subr.mxu0 0.0
    %773 = vmatpush1.msra.mxu0 0.0
    %774 = vmatprep.subr.mxu0 0.0
    %775 = vmatpush1.msra.mxu0 0.0
    %776 = vmatprep.subr.mxu0 0.0
    %777 = vmatpush1.msra.mxu0 0.0
    %778 = vmatprep.subr.mxu0 0.0
    %779 = vmatpush1.msra.mxu0 0.0
    %780 = vmatprep.mubr.f32.mxu0 0.0
    %781 = vmatmul.mubr.f32.gmra.mrb[0].mxu0 %v714
    %v782 = vpop.f32.mrb[0].mxu0
    %v783 = vadd.f32 0.0, %v782
    %v784 = vpop.f32.mrb[0].mxu0
    %v785 = vadd.f32 0.0, %v784
    %786 = vdwg.mxu0
    %v789 = vcombine.low %v783, %v785
    %v791 = vunpack.c.l.s4 1983009808
    %v792 = vunpack.c.0.s8 %v791
    %v793 = vlaneseq
    %v794 = vshrl.u32 %v793, 7
    %v795 = vsub.s32 %v792, %v794
    %v796 = vrot.slane %v789, %v795
    %v798 = vadd.f32 %v712, %v796
    %v799 = vxor.u32 %v798, 2147483648
    %v800 = vmul.f32 %v799, 1.442695
    %v801 = vpow.pop %v800
    %v802 = vadd.f32 %v801, 1.0
    %v803 = vrcp.pop %v802
    %v804 = vmul.f32 1.0, %v803
    %806 = vrot.lane.b32.xlu0 %v798, 64
    %v807 = vpop.permute.xlu0 %806
    %v808 = vrot.slane %v807, 2
    %v810 = vtanh.pop %v808
    %v811 = vmul.f32 %v804, %v699
    %v812 = vmul.f32 %v804, %v810
    %814 = vrot.lane.b32.xlu0 %v812, 64
    %v815 = vpop.permute.xlu0 %814
    %v817 = vadd.f32 %v811, %v815
    %v818 = vtanh.pop %v817
    %v820 = vrot.slane %v804, 2
    %823 = vrot.lane.b32.xlu0 %v818, 64
    %v824 = vpop.permute.xlu0 %823
    %v826 = vmul.f32 %v820, %v824
    %s827 = scalar_lea.vmem [#allocation2], 10
    %828 = vst.msk [vmem:[%s827] sm:$0x3] %vm237, %v826
    %s829 = scalar_lea.vmem %s0, 24
    %v830 = vld [vmem:[%s829] sm:$0xf]
    %v832 = vsel %vm122, %v826, 0
    %834 = vmatprep.subr.mxu0 %v46
    %835 = vmatpush1.msra.mxu0 %v45
    %836 = vmatprep.subr.mxu0 %v48
    %837 = vmatpush1.msra.mxu0 %v47
    %838 = vmatprep.subr.mxu0 %v50
    %839 = vmatpush1.msra.mxu0 %v49
    %840 = vmatprep.subr.mxu0 %v52
    %841 = vmatpush1.msra.mxu0 %v51
    %842 = vmatprep.subr.mxu0 %v54
    %843 = vmatpush1.msra.mxu0 %v53
    %844 = vmatprep.subr.mxu0 %v56
    %845 = vmatpush1.msra.mxu0 %v55
    %846 = vmatprep.subr.mxu0 %v58
    %847 = vmatpush1.msra.mxu0 %v57
    %848 = vmatprep.subr.mxu0 %v60
    %849 = vmatpush1.msra.mxu0 %v59
    %850 = vmatprep.subr.mxu0 0.0
    %851 = vmatpush1.msra.mxu0 0.0
    %852 = vmatprep.subr.mxu0 0.0
    %853 = vmatpush1.msra.mxu0 0.0
    %854 = vmatprep.subr.mxu0 0.0
    %855 = vmatpush1.msra.mxu0 0.0
    %856 = vmatprep.subr.mxu0 0.0
    %857 = vmatpush1.msra.mxu0 0.0
    %858 = vmatprep.subr.mxu0 0.0
    %859 = vmatpush1.msra.mxu0 0.0
    %860 = vmatprep.subr.mxu0 0.0
    %861 = vmatpush1.msra.mxu0 0.0
    %862 = vmatprep.subr.mxu0 0.0
    %863 = vmatpush1.msra.mxu0 0.0
    %864 = vmatprep.subr.mxu0 0.0
    %865 = vmatpush1.msra.mxu0 0.0
    %866 = vmatprep.subr.mxu0 0.0
    %867 = vmatpush1.msra.mxu0 0.0
    %868 = vmatprep.subr.mxu0 0.0
    %869 = vmatpush1.msra.mxu0 0.0
    %870 = vmatprep.subr.mxu0 0.0
    %871 = vmatpush1.msra.mxu0 0.0
    %872 = vmatprep.subr.mxu0 0.0
    %873 = vmatpush1.msra.mxu0 0.0
    %874 = vmatprep.subr.mxu0 0.0
    %875 = vmatpush1.msra.mxu0 0.0
    %876 = vmatprep.subr.mxu0 0.0
    %877 = vmatpush1.msra.mxu0 0.0
    %878 = vmatprep.subr.mxu0 0.0
    %879 = vmatpush1.msra.mxu0 0.0
    %880 = vmatprep.subr.mxu0 0.0
    %881 = vmatpush1.msra.mxu0 0.0
    %882 = vmatprep.subr.mxu0 0.0
    %883 = vmatpush1.msra.mxu0 0.0
    %884 = vmatprep.subr.mxu0 0.0
    %885 = vmatpush1.msra.mxu0 0.0
    %886 = vmatprep.subr.mxu0 0.0
    %887 = vmatpush1.msra.mxu0 0.0
    %888 = vmatprep.subr.mxu0 0.0
    %889 = vmatpush1.msra.mxu0 0.0
    %890 = vmatprep.subr.mxu0 0.0
    %891 = vmatpush1.msra.mxu0 0.0
    %892 = vmatprep.subr.mxu0 0.0
    %893 = vmatpush1.msra.mxu0 0.0
    %894 = vmatprep.subr.mxu0 0.0
    %895 = vmatpush1.msra.mxu0 0.0
    %896 = vmatprep.subr.mxu0 0.0
    %897 = vmatpush1.msra.mxu0 0.0
    %898 = vmatprep.mubr.f32.mxu0 0.0
    %899 = vmatmul.mubr.f32.gmra.mrb[0].mxu0 %v832
    %v900 = vpop.f32.mrb[0].mxu0
    %v901 = vadd.f32 0.0, %v900
    %v902 = vpop.f32.mrb[0].mxu0
    %v903 = vadd.f32 0.0, %v902
    %904 = vdwg.mxu0
    %v907 = vcombine.low %v901, %v903
    %v909 = vunpack.c.l.s4 1983009808
    %v910 = vunpack.c.0.s8 %v909
    %v911 = vlaneseq
    %v912 = vshrl.u32 %v911, 7
    %v913 = vsub.s32 %v910, %v912
    %v914 = vrot.slane %v907, %v913
    %v916 = vadd.f32 %v830, %v914
    %v917 = vxor.u32 %v916, 2147483648
    %v918 = vmul.f32 %v917, 1.442695
    %v919 = vpow.pop %v918
    %v920 = vadd.f32 %v919, 1.0
    %v921 = vrcp.pop %v920
    %v922 = vmul.f32 1.0, %v921
    %924 = vrot.lane.b32.xlu0 %v916, 64
    %v925 = vpop.permute.xlu0 %924
    %v926 = vrot.slane %v925, 2
    %v928 = vtanh.pop %v926
    %v929 = vmul.f32 %v922, %v817
    %v930 = vmul.f32 %v922, %v928
    %932 = vrot.lane.b32.xlu0 %v930, 64
    %v933 = vpop.permute.xlu0 %932
    %v935 = vadd.f32 %v929, %v933
    %v936 = vtanh.pop %v935
    %v938 = vrot.slane %v922, 2
    %941 = vrot.lane.b32.xlu0 %v936, 64
    %v942 = vpop.permute.xlu0 %941
    %v944 = vmul.f32 %v938, %v942
    %s945 = scalar_lea.vmem [#allocation2], 12
    %946 = vst.msk [vmem:[%s945] sm:$0x3] %vm237, %v944
    %s947 = scalar_lea.vmem %s0, 28
    %v948 = vld [vmem:[%s947] sm:$0xf]
    %v950 = vsel %vm122, %v944, 0
    %952 = vmatprep.subr.mxu0 %v46
    %953 = vmatpush1.msra.mxu0 %v45
    %954 = vmatprep.subr.mxu0 %v48
    %955 = vmatpush1.msra.mxu0 %v47
    %956 = vmatprep.subr.mxu0 %v50
    %957 = vmatpush1.msra.mxu0 %v49
    %958 = vmatprep.subr.mxu0 %v52
    %959 = vmatpush1.msra.mxu0 %v51
    %960 = vmatprep.subr.mxu0 %v54
    %961 = vmatpush1.msra.mxu0 %v53
    %962 = vmatprep.subr.mxu0 %v56
    %963 = vmatpush1.msra.mxu0 %v55
    %964 = vmatprep.subr.mxu0 %v58
    %965 = vmatpush1.msra.mxu0 %v57
    %966 = vmatprep.subr.mxu0 %v60
    %967 = vmatpush1.msra.mxu0 %v59
    %968 = vmatprep.subr.mxu0 0.0
    %969 = vmatpush1.msra.mxu0 0.0
    %970 = vmatprep.subr.mxu0 0.0
    %971 = vmatpush1.msra.mxu0 0.0
    %972 = vmatprep.subr.mxu0 0.0
    %973 = vmatpush1.msra.mxu0 0.0
    %974 = vmatprep.subr.mxu0 0.0
    %975 = vmatpush1.msra.mxu0 0.0
    %976 = vmatprep.subr.mxu0 0.0
    %977 = vmatpush1.msra.mxu0 0.0
    %978 = vmatprep.subr.mxu0 0.0
    %979 = vmatpush1.msra.mxu0 0.0
    %980 = vmatprep.subr.mxu0 0.0
    %981 = vmatpush1.msra.mxu0 0.0
    %982 = vmatprep.subr.mxu0 0.0
    %983 = vmatpush1.msra.mxu0 0.0
    %984 = vmatprep.subr.mxu0 0.0
    %985 = vmatpush1.msra.mxu0 0.0
    %986 = vmatprep.subr.mxu0 0.0
    %987 = vmatpush1.msra.mxu0 0.0
    %988 = vmatprep.subr.mxu0 0.0
    %989 = vmatpush1.msra.mxu0 0.0
    %990 = vmatprep.subr.mxu0 0.0
    %991 = vmatpush1.msra.mxu0 0.0
    %992 = vmatprep.subr.mxu0 0.0
    %993 = vmatpush1.msra.mxu0 0.0
    %994 = vmatprep.subr.mxu0 0.0
    %995 = vmatpush1.msra.mxu0 0.0
    %996 = vmatprep.subr.mxu0 0.0
    %997 = vmatpush1.msra.mxu0 0.0
    %998 = vmatprep.subr.mxu0 0.0
    %999 = vmatpush1.msra.mxu0 0.0
    %1000 = vmatprep.subr.mxu0 0.0
    %1001 = vmatpush1.msra.mxu0 0.0
    %1002 = vmatprep.subr.mxu0 0.0
    %1003 = vmatpush1.msra.mxu0 0.0
    %1004 = vmatprep.subr.mxu0 0.0
    %1005 = vmatpush1.msra.mxu0 0.0
    %1006 = vmatprep.subr.mxu0 0.0
    %1007 = vmatpush1.msra.mxu0 0.0
    %1008 = vmatprep.subr.mxu0 0.0
    %1009 = vmatpush1.msra.mxu0 0.0
    %1010 = vmatprep.subr.mxu0 0.0
    %1011 = vmatpush1.msra.mxu0 0.0
    %1012 = vmatprep.subr.mxu0 0.0
    %1013 = vmatpush1.msra.mxu0 0.0
    %1014 = vmatprep.subr.mxu0 0.0
    %1015 = vmatpush1.msra.mxu0 0.0
    %1016 = vmatprep.mubr.f32.mxu0 0.0
    %1017 = vmatmul.mubr.f32.gmra.mrb[0].mxu0 %v950
    %v1018 = vpop.f32.mrb[0].mxu0
    %v1019 = vadd.f32 0.0, %v1018
    %v1020 = vpop.f32.mrb[0].mxu0
    %v1021 = vadd.f32 0.0, %v1020
    %1022 = vdwg.mxu0
    %v1025 = vcombine.low %v1019, %v1021
    %v1027 = vunpack.c.l.s4 1983009808
    %v1028 = vunpack.c.0.s8 %v1027
    %v1029 = vlaneseq
    %v1030 = vshrl.u32 %v1029, 7
    %v1031 = vsub.s32 %v1028, %v1030
    %v1032 = vrot.slane %v1025, %v1031
    %v1034 = vadd.f32 %v948, %v1032
    %v1035 = vxor.u32 %v1034, 2147483648
    %v1036 = vmul.f32 %v1035, 1.442695
    %v1037 = vpow.pop %v1036
    %v1038 = vadd.f32 %v1037, 1.0
    %v1039 = vrcp.pop %v1038
    %v1040 = vmul.f32 1.0, %v1039
    %1042 = vrot.lane.b32.xlu0 %v1034, 64
    %v1043 = vpop.permute.xlu0 %1042
    %v1044 = vrot.slane %v1043, 2
    %v1046 = vtanh.pop %v1044
    %v1047 = vmul.f32 %v1040, %v935
    %v1048 = vmul.f32 %v1040, %v1046
    %1050 = vrot.lane.b32.xlu0 %v1048, 64
    %v1051 = vpop.permute.xlu0 %1050
    %v1053 = vadd.f32 %v1047, %v1051
    %v1054 = vtanh.pop %v1053
    %v1056 = vrot.slane %v1040, 2
    %1059 = vrot.lane.b32.xlu0 %v1054, 64
    %v1060 = vpop.permute.xlu0 %1059
    %v1062 = vmul.f32 %v1056, %v1060
    %s1063 = scalar_lea.vmem [#allocation2], 14
    %1064 = vst.msk [vmem:[%s1063] sm:$0x3] %vm237, %v1062
    %v1065 = vld [vmem:[#allocation2] sm:$0x3]
    %v1066 = vld [vmem:[%s1063] sm:$0x3]
    %v1068 = vsel %vm122, %v1066, 0
    %1070 = vmatprep.subr.mxu0 %v94
    %1071 = vmatpush1.msra.mxu0 %v93
    %1072 = vmatprep.subr.mxu0 %v96
    %1073 = vmatpush1.msra.mxu0 %v95
    %1074 = vmatprep.subr.mxu0 %v98
    %1075 = vmatpush1.msra.mxu0 %v97
    %1076 = vmatprep.subr.mxu0 %v100
    %1077 = vmatpush1.msra.mxu0 %v99
    %1078 = vmatprep.subr.mxu0 %v102
    %1079 = vmatpush1.msra.mxu0 %v101
    %1080 = vmatprep.subr.mxu0 %v104
    %1081 = vmatpush1.msra.mxu0 %v103
    %1082 = vmatprep.subr.mxu0 %v106
    %1083 = vmatpush1.msra.mxu0 %v105
    %1084 = vmatprep.subr.mxu0 %v108
    %1085 = vmatpush1.msra.mxu0 %v107
    %1086 = vmatprep.subr.mxu0 0.0
    %1087 = vmatpush1.msra.mxu0 0.0
    %1088 = vmatprep.subr.mxu0 0.0
    %1089 = vmatpush1.msra.mxu0 0.0
    %1090 = vmatprep.subr.mxu0 0.0
    %1091 = vmatpush1.msra.mxu0 0.0
    %1092 = vmatprep.subr.mxu0 0.0
    %1093 = vmatpush1.msra.mxu0 0.0
    %1094 = vmatprep.subr.mxu0 0.0
    %1095 = vmatpush1.msra.mxu0 0.0
    %1096 = vmatprep.subr.mxu0 0.0
    %1097 = vmatpush1.msra.mxu0 0.0
    %1098 = vmatprep.subr.mxu0 0.0
    %1099 = vmatpush1.msra.mxu0 0.0
    %1100 = vmatprep.subr.mxu0 0.0
    %1101 = vmatpush1.msra.mxu0 0.0
    %1102 = vmatprep.subr.mxu0 0.0
    %1103 = vmatpush1.msra.mxu0 0.0
    %1104 = vmatprep.subr.mxu0 0.0
    %1105 = vmatpush1.msra.mxu0 0.0
    %1106 = vmatprep.subr.mxu0 0.0
    %1107 = vmatpush1.msra.mxu0 0.0
    %1108 = vmatprep.subr.mxu0 0.0
    %1109 = vmatpush1.msra.mxu0 0.0
    %1110 = vmatprep.subr.mxu0 0.0
    %1111 = vmatpush1.msra.mxu0 0.0
    %1112 = vmatprep.subr.mxu0 0.0
    %1113 = vmatpush1.msra.mxu0 0.0
    %1114 = vmatprep.subr.mxu0 0.0
    %1115 = vmatpush1.msra.mxu0 0.0
    %1116 = vmatprep.subr.mxu0 0.0
    %1117 = vmatpush1.msra.mxu0 0.0
    %1118 = vmatprep.subr.mxu0 0.0
    %1119 = vmatpush1.msra.mxu0 0.0
    %1120 = vmatprep.subr.mxu0 0.0
    %1121 = vmatpush1.msra.mxu0 0.0
    %1122 = vmatprep.subr.mxu0 0.0
    %1123 = vmatpush1.msra.mxu0 0.0
    %1124 = vmatprep.subr.mxu0 0.0
    %1125 = vmatpush1.msra.mxu0 0.0
    %1126 = vmatprep.subr.mxu0 0.0
    %1127 = vmatpush1.msra.mxu0 0.0
    %1128 = vmatprep.subr.mxu0 0.0
    %1129 = vmatpush1.msra.mxu0 0.0
    %1130 = vmatprep.subr.mxu0 0.0
    %1131 = vmatpush1.msra.mxu0 0.0
    %1132 = vmatprep.subr.mxu0 0.0
    %1133 = vmatpush1.msra.mxu0 0.0
    %1134 = vmatprep.mubr.f32.mxu0 0.0
    %1135 = vmatmul.mubr.f32.gmra.mrb[0].mxu0 %v1068
    %v1136 = vpop.f32.mrb[0].mxu0
    %v1137 = vadd.f32 0.0, %v1136
    %v1138 = vpop.f32.mrb[0].mxu0
    %v1139 = vadd.f32 0.0, %v1138
    %1140 = vdwg.mxu0
    %v1142 = vsel %vm122, %v1065, 0
    %1144 = vmatprep.subr.mxu0 %v78
    %1145 = vmatpush1.msra.mxu0 %v77
    %1146 = vmatprep.subr.mxu0 %v80
    %1147 = vmatpush1.msra.mxu0 %v79
    %1148 = vmatprep.subr.mxu0 %v82
    %1149 = vmatpush1.msra.mxu0 %v81
    %1150 = vmatprep.subr.mxu0 %v84
    %1151 = vmatpush1.msra.mxu0 %v83
    %1152 = vmatprep.subr.mxu0 %v86
    %1153 = vmatpush1.msra.mxu0 %v85
    %1154 = vmatprep.subr.mxu0 %v88
    %1155 = vmatpush1.msra.mxu0 %v87
    %1156 = vmatprep.subr.mxu0 %v90
    %1157 = vmatpush1.msra.mxu0 %v89
    %1158 = vmatprep.subr.mxu0 %v92
    %1159 = vmatpush1.msra.mxu0 %v91
    %1160 = vmatprep.subr.mxu0 0.0
    %1161 = vmatpush1.msra.mxu0 0.0
    %1162 = vmatprep.subr.mxu0 0.0
    %1163 = vmatpush1.msra.mxu0 0.0
    %1164 = vmatprep.subr.mxu0 0.0
    %1165 = vmatpush1.msra.mxu0 0.0
    %1166 = vmatprep.subr.mxu0 0.0
    %1167 = vmatpush1.msra.mxu0 0.0
    %1168 = vmatprep.subr.mxu0 0.0
    %1169 = vmatpush1.msra.mxu0 0.0
    %1170 = vmatprep.subr.mxu0 0.0
    %1171 = vmatpush1.msra.mxu0 0.0
    %1172 = vmatprep.subr.mxu0 0.0
    %1173 = vmatpush1.msra.mxu0 0.0
    %1174 = vmatprep.subr.mxu0 0.0
    %1175 = vmatpush1.msra.mxu0 0.0
    %1176 = vmatprep.subr.mxu0 0.0
    %1177 = vmatpush1.msra.mxu0 0.0
    %1178 = vmatprep.subr.mxu0 0.0
    %1179 = vmatpush1.msra.mxu0 0.0
    %1180 = vmatprep.subr.mxu0 0.0
    %1181 = vmatpush1.msra.mxu0 0.0
    %1182 = vmatprep.subr.mxu0 0.0
    %1183 = vmatpush1.msra.mxu0 0.0
    %1184 = vmatprep.subr.mxu0 0.0
    %1185 = vmatpush1.msra.mxu0 0.0
    %1186 = vmatprep.subr.mxu0 0.0
    %1187 = vmatpush1.msra.mxu0 0.0
    %1188 = vmatprep.subr.mxu0 0.0
    %1189 = vmatpush1.msra.mxu0 0.0
    %1190 = vmatprep.subr.mxu0 0.0
    %1191 = vmatpush1.msra.mxu0 0.0
    %1192 = vmatprep.subr.mxu0 0.0
    %1193 = vmatpush1.msra.mxu0 0.0
    %1194 = vmatprep.subr.mxu0 0.0
    %1195 = vmatpush1.msra.mxu0 0.0
    %1196 = vmatprep.subr.mxu0 0.0
    %1197 = vmatpush1.msra.mxu0 0.0
    %1198 = vmatprep.subr.mxu0 0.0
    %1199 = vmatpush1.msra.mxu0 0.0
    %1200 = vmatprep.subr.mxu0 0.0
    %1201 = vmatpush1.msra.mxu0 0.0
    %1202 = vmatprep.subr.mxu0 0.0
    %1203 = vmatpush1.msra.mxu0 0.0
    %1204 = vmatprep.subr.mxu0 0.0
    %1205 = vmatpush1.msra.mxu0 0.0
    %1206 = vmatprep.subr.mxu0 0.0
    %1207 = vmatpush1.msra.mxu0 0.0
    %1208 = vmatprep.mubr.f32.mxu0 0.0
    %1209 = vmatmul.mubr.f32.gmra.mrb[0].mxu0 %v1142
    %v1210 = vpop.f32.mrb[0].mxu0
    %v1211 = vadd.f32 %v1137, %v1210
    %v1212 = vpop.f32.mrb[0].mxu0
    %v1213 = vadd.f32 %v1139, %v1212
    %1214 = vdwg.mxu0
    %v1215 = vadd.f32 %v1211, %v114
    %v1216 = vadd.f32 %v1213, %v118
    %1217 = vmatprep.subr.mxu0 %v62
    %1218 = vmatpush1.msra.mxu0 %v61
    %1219 = vmatprep.subr.mxu0 %v64
    %1220 = vmatpush1.msra.mxu0 %v63
    %1221 = vmatprep.subr.mxu0 %v66
    %1222 = vmatpush1.msra.mxu0 %v65
    %1223 = vmatprep.subr.mxu0 %v68
    %1224 = vmatpush1.msra.mxu0 %v67
    %1225 = vmatprep.subr.mxu0 %v70
    %1226 = vmatpush1.msra.mxu0 %v69
    %1227 = vmatprep.subr.mxu0 %v72
    %1228 = vmatpush1.msra.mxu0 %v71
    %1229 = vmatprep.subr.mxu0 %v74
    %1230 = vmatpush1.msra.mxu0 %v73
    %1231 = vmatprep.subr.mxu0 %v76
    %1232 = vmatpush1.msra.mxu0 %v75
    %1233 = vmatprep.subr.mxu0 0.0
    %1234 = vmatpush1.msra.mxu0 0.0
    %1235 = vmatprep.subr.mxu0 0.0
    %1236 = vmatpush1.msra.mxu0 0.0
    %1237 = vmatprep.subr.mxu0 0.0
    %1238 = vmatpush1.msra.mxu0 0.0
    %1239 = vmatprep.subr.mxu0 0.0
    %1240 = vmatpush1.msra.mxu0 0.0
    %1241 = vmatprep.subr.mxu0 0.0
    %1242 = vmatpush1.msra.mxu0 0.0
    %1243 = vmatprep.subr.mxu0 0.0
    %1244 = vmatpush1.msra.mxu0 0.0
    %1245 = vmatprep.subr.mxu0 0.0
    %1246 = vmatpush1.msra.mxu0 0.0
    %1247 = vmatprep.subr.mxu0 0.0
    %1248 = vmatpush1.msra.mxu0 0.0
    %1249 = vmatprep.subr.mxu0 0.0
    %1250 = vmatpush1.msra.mxu0 0.0
    %1251 = vmatprep.subr.mxu0 0.0
    %1252 = vmatpush1.msra.mxu0 0.0
    %1253 = vmatprep.subr.mxu0 0.0
    %1254 = vmatpush1.msra.mxu0 0.0
    %1255 = vmatprep.subr.mxu0 0.0
    %1256 = vmatpush1.msra.mxu0 0.0
    %1257 = vmatprep.subr.mxu0 0.0
    %1258 = vmatpush1.msra.mxu0 0.0
    %1259 = vmatprep.subr.mxu0 0.0
    %1260 = vmatpush1.msra.mxu0 0.0
    %1261 = vmatprep.subr.mxu0 0.0
    %1262 = vmatpush1.msra.mxu0 0.0
    %1263 = vmatprep.subr.mxu0 0.0
    %1264 = vmatpush1.msra.mxu0 0.0
    %1265 = vmatprep.subr.mxu0 0.0
    %1266 = vmatpush1.msra.mxu0 0.0
    %1267 = vmatprep.subr.mxu0 0.0
    %1268 = vmatpush1.msra.mxu0 0.0
    %1269 = vmatprep.subr.mxu0 0.0
    %1270 = vmatpush1.msra.mxu0 0.0
    %1271 = vmatprep.subr.mxu0 0.0
    %1272 = vmatpush1.msra.mxu0 0.0
    %1273 = vmatprep.subr.mxu0 0.0
    %1274 = vmatpush1.msra.mxu0 0.0
    %1275 = vmatprep.subr.mxu0 0.0
    %1276 = vmatpush1.msra.mxu0 0.0
    %1277 = vmatprep.subr.mxu0 0.0
    %1278 = vmatpush1.msra.mxu0 0.0
    %1279 = vmatprep.subr.mxu0 0.0
    %1280 = vmatpush1.msra.mxu0 0.0
    %1281 = vmatprep.mubr.f32.mxu0 0.0
    %1282 = vmatmul.mubr.f32.gmra.mrb[0].mxu0 %v124
    %v1283 = vpop.f32.mrb[0].mxu0
    %v1284 = vadd.f32 0.0, %v1283
    %v1285 = vpop.f32.mrb[0].mxu0
    %v1286 = vadd.f32 0.0, %v1285
    %1287 = vdwg.mxu0
    %v1288 = vadd.f32 %v1215, %v1284
    %v1289 = vadd.f32 %v1216, %v1286
    %v1290 = vxor.u32 %v1288, 2147483648
    %v1291 = vxor.u32 %v1289, 2147483648
    %v1292 = vmul.f32 %v1290, 1.442695
    %v1293 = vpow.pop %v1292
    %v1294 = vmul.f32 %v1291, 1.442695
    %v1295 = vpow.pop %v1294
    %v1296 = vadd.f32 %v1293, 1.0
    %v1297 = vadd.f32 %v1295, 1.0
    %v1298 = vrcp.pop %v1296
    %v1299 = vmul.f32 1.0, %v1298
    %v1300 = vrcp.pop %v1297
    %v1301 = vmul.f32 1.0, %v1300
    %v1302 = vtanh.pop %v1289
    %v1303 = vmul.f32 %v1299, 0.0
    %1305 = vrot.lane.b32.xlu0 %v1302, 64
    %v1306 = vpop.permute.xlu0 %1305
    %v1308 = vmul.f32 %v1299, %v1306
    %1310 = vrot.lane.b32.xlu0 %v1308, 64
    %v1311 = vpop.permute.xlu0 %1310
    %v1313 = vadd.f32 %v1303, %v1311
    %v1314 = vtanh.pop %v1313
    %1316 = vrot.lane.b32.xlu0 %v1314, 64
    %v1317 = vpop.permute.xlu0 %1316
    %v1319 = vmul.f32 %v1301, %v1317
    %v1320 = vadd.f32 %v1319, 0.0
    %v1321 = vld [vmem:[%s355] sm:$0x3]
    %v1322 = vld [vmem:[%s945] sm:$0x3]
    %v1324 = vsel %vm122, %v1322, 0
    %1326 = vmatprep.subr.mxu0 %v94
    %1327 = vmatpush1.msra.mxu0 %v93
    %1328 = vmatprep.subr.mxu0 %v96
    %1329 = vmatpush1.msra.mxu0 %v95
    %1330 = vmatprep.subr.mxu0 %v98
    %1331 = vmatpush1.msra.mxu0 %v97
    %1332 = vmatprep.subr.mxu0 %v100
    %1333 = vmatpush1.msra.mxu0 %v99
    %1334 = vmatprep.subr.mxu0 %v102
    %1335 = vmatpush1.msra.mxu0 %v101
    %1336 = vmatprep.subr.mxu0 %v104
    %1337 = vmatpush1.msra.mxu0 %v103
    %1338 = vmatprep.subr.mxu0 %v106
    %1339 = vmatpush1.msra.mxu0 %v105
    %1340 = vmatprep.subr.mxu0 %v108
    %1341 = vmatpush1.msra.mxu0 %v107
    %1342 = vmatprep.subr.mxu0 0.0
    %1343 = vmatpush1.msra.mxu0 0.0
    %1344 = vmatprep.subr.mxu0 0.0
    %1345 = vmatpush1.msra.mxu0 0.0
    %1346 = vmatprep.subr.mxu0 0.0
    %1347 = vmatpush1.msra.mxu0 0.0
    %1348 = vmatprep.subr.mxu0 0.0
    %1349 = vmatpush1.msra.mxu0 0.0
    %1350 = vmatprep.subr.mxu0 0.0
    %1351 = vmatpush1.msra.mxu0 0.0
    %1352 = vmatprep.subr.mxu0 0.0
    %1353 = vmatpush1.msra.mxu0 0.0
    %1354 = vmatprep.subr.mxu0 0.0
    %1355 = vmatpush1.msra.mxu0 0.0
    %1356 = vmatprep.subr.mxu0 0.0
    %1357 = vmatpush1.msra.mxu0 0.0
    %1358 = vmatprep.subr.mxu0 0.0
    %1359 = vmatpush1.msra.mxu0 0.0
    %1360 = vmatprep.subr.mxu0 0.0
    %1361 = vmatpush1.msra.mxu0 0.0
    %1362 = vmatprep.subr.mxu0 0.0
    %1363 = vmatpush1.msra.mxu0 0.0
    %1364 = vmatprep.subr.mxu0 0.0
    %1365 = vmatpush1.msra.mxu0 0.0
    %1366 = vmatprep.subr.mxu0 0.0
    %1367 = vmatpush1.msra.mxu0 0.0
    %1368 = vmatprep.subr.mxu0 0.0
    %1369 = vmatpush1.msra.mxu0 0.0
    %1370 = vmatprep.subr.mxu0 0.0
    %1371 = vmatpush1.msra.mxu0 0.0
    %1372 = vmatprep.subr.mxu0 0.0
    %1373 = vmatpush1.msra.mxu0 0.0
    %1374 = vmatprep.subr.mxu0 0.0
    %1375 = vmatpush1.msra.mxu0 0.0
    %1376 = vmatprep.subr.mxu0 0.0
    %1377 = vmatpush1.msra.mxu0 0.0
    %1378 = vmatprep.subr.mxu0 0.0
    %1379 = vmatpush1.msra.mxu0 0.0
    %1380 = vmatprep.subr.mxu0 0.0
    %1381 = vmatpush1.msra.mxu0 0.0
    %1382 = vmatprep.subr.mxu0 0.0
    %1383 = vmatpush1.msra.mxu0 0.0
    %1384 = vmatprep.subr.mxu0 0.0
    %1385 = vmatpush1.msra.mxu0 0.0
    %1386 = vmatprep.subr.mxu0 0.0
    %1387 = vmatpush1.msra.mxu0 0.0
    %1388 = vmatprep.subr.mxu0 0.0
    %1389 = vmatpush1.msra.mxu0 0.0
    %1390 = vmatprep.mubr.f32.mxu0 0.0
    %1391 = vmatmul.mubr.f32.gmra.mrb[0].mxu0 %v1324
    %v1392 = vpop.f32.mrb[0].mxu0
    %v1393 = vadd.f32 0.0, %v1392
    %v1394 = vpop.f32.mrb[0].mxu0
    %v1395 = vadd.f32 0.0, %v1394
    %1396 = vdwg.mxu0
    %v1398 = vsel %vm122, %v1321, 0
    %1400 = vmatprep.subr.mxu0 %v78
    %1401 = vmatpush1.msra.mxu0 %v77
    %1402 = vmatprep.subr.mxu0 %v80
    %1403 = vmatpush1.msra.mxu0 %v79
    %1404 = vmatprep.subr.mxu0 %v82
    %1405 = vmatpush1.msra.mxu0 %v81
    %1406 = vmatprep.subr.mxu0 %v84
    %1407 = vmatpush1.msra.mxu0 %v83
    %1408 = vmatprep.subr.mxu0 %v86
    %1409 = vmatpush1.msra.mxu0 %v85
    %1410 = vmatprep.subr.mxu0 %v88
    %1411 = vmatpush1.msra.mxu0 %v87
    %1412 = vmatprep.subr.mxu0 %v90
    %1413 = vmatpush1.msra.mxu0 %v89
    %1414 = vmatprep.subr.mxu0 %v92
    %1415 = vmatpush1.msra.mxu0 %v91
    %1416 = vmatprep.subr.mxu0 0.0
    %1417 = vmatpush1.msra.mxu0 0.0
    %1418 = vmatprep.subr.mxu0 0.0
    %1419 = vmatpush1.msra.mxu0 0.0
    %1420 = vmatprep.subr.mxu0 0.0
    %1421 = vmatpush1.msra.mxu0 0.0
    %1422 = vmatprep.subr.mxu0 0.0
    %1423 = vmatpush1.msra.mxu0 0.0
    %1424 = vmatprep.subr.mxu0 0.0
    %1425 = vmatpush1.msra.mxu0 0.0
    %1426 = vmatprep.subr.mxu0 0.0
    %1427 = vmatpush1.msra.mxu0 0.0
    %1428 = vmatprep.subr.mxu0 0.0
    %1429 = vmatpush1.msra.mxu0 0.0
    %1430 = vmatprep.subr.mxu0 0.0
    %1431 = vmatpush1.msra.mxu0 0.0
    %1432 = vmatprep.subr.mxu0 0.0
    %1433 = vmatpush1.msra.mxu0 0.0
    %1434 = vmatprep.subr.mxu0 0.0
    %1435 = vmatpush1.msra.mxu0 0.0
    %1436 = vmatprep.subr.mxu0 0.0
    %1437 = vmatpush1.msra.mxu0 0.0
    %1438 = vmatprep.subr.mxu0 0.0
    %1439 = vmatpush1.msra.mxu0 0.0
    %1440 = vmatprep.subr.mxu0 0.0
    %1441 = vmatpush1.msra.mxu0 0.0
    %1442 = vmatprep.subr.mxu0 0.0
    %1443 = vmatpush1.msra.mxu0 0.0
    %1444 = vmatprep.subr.mxu0 0.0
    %1445 = vmatpush1.msra.mxu0 0.0
    %1446 = vmatprep.subr.mxu0 0.0
    %1447 = vmatpush1.msra.mxu0 0.0
    %1448 = vmatprep.subr.mxu0 0.0
    %1449 = vmatpush1.msra.mxu0 0.0
    %1450 = vmatprep.subr.mxu0 0.0
    %1451 = vmatpush1.msra.mxu0 0.0
    %1452 = vmatprep.subr.mxu0 0.0
    %1453 = vmatpush1.msra.mxu0 0.0
    %1454 = vmatprep.subr.mxu0 0.0
    %1455 = vmatpush1.msra.mxu0 0.0
    %1456 = vmatprep.subr.mxu0 0.0
    %1457 = vmatpush1.msra.mxu0 0.0
    %1458 = vmatprep.subr.mxu0 0.0
    %1459 = vmatpush1.msra.mxu0 0.0
    %1460 = vmatprep.subr.mxu0 0.0
    %1461 = vmatpush1.msra.mxu0 0.0
    %1462 = vmatprep.subr.mxu0 0.0
    %1463 = vmatpush1.msra.mxu0 0.0
    %1464 = vmatprep.mubr.f32.mxu0 0.0
    %1465 = vmatmul.mubr.f32.gmra.mrb[0].mxu0 %v1398
    %v1466 = vpop.f32.mrb[0].mxu0
    %v1467 = vadd.f32 %v1393, %v1466
    %v1468 = vpop.f32.mrb[0].mxu0
    %v1469 = vadd.f32 %v1395, %v1468
    %1470 = vdwg.mxu0
    %v1471 = vadd.f32 %v1467, %v114
    %v1472 = vadd.f32 %v1469, %v118
    %v1474 = vsel %vm122, %v1319, 0
    %1476 = vmatprep.subr.mxu0 %v62
    %1477 = vmatpush1.msra.mxu0 %v61
    %1478 = vmatprep.subr.mxu0 %v64
    %1479 = vmatpush1.msra.mxu0 %v63
    %1480 = vmatprep.subr.mxu0 %v66
    %1481 = vmatpush1.msra.mxu0 %v65
    %1482 = vmatprep.subr.mxu0 %v68
    %1483 = vmatpush1.msra.mxu0 %v67
    %1484 = vmatprep.subr.mxu0 %v70
    %1485 = vmatpush1.msra.mxu0 %v69
    %1486 = vmatprep.subr.mxu0 %v72
    %1487 = vmatpush1.msra.mxu0 %v71
    %1488 = vmatprep.subr.mxu0 %v74
    %1489 = vmatpush1.msra.mxu0 %v73
    %1490 = vmatprep.subr.mxu0 %v76
    %1491 = vmatpush1.msra.mxu0 %v75
    %1492 = vmatprep.subr.mxu0 0.0
    %1493 = vmatpush1.msra.mxu0 0.0
    %1494 = vmatprep.subr.mxu0 0.0
    %1495 = vmatpush1.msra.mxu0 0.0
    %1496 = vmatprep.subr.mxu0 0.0
    %1497 = vmatpush1.msra.mxu0 0.0
    %1498 = vmatprep.subr.mxu0 0.0
    %1499 = vmatpush1.msra.mxu0 0.0
    %1500 = vmatprep.subr.mxu0 0.0
    %1501 = vmatpush1.msra.mxu0 0.0
    %1502 = vmatprep.subr.mxu0 0.0
    %1503 = vmatpush1.msra.mxu0 0.0
    %1504 = vmatprep.subr.mxu0 0.0
    %1505 = vmatpush1.msra.mxu0 0.0
    %1506 = vmatprep.subr.mxu0 0.0
    %1507 = vmatpush1.msra.mxu0 0.0
    %1508 = vmatprep.subr.mxu0 0.0
    %1509 = vmatpush1.msra.mxu0 0.0
    %1510 = vmatprep.subr.mxu0 0.0
    %1511 = vmatpush1.msra.mxu0 0.0
    %1512 = vmatprep.subr.mxu0 0.0
    %1513 = vmatpush1.msra.mxu0 0.0
    %1514 = vmatprep.subr.mxu0 0.0
    %1515 = vmatpush1.msra.mxu0 0.0
    %1516 = vmatprep.subr.mxu0 0.0
    %1517 = vmatpush1.msra.mxu0 0.0
    %1518 = vmatprep.subr.mxu0 0.0
    %1519 = vmatpush1.msra.mxu0 0.0
    %1520 = vmatprep.subr.mxu0 0.0
    %1521 = vmatpush1.msra.mxu0 0.0
    %1522 = vmatprep.subr.mxu0 0.0
    %1523 = vmatpush1.msra.mxu0 0.0
    %1524 = vmatprep.subr.mxu0 0.0
    %1525 = vmatpush1.msra.mxu0 0.0
    %1526 = vmatprep.subr.mxu0 0.0
    %1527 = vmatpush1.msra.mxu0 0.0
    %1528 = vmatprep.subr.mxu0 0.0
    %1529 = vmatpush1.msra.mxu0 0.0
    %1530 = vmatprep.subr.mxu0 0.0
    %1531 = vmatpush1.msra.mxu0 0.0
    %1532 = vmatprep.subr.mxu0 0.0
    %1533 = vmatpush1.msra.mxu0 0.0
    %1534 = vmatprep.subr.mxu0 0.0
    %1535 = vmatpush1.msra.mxu0 0.0
    %1536 = vmatprep.subr.mxu0 0.0
    %1537 = vmatpush1.msra.mxu0 0.0
    %1538 = vmatprep.subr.mxu0 0.0
    %1539 = vmatpush1.msra.mxu0 0.0
    %1540 = vmatprep.mubr.f32.mxu0 0.0
    %1541 = vmatmul.mubr.f32.gmra.mrb[0].mxu0 %v1474
    %v1542 = vpop.f32.mrb[0].mxu0
    %v1543 = vadd.f32 0.0, %v1542
    %v1544 = vpop.f32.mrb[0].mxu0
    %v1545 = vadd.f32 0.0, %v1544
    %1546 = vdwg.mxu0
    %v1547 = vadd.f32 %v1471, %v1543
    %v1548 = vadd.f32 %v1472, %v1545
    %v1549 = vxor.u32 %v1547, 2147483648
    %v1550 = vxor.u32 %v1548, 2147483648
    %v1551 = vmul.f32 %v1549, 1.442695
    %v1552 = vpow.pop %v1551
    %v1553 = vmul.f32 %v1550, 1.442695
    %v1554 = vpow.pop %v1553
    %v1555 = vadd.f32 %v1552, 1.0
    %v1556 = vadd.f32 %v1554, 1.0
    %v1557 = vrcp.pop %v1555
    %v1558 = vmul.f32 1.0, %v1557
    %v1559 = vrcp.pop %v1556
    %v1560 = vmul.f32 1.0, %v1559
    %v1561 = vtanh.pop %v1548
    %v1562 = vmul.f32 %v1558, %v1313
    %1564 = vrot.lane.b32.xlu0 %v1561, 64
    %v1565 = vpop.permute.xlu0 %1564
    %v1567 = vmul.f32 %v1558, %v1565
    %1569 = vrot.lane.b32.xlu0 %v1567, 64
    %v1570 = vpop.permute.xlu0 %1569
    %v1572 = vadd.f32 %v1562, %v1570
    %v1573 = vtanh.pop %v1572
    %1575 = vrot.lane.b32.xlu0 %v1573, 64
    %v1576 = vpop.permute.xlu0 %1575
    %v1578 = vmul.f32 %v1560, %v1576
    %v1579 = vadd.f32 %v1320, %v1578
    %v1580 = vld [vmem:[%s473] sm:$0x3]
    %v1581 = vld [vmem:[%s827] sm:$0x3]
    %v1583 = vsel %vm122, %v1581, 0
    %1585 = vmatprep.subr.mxu0 %v94
    %1586 = vmatpush1.msra.mxu0 %v93
    %1587 = vmatprep.subr.mxu0 %v96
    %1588 = vmatpush1.msra.mxu0 %v95
    %1589 = vmatprep.subr.mxu0 %v98
    %1590 = vmatpush1.msra.mxu0 %v97
    %1591 = vmatprep.subr.mxu0 %v100
    %1592 = vmatpush1.msra.mxu0 %v99
    %1593 = vmatprep.subr.mxu0 %v102
    %1594 = vmatpush1.msra.mxu0 %v101
    %1595 = vmatprep.subr.mxu0 %v104
    %1596 = vmatpush1.msra.mxu0 %v103
    %1597 = vmatprep.subr.mxu0 %v106
    %1598 = vmatpush1.msra.mxu0 %v105
    %1599 = vmatprep.subr.mxu0 %v108
    %1600 = vmatpush1.msra.mxu0 %v107
    %1601 = vmatprep.subr.mxu0 0.0
    %1602 = vmatpush1.msra.mxu0 0.0
    %1603 = vmatprep.subr.mxu0 0.0
    %1604 = vmatpush1.msra.mxu0 0.0
    %1605 = vmatprep.subr.mxu0 0.0
    %1606 = vmatpush1.msra.mxu0 0.0
    %1607 = vmatprep.subr.mxu0 0.0
    %1608 = vmatpush1.msra.mxu0 0.0
    %1609 = vmatprep.subr.mxu0 0.0
    %1610 = vmatpush1.msra.mxu0 0.0
    %1611 = vmatprep.subr.mxu0 0.0
    %1612 = vmatpush1.msra.mxu0 0.0
    %1613 = vmatprep.subr.mxu0 0.0
    %1614 = vmatpush1.msra.mxu0 0.0
    %1615 = vmatprep.subr.mxu0 0.0
    %1616 = vmatpush1.msra.mxu0 0.0
    %1617 = vmatprep.subr.mxu0 0.0
    %1618 = vmatpush1.msra.mxu0 0.0
    %1619 = vmatprep.subr.mxu0 0.0
    %1620 = vmatpush1.msra.mxu0 0.0
    %1621 = vmatprep.subr.mxu0 0.0
    %1622 = vmatpush1.msra.mxu0 0.0
    %1623 = vmatprep.subr.mxu0 0.0
    %1624 = vmatpush1.msra.mxu0 0.0
    %1625 = vmatprep.subr.mxu0 0.0
    %1626 = vmatpush1.msra.mxu0 0.0
    %1627 = vmatprep.subr.mxu0 0.0
    %1628 = vmatpush1.msra.mxu0 0.0
    %1629 = vmatprep.subr.mxu0 0.0
    %1630 = vmatpush1.msra.mxu0 0.0
    %1631 = vmatprep.subr.mxu0 0.0
    %1632 = vmatpush1.msra.mxu0 0.0
    %1633 = vmatprep.subr.mxu0 0.0
    %1634 = vmatpush1.msra.mxu0 0.0
    %1635 = vmatprep.subr.mxu0 0.0
    %1636 = vmatpush1.msra.mxu0 0.0
    %1637 = vmatprep.subr.mxu0 0.0
    %1638 = vmatpush1.msra.mxu0 0.0
    %1639 = vmatprep.subr.mxu0 0.0
    %1640 = vmatpush1.msra.mxu0 0.0
    %1641 = vmatprep.subr.mxu0 0.0
    %1642 = vmatpush1.msra.mxu0 0.0
    %1643 = vmatprep.subr.mxu0 0.0
    %1644 = vmatpush1.msra.mxu0 0.0
    %1645 = vmatprep.subr.mxu0 0.0
    %1646 = vmatpush1.msra.mxu0 0.0
    %1647 = vmatprep.subr.mxu0 0.0
    %1648 = vmatpush1.msra.mxu0 0.0
    %1649 = vmatprep.mubr.f32.mxu0 0.0
    %1650 = vmatmul.mubr.f32.gmra.mrb[0].mxu0 %v1583
    %v1651 = vpop.f32.mrb[0].mxu0
    %v1652 = vadd.f32 0.0, %v1651
    %v1653 = vpop.f32.mrb[0].mxu0
    %v1654 = vadd.f32 0.0, %v1653
    %1655 = vdwg.mxu0
    %v1657 = vsel %vm122, %v1580, 0
    %1659 = vmatprep.subr.mxu0 %v78
    %1660 = vmatpush1.msra.mxu0 %v77
    %1661 = vmatprep.subr.mxu0 %v80
    %1662 = vmatpush1.msra.mxu0 %v79
    %1663 = vmatprep.subr.mxu0 %v82
    %1664 = vmatpush1.msra.mxu0 %v81
    %1665 = vmatprep.subr.mxu0 %v84
    %1666 = vmatpush1.msra.mxu0 %v83
    %1667 = vmatprep.subr.mxu0 %v86
    %1668 = vmatpush1.msra.mxu0 %v85
    %1669 = vmatprep.subr.mxu0 %v88
    %1670 = vmatpush1.msra.mxu0 %v87
    %1671 = vmatprep.subr.mxu0 %v90
    %1672 = vmatpush1.msra.mxu0 %v89
    %1673 = vmatprep.subr.mxu0 %v92
    %1674 = vmatpush1.msra.mxu0 %v91
    %1675 = vmatprep.subr.mxu0 0.0
    %1676 = vmatpush1.msra.mxu0 0.0
    %1677 = vmatprep.subr.mxu0 0.0
    %1678 = vmatpush1.msra.mxu0 0.0
    %1679 = vmatprep.subr.mxu0 0.0
    %1680 = vmatpush1.msra.mxu0 0.0
    %1681 = vmatprep.subr.mxu0 0.0
    %1682 = vmatpush1.msra.mxu0 0.0
    %1683 = vmatprep.subr.mxu0 0.0
    %1684 = vmatpush1.msra.mxu0 0.0
    %1685 = vmatprep.subr.mxu0 0.0
    %1686 = vmatpush1.msra.mxu0 0.0
    %1687 = vmatprep.subr.mxu0 0.0
    %1688 = vmatpush1.msra.mxu0 0.0
    %1689 = vmatprep.subr.mxu0 0.0
    %1690 = vmatpush1.msra.mxu0 0.0
    %1691 = vmatprep.subr.mxu0 0.0
    %1692 = vmatpush1.msra.mxu0 0.0
    %1693 = vmatprep.subr.mxu0 0.0
    %1694 = vmatpush1.msra.mxu0 0.0
    %1695 = vmatprep.subr.mxu0 0.0
    %1696 = vmatpush1.msra.mxu0 0.0
    %1697 = vmatprep.subr.mxu0 0.0
    %1698 = vmatpush1.msra.mxu0 0.0
    %1699 = vmatprep.subr.mxu0 0.0
    %1700 = vmatpush1.msra.mxu0 0.0
    %1701 = vmatprep.subr.mxu0 0.0
    %1702 = vmatpush1.msra.mxu0 0.0
    %1703 = vmatprep.subr.mxu0 0.0
    %1704 = vmatpush1.msra.mxu0 0.0
    %1705 = vmatprep.subr.mxu0 0.0
    %1706 = vmatpush1.msra.mxu0 0.0
    %1707 = vmatprep.subr.mxu0 0.0
    %1708 = vmatpush1.msra.mxu0 0.0
    %1709 = vmatprep.subr.mxu0 0.0
    %1710 = vmatpush1.msra.mxu0 0.0
    %1711 = vmatprep.subr.mxu0 0.0
    %1712 = vmatpush1.msra.mxu0 0.0
    %1713 = vmatprep.subr.mxu0 0.0
    %1714 = vmatpush1.msra.mxu0 0.0
    %1715 = vmatprep.subr.mxu0 0.0
    %1716 = vmatpush1.msra.mxu0 0.0
    %1717 = vmatprep.subr.mxu0 0.0
    %1718 = vmatpush1.msra.mxu0 0.0
    %1719 = vmatprep.subr.mxu0 0.0
    %1720 = vmatpush1.msra.mxu0 0.0
    %1721 = vmatprep.subr.mxu0 0.0
    %1722 = vmatpush1.msra.mxu0 0.0
    %1723 = vmatprep.mubr.f32.mxu0 0.0
    %1724 = vmatmul.mubr.f32.gmra.mrb[0].mxu0 %v1657
    %v1725 = vpop.f32.mrb[0].mxu0
    %v1726 = vadd.f32 %v1652, %v1725
    %v1727 = vpop.f32.mrb[0].mxu0
    %v1728 = vadd.f32 %v1654, %v1727
    %1729 = vdwg.mxu0
    %v1730 = vadd.f32 %v1726, %v114
    %v1731 = vadd.f32 %v1728, %v118
    %v1733 = vsel %vm122, %v1578, 0
    %1735 = vmatprep.subr.mxu0 %v62
    %1736 = vmatpush1.msra.mxu0 %v61
    %1737 = vmatprep.subr.mxu0 %v64
    %1738 = vmatpush1.msra.mxu0 %v63
    %1739 = vmatprep.subr.mxu0 %v66
    %1740 = vmatpush1.msra.mxu0 %v65
    %1741 = vmatprep.subr.mxu0 %v68
    %1742 = vmatpush1.msra.mxu0 %v67
    %1743 = vmatprep.subr.mxu0 %v70
    %1744 = vmatpush1.msra.mxu0 %v69
    %1745 = vmatprep.subr.mxu0 %v72
    %1746 = vmatpush1.msra.mxu0 %v71
    %1747 = vmatprep.subr.mxu0 %v74
    %1748 = vmatpush1.msra.mxu0 %v73
    %1749 = vmatprep.subr.mxu0 %v76
    %1750 = vmatpush1.msra.mxu0 %v75
    %1751 = vmatprep.subr.mxu0 0.0
    %1752 = vmatpush1.msra.mxu0 0.0
    %1753 = vmatprep.subr.mxu0 0.0
    %1754 = vmatpush1.msra.mxu0 0.0
    %1755 = vmatprep.subr.mxu0 0.0
    %1756 = vmatpush1.msra.mxu0 0.0
    %1757 = vmatprep.subr.mxu0 0.0
    %1758 = vmatpush1.msra.mxu0 0.0
    %1759 = vmatprep.subr.mxu0 0.0
    %1760 = vmatpush1.msra.mxu0 0.0
    %1761 = vmatprep.subr.mxu0 0.0
    %1762 = vmatpush1.msra.mxu0 0.0
    %1763 = vmatprep.subr.mxu0 0.0
    %1764 = vmatpush1.msra.mxu0 0.0
    %1765 = vmatprep.subr.mxu0 0.0
    %1766 = vmatpush1.msra.mxu0 0.0
    %1767 = vmatprep.subr.mxu0 0.0
    %1768 = vmatpush1.msra.mxu0 0.0
    %1769 = vmatprep.subr.mxu0 0.0
    %1770 = vmatpush1.msra.mxu0 0.0
    %1771 = vmatprep.subr.mxu0 0.0
    %1772 = vmatpush1.msra.mxu0 0.0
    %1773 = vmatprep.subr.mxu0 0.0
    %1774 = vmatpush1.msra.mxu0 0.0
    %1775 = vmatprep.subr.mxu0 0.0
    %1776 = vmatpush1.msra.mxu0 0.0
    %1777 = vmatprep.subr.mxu0 0.0
    %1778 = vmatpush1.msra.mxu0 0.0
    %1779 = vmatprep.subr.mxu0 0.0
    %1780 = vmatpush1.msra.mxu0 0.0
    %1781 = vmatprep.subr.mxu0 0.0
    %1782 = vmatpush1.msra.mxu0 0.0
    %1783 = vmatprep.subr.mxu0 0.0
    %1784 = vmatpush1.msra.mxu0 0.0
    %1785 = vmatprep.subr.mxu0 0.0
    %1786 = vmatpush1.msra.mxu0 0.0
    %1787 = vmatprep.subr.mxu0 0.0
    %1788 = vmatpush1.msra.mxu0 0.0
    %1789 = vmatprep.subr.mxu0 0.0
    %1790 = vmatpush1.msra.mxu0 0.0
    %1791 = vmatprep.subr.mxu0 0.0
    %1792 = vmatpush1.msra.mxu0 0.0
    %1793 = vmatprep.subr.mxu0 0.0
    %1794 = vmatpush1.msra.mxu0 0.0
    %1795 = vmatprep.subr.mxu0 0.0
    %1796 = vmatpush1.msra.mxu0 0.0
    %1797 = vmatprep.subr.mxu0 0.0
    %1798 = vmatpush1.msra.mxu0 0.0
    %1799 = vmatprep.mubr.f32.mxu0 0.0
    %1800 = vmatmul.mubr.f32.gmra.mrb[0].mxu0 %v1733
    %v1801 = vpop.f32.mrb[0].mxu0
    %v1802 = vadd.f32 0.0, %v1801
    %v1803 = vpop.f32.mrb[0].mxu0
    %v1804 = vadd.f32 0.0, %v1803
    %1805 = vdwg.mxu0
    %v1806 = vadd.f32 %v1730, %v1802
    %v1807 = vadd.f32 %v1731, %v1804
    %v1808 = vxor.u32 %v1806, 2147483648
    %v1809 = vxor.u32 %v1807, 2147483648
    %v1810 = vmul.f32 %v1808, 1.442695
    %v1811 = vpow.pop %v1810
    %v1812 = vmul.f32 %v1809, 1.442695
    %v1813 = vpow.pop %v1812
    %v1814 = vadd.f32 %v1811, 1.0
    %v1815 = vadd.f32 %v1813, 1.0
    %v1816 = vrcp.pop %v1814
    %v1817 = vmul.f32 1.0, %v1816
    %v1818 = vrcp.pop %v1815
    %v1819 = vmul.f32 1.0, %v1818
    %v1820 = vtanh.pop %v1807
    %v1821 = vmul.f32 %v1817, %v1572
    %1823 = vrot.lane.b32.xlu0 %v1820, 64
    %v1824 = vpop.permute.xlu0 %1823
    %v1826 = vmul.f32 %v1817, %v1824
    %1828 = vrot.lane.b32.xlu0 %v1826, 64
    %v1829 = vpop.permute.xlu0 %1828
    %v1831 = vadd.f32 %v1821, %v1829
    %v1832 = vtanh.pop %v1831
    %1834 = vrot.lane.b32.xlu0 %v1832, 64
    %v1835 = vpop.permute.xlu0 %1834
    %v1837 = vmul.f32 %v1819, %v1835
    %v1838 = vadd.f32 %v1579, %v1837
    %v1839 = vld [vmem:[%s591] sm:$0x3]
    %v1840 = vld [vmem:[%s709] sm:$0x3]
    %v1842 = vsel %vm122, %v1840, 0
    %1844 = vmatprep.subr.mxu0 %v94
    %1845 = vmatpush1.msra.mxu0 %v93
    %1846 = vmatprep.subr.mxu0 %v96
    %1847 = vmatpush1.msra.mxu0 %v95
    %1848 = vmatprep.subr.mxu0 %v98
    %1849 = vmatpush1.msra.mxu0 %v97
    %1850 = vmatprep.subr.mxu0 %v100
    %1851 = vmatpush1.msra.mxu0 %v99
    %1852 = vmatprep.subr.mxu0 %v102
    %1853 = vmatpush1.msra.mxu0 %v101
    %1854 = vmatprep.subr.mxu0 %v104
    %1855 = vmatpush1.msra.mxu0 %v103
    %1856 = vmatprep.subr.mxu0 %v106
    %1857 = vmatpush1.msra.mxu0 %v105
    %1858 = vmatprep.subr.mxu0 %v108
    %1859 = vmatpush1.msra.mxu0 %v107
    %1860 = vmatprep.subr.mxu0 0.0
    %1861 = vmatpush1.msra.mxu0 0.0
    %1862 = vmatprep.subr.mxu0 0.0
    %1863 = vmatpush1.msra.mxu0 0.0
    %1864 = vmatprep.subr.mxu0 0.0
    %1865 = vmatpush1.msra.mxu0 0.0
    %1866 = vmatprep.subr.mxu0 0.0
    %1867 = vmatpush1.msra.mxu0 0.0
    %1868 = vmatprep.subr.mxu0 0.0
    %1869 = vmatpush1.msra.mxu0 0.0
    %1870 = vmatprep.subr.mxu0 0.0
    %1871 = vmatpush1.msra.mxu0 0.0
    %1872 = vmatprep.subr.mxu0 0.0
    %1873 = vmatpush1.msra.mxu0 0.0
    %1874 = vmatprep.subr.mxu0 0.0
    %1875 = vmatpush1.msra.mxu0 0.0
    %1876 = vmatprep.subr.mxu0 0.0
    %1877 = vmatpush1.msra.mxu0 0.0
    %1878 = vmatprep.subr.mxu0 0.0
    %1879 = vmatpush1.msra.mxu0 0.0
    %1880 = vmatprep.subr.mxu0 0.0
    %1881 = vmatpush1.msra.mxu0 0.0
    %1882 = vmatprep.subr.mxu0 0.0
    %1883 = vmatpush1.msra.mxu0 0.0
    %1884 = vmatprep.subr.mxu0 0.0
    %1885 = vmatpush1.msra.mxu0 0.0
    %1886 = vmatprep.subr.mxu0 0.0
    %1887 = vmatpush1.msra.mxu0 0.0
    %1888 = vmatprep.subr.mxu0 0.0
    %1889 = vmatpush1.msra.mxu0 0.0
    %1890 = vmatprep.subr.mxu0 0.0
    %1891 = vmatpush1.msra.mxu0 0.0
    %1892 = vmatprep.subr.mxu0 0.0
    %1893 = vmatpush1.msra.mxu0 0.0
    %1894 = vmatprep.subr.mxu0 0.0
    %1895 = vmatpush1.msra.mxu0 0.0
    %1896 = vmatprep.subr.mxu0 0.0
    %1897 = vmatpush1.msra.mxu0 0.0
    %1898 = vmatprep.subr.mxu0 0.0
    %1899 = vmatpush1.msra.mxu0 0.0
    %1900 = vmatprep.subr.mxu0 0.0
    %1901 = vmatpush1.msra.mxu0 0.0
    %1902 = vmatprep.subr.mxu0 0.0
    %1903 = vmatpush1.msra.mxu0 0.0
    %1904 = vmatprep.subr.mxu0 0.0
    %1905 = vmatpush1.msra.mxu0 0.0
    %1906 = vmatprep.subr.mxu0 0.0
    %1907 = vmatpush1.msra.mxu0 0.0
    %1908 = vmatprep.mubr.f32.mxu0 0.0
    %1909 = vmatmul.mubr.f32.gmra.mrb[0].mxu0 %v1842
    %v1910 = vpop.f32.mrb[0].mxu0
    %v1911 = vadd.f32 0.0, %v1910
    %v1912 = vpop.f32.mrb[0].mxu0
    %v1913 = vadd.f32 0.0, %v1912
    %1914 = vdwg.mxu0
    %v1916 = vsel %vm122, %v1839, 0
    %1918 = vmatprep.subr.mxu0 %v78
    %1919 = vmatpush1.msra.mxu0 %v77
    %1920 = vmatprep.subr.mxu0 %v80
    %1921 = vmatpush1.msra.mxu0 %v79
    %1922 = vmatprep.subr.mxu0 %v82
    %1923 = vmatpush1.msra.mxu0 %v81
    %1924 = vmatprep.subr.mxu0 %v84
    %1925 = vmatpush1.msra.mxu0 %v83
    %1926 = vmatprep.subr.mxu0 %v86
    %1927 = vmatpush1.msra.mxu0 %v85
    %1928 = vmatprep.subr.mxu0 %v88
    %1929 = vmatpush1.msra.mxu0 %v87
    %1930 = vmatprep.subr.mxu0 %v90
    %1931 = vmatpush1.msra.mxu0 %v89
    %1932 = vmatprep.subr.mxu0 %v92
    %1933 = vmatpush1.msra.mxu0 %v91
    %1934 = vmatprep.subr.mxu0 0.0
    %1935 = vmatpush1.msra.mxu0 0.0
    %1936 = vmatprep.subr.mxu0 0.0
    %1937 = vmatpush1.msra.mxu0 0.0
    %1938 = vmatprep.subr.mxu0 0.0
    %1939 = vmatpush1.msra.mxu0 0.0
    %1940 = vmatprep.subr.mxu0 0.0
    %1941 = vmatpush1.msra.mxu0 0.0
    %1942 = vmatprep.subr.mxu0 0.0
    %1943 = vmatpush1.msra.mxu0 0.0
    %1944 = vmatprep.subr.mxu0 0.0
    %1945 = vmatpush1.msra.mxu0 0.0
    %1946 = vmatprep.subr.mxu0 0.0
    %1947 = vmatpush1.msra.mxu0 0.0
    %1948 = vmatprep.subr.mxu0 0.0
    %1949 = vmatpush1.msra.mxu0 0.0
    %1950 = vmatprep.subr.mxu0 0.0
    %1951 = vmatpush1.msra.mxu0 0.0
    %1952 = vmatprep.subr.mxu0 0.0
    %1953 = vmatpush1.msra.mxu0 0.0
    %1954 = vmatprep.subr.mxu0 0.0
    %1955 = vmatpush1.msra.mxu0 0.0
    %1956 = vmatprep.subr.mxu0 0.0
    %1957 = vmatpush1.msra.mxu0 0.0
    %1958 = vmatprep.subr.mxu0 0.0
    %1959 = vmatpush1.msra.mxu0 0.0
    %1960 = vmatprep.subr.mxu0 0.0
    %1961 = vmatpush1.msra.mxu0 0.0
    %1962 = vmatprep.subr.mxu0 0.0
    %1963 = vmatpush1.msra.mxu0 0.0
    %1964 = vmatprep.subr.mxu0 0.0
    %1965 = vmatpush1.msra.mxu0 0.0
    %1966 = vmatprep.subr.mxu0 0.0
    %1967 = vmatpush1.msra.mxu0 0.0
    %1968 = vmatprep.subr.mxu0 0.0
    %1969 = vmatpush1.msra.mxu0 0.0
    %1970 = vmatprep.subr.mxu0 0.0
    %1971 = vmatpush1.msra.mxu0 0.0
    %1972 = vmatprep.subr.mxu0 0.0
    %1973 = vmatpush1.msra.mxu0 0.0
    %1974 = vmatprep.subr.mxu0 0.0
    %1975 = vmatpush1.msra.mxu0 0.0
    %1976 = vmatprep.subr.mxu0 0.0
    %1977 = vmatpush1.msra.mxu0 0.0
    %1978 = vmatprep.subr.mxu0 0.0
    %1979 = vmatpush1.msra.mxu0 0.0
    %1980 = vmatprep.subr.mxu0 0.0
    %1981 = vmatpush1.msra.mxu0 0.0
    %1982 = vmatprep.mubr.f32.mxu0 0.0
    %1983 = vmatmul.mubr.f32.gmra.mrb[0].mxu0 %v1916
    %v1984 = vpop.f32.mrb[0].mxu0
    %v1985 = vadd.f32 %v1911, %v1984
    %v1986 = vpop.f32.mrb[0].mxu0
    %v1987 = vadd.f32 %v1913, %v1986
    %1988 = vdwg.mxu0
    %v1989 = vadd.f32 %v1985, %v114
    %v1990 = vadd.f32 %v1987, %v118
    %v1992 = vsel %vm122, %v1837, 0
    %1994 = vmatprep.subr.mxu0 %v62
    %1995 = vmatpush1.msra.mxu0 %v61
    %1996 = vmatprep.subr.mxu0 %v64
    %1997 = vmatpush1.msra.mxu0 %v63
    %1998 = vmatprep.subr.mxu0 %v66
    %1999 = vmatpush1.msra.mxu0 %v65
    %2000 = vmatprep.subr.mxu0 %v68
    %2001 = vmatpush1.msra.mxu0 %v67
    %2002 = vmatprep.subr.mxu0 %v70
    %2003 = vmatpush1.msra.mxu0 %v69
    %2004 = vmatprep.subr.mxu0 %v72
    %2005 = vmatpush1.msra.mxu0 %v71
    %2006 = vmatprep.subr.mxu0 %v74
    %2007 = vmatpush1.msra.mxu0 %v73
    %2008 = vmatprep.subr.mxu0 %v76
    %2009 = vmatpush1.msra.mxu0 %v75
    %2010 = vmatprep.subr.mxu0 0.0
    %2011 = vmatpush1.msra.mxu0 0.0
    %2012 = vmatprep.subr.mxu0 0.0
    %2013 = vmatpush1.msra.mxu0 0.0
    %2014 = vmatprep.subr.mxu0 0.0
    %2015 = vmatpush1.msra.mxu0 0.0
    %2016 = vmatprep.subr.mxu0 0.0
    %2017 = vmatpush1.msra.mxu0 0.0
    %2018 = vmatprep.subr.mxu0 0.0
    %2019 = vmatpush1.msra.mxu0 0.0
    %2020 = vmatprep.subr.mxu0 0.0
    %2021 = vmatpush1.msra.mxu0 0.0
    %2022 = vmatprep.subr.mxu0 0.0
    %2023 = vmatpush1.msra.mxu0 0.0
    %2024 = vmatprep.subr.mxu0 0.0
    %2025 = vmatpush1.msra.mxu0 0.0
    %2026 = vmatprep.subr.mxu0 0.0
    %2027 = vmatpush1.msra.mxu0 0.0
    %2028 = vmatprep.subr.mxu0 0.0
    %2029 = vmatpush1.msra.mxu0 0.0
    %2030 = vmatprep.subr.mxu0 0.0
    %2031 = vmatpush1.msra.mxu0 0.0
    %2032 = vmatprep.subr.mxu0 0.0
    %2033 = vmatpush1.msra.mxu0 0.0
    %2034 = vmatprep.subr.mxu0 0.0
    %2035 = vmatpush1.msra.mxu0 0.0
    %2036 = vmatprep.subr.mxu0 0.0
    %2037 = vmatpush1.msra.mxu0 0.0
    %2038 = vmatprep.subr.mxu0 0.0
    %2039 = vmatpush1.msra.mxu0 0.0
    %2040 = vmatprep.subr.mxu0 0.0
    %2041 = vmatpush1.msra.mxu0 0.0
    %2042 = vmatprep.subr.mxu0 0.0
    %2043 = vmatpush1.msra.mxu0 0.0
    %2044 = vmatprep.subr.mxu0 0.0
    %2045 = vmatpush1.msra.mxu0 0.0
    %2046 = vmatprep.subr.mxu0 0.0
    %2047 = vmatpush1.msra.mxu0 0.0
    %2048 = vmatprep.subr.mxu0 0.0
    %2049 = vmatpush1.msra.mxu0 0.0
    %2050 = vmatprep.subr.mxu0 0.0
    %2051 = vmatpush1.msra.mxu0 0.0
    %2052 = vmatprep.subr.mxu0 0.0
    %2053 = vmatpush1.msra.mxu0 0.0
    %2054 = vmatprep.subr.mxu0 0.0
    %2055 = vmatpush1.msra.mxu0 0.0
    %2056 = vmatprep.subr.mxu0 0.0
    %2057 = vmatpush1.msra.mxu0 0.0
    %2058 = vmatprep.mubr.f32.mxu0 0.0
    %2059 = vmatmul.mubr.f32.gmra.mrb[0].mxu0 %v1992
    %v2060 = vpop.f32.mrb[0].mxu0
    %v2061 = vadd.f32 0.0, %v2060
    %v2062 = vpop.f32.mrb[0].mxu0
    %v2063 = vadd.f32 0.0, %v2062
    %2064 = vdwg.mxu0
    %v2065 = vadd.f32 %v1989, %v2061
    %v2066 = vadd.f32 %v1990, %v2063
    %v2067 = vxor.u32 %v2065, 2147483648
    %v2068 = vxor.u32 %v2066, 2147483648
    %v2069 = vmul.f32 %v2067, 1.442695
    %v2070 = vpow.pop %v2069
    %v2071 = vmul.f32 %v2068, 1.442695
    %v2072 = vpow.pop %v2071
    %v2073 = vadd.f32 %v2070, 1.0
    %v2074 = vadd.f32 %v2072, 1.0
    %v2075 = vrcp.pop %v2073
    %v2076 = vmul.f32 1.0, %v2075
    %v2077 = vrcp.pop %v2074
    %v2078 = vmul.f32 1.0, %v2077
    %v2079 = vtanh.pop %v2066
    %v2080 = vmul.f32 %v2076, %v1831
    %2082 = vrot.lane.b32.xlu0 %v2079, 64
    %v2083 = vpop.permute.xlu0 %2082
    %v2085 = vmul.f32 %v2076, %v2083
    %2087 = vrot.lane.b32.xlu0 %v2085, 64
    %v2088 = vpop.permute.xlu0 %2087
    %v2090 = vadd.f32 %v2080, %v2088
    %v2091 = vtanh.pop %v2090
    %2093 = vrot.lane.b32.xlu0 %v2091, 64
    %v2094 = vpop.permute.xlu0 %2093
    %v2096 = vmul.f32 %v2078, %v2094
    %v2097 = vadd.f32 %v1838, %v2096
    %2098 = vmatprep.subr.mxu0 %v94
    %2099 = vmatpush1.msra.mxu0 %v93
    %2100 = vmatprep.subr.mxu0 %v96
    %2101 = vmatpush1.msra.mxu0 %v95
    %2102 = vmatprep.subr.mxu0 %v98
    %2103 = vmatpush1.msra.mxu0 %v97
    %2104 = vmatprep.subr.mxu0 %v100
    %2105 = vmatpush1.msra.mxu0 %v99
    %2106 = vmatprep.subr.mxu0 %v102
    %2107 = vmatpush1.msra.mxu0 %v101
    %2108 = vmatprep.subr.mxu0 %v104
    %2109 = vmatpush1.msra.mxu0 %v103
    %2110 = vmatprep.subr.mxu0 %v106
    %2111 = vmatpush1.msra.mxu0 %v105
    %2112 = vmatprep.subr.mxu0 %v108
    %2113 = vmatpush1.msra.mxu0 %v107
    %2114 = vmatprep.subr.mxu0 0.0
    %2115 = vmatpush1.msra.mxu0 0.0
    %2116 = vmatprep.subr.mxu0 0.0
    %2117 = vmatpush1.msra.mxu0 0.0
    %2118 = vmatprep.subr.mxu0 0.0
    %2119 = vmatpush1.msra.mxu0 0.0
    %2120 = vmatprep.subr.mxu0 0.0
    %2121 = vmatpush1.msra.mxu0 0.0
    %2122 = vmatprep.subr.mxu0 0.0
    %2123 = vmatpush1.msra.mxu0 0.0
    %2124 = vmatprep.subr.mxu0 0.0
    %2125 = vmatpush1.msra.mxu0 0.0
    %2126 = vmatprep.subr.mxu0 0.0
    %2127 = vmatpush1.msra.mxu0 0.0
    %2128 = vmatprep.subr.mxu0 0.0
    %2129 = vmatpush1.msra.mxu0 0.0
    %2130 = vmatprep.subr.mxu0 0.0
    %2131 = vmatpush1.msra.mxu0 0.0
    %2132 = vmatprep.subr.mxu0 0.0
    %2133 = vmatpush1.msra.mxu0 0.0
    %2134 = vmatprep.subr.mxu0 0.0
    %2135 = vmatpush1.msra.mxu0 0.0
    %2136 = vmatprep.subr.mxu0 0.0
    %2137 = vmatpush1.msra.mxu0 0.0
    %2138 = vmatprep.subr.mxu0 0.0
    %2139 = vmatpush1.msra.mxu0 0.0
    %2140 = vmatprep.subr.mxu0 0.0
    %2141 = vmatpush1.msra.mxu0 0.0
    %2142 = vmatprep.subr.mxu0 0.0
    %2143 = vmatpush1.msra.mxu0 0.0
    %2144 = vmatprep.subr.mxu0 0.0
    %2145 = vmatpush1.msra.mxu0 0.0
    %2146 = vmatprep.subr.mxu0 0.0
    %2147 = vmatpush1.msra.mxu0 0.0
    %2148 = vmatprep.subr.mxu0 0.0
    %2149 = vmatpush1.msra.mxu0 0.0
    %2150 = vmatprep.subr.mxu0 0.0
    %2151 = vmatpush1.msra.mxu0 0.0
    %2152 = vmatprep.subr.mxu0 0.0
    %2153 = vmatpush1.msra.mxu0 0.0
    %2154 = vmatprep.subr.mxu0 0.0
    %2155 = vmatpush1.msra.mxu0 0.0
    %2156 = vmatprep.subr.mxu0 0.0
    %2157 = vmatpush1.msra.mxu0 0.0
    %2158 = vmatprep.subr.mxu0 0.0
    %2159 = vmatpush1.msra.mxu0 0.0
    %2160 = vmatprep.subr.mxu0 0.0
    %2161 = vmatpush1.msra.mxu0 0.0
    %2162 = vmatprep.mubr.f32.mxu0 0.0
    %2163 = vmatmul.mubr.f32.gmra.mrb[0].mxu0 %v1916
    %v2164 = vpop.f32.mrb[0].mxu0
    %v2165 = vadd.f32 0.0, %v2164
    %v2166 = vpop.f32.mrb[0].mxu0
    %v2167 = vadd.f32 0.0, %v2166
    %2168 = vdwg.mxu0
    %2169 = vmatprep.subr.mxu0 %v78
    %2170 = vmatpush1.msra.mxu0 %v77
    %2171 = vmatprep.subr.mxu0 %v80
    %2172 = vmatpush1.msra.mxu0 %v79
    %2173 = vmatprep.subr.mxu0 %v82
    %2174 = vmatpush1.msra.mxu0 %v81
    %2175 = vmatprep.subr.mxu0 %v84
    %2176 = vmatpush1.msra.mxu0 %v83
    %2177 = vmatprep.subr.mxu0 %v86
    %2178 = vmatpush1.msra.mxu0 %v85
    %2179 = vmatprep.subr.mxu0 %v88
    %2180 = vmatpush1.msra.mxu0 %v87
    %2181 = vmatprep.subr.mxu0 %v90
    %2182 = vmatpush1.msra.mxu0 %v89
    %2183 = vmatprep.subr.mxu0 %v92
    %2184 = vmatpush1.msra.mxu0 %v91
    %2185 = vmatprep.subr.mxu0 0.0
    %2186 = vmatpush1.msra.mxu0 0.0
    %2187 = vmatprep.subr.mxu0 0.0
    %2188 = vmatpush1.msra.mxu0 0.0
    %2189 = vmatprep.subr.mxu0 0.0
    %2190 = vmatpush1.msra.mxu0 0.0
    %2191 = vmatprep.subr.mxu0 0.0
    %2192 = vmatpush1.msra.mxu0 0.0
    %2193 = vmatprep.subr.mxu0 0.0
    %2194 = vmatpush1.msra.mxu0 0.0
    %2195 = vmatprep.subr.mxu0 0.0
    %2196 = vmatpush1.msra.mxu0 0.0
    %2197 = vmatprep.subr.mxu0 0.0
    %2198 = vmatpush1.msra.mxu0 0.0
    %2199 = vmatprep.subr.mxu0 0.0
    %2200 = vmatpush1.msra.mxu0 0.0
    %2201 = vmatprep.subr.mxu0 0.0
    %2202 = vmatpush1.msra.mxu0 0.0
    %2203 = vmatprep.subr.mxu0 0.0
    %2204 = vmatpush1.msra.mxu0 0.0
    %2205 = vmatprep.subr.mxu0 0.0
    %2206 = vmatpush1.msra.mxu0 0.0
    %2207 = vmatprep.subr.mxu0 0.0
    %2208 = vmatpush1.msra.mxu0 0.0
    %2209 = vmatprep.subr.mxu0 0.0
    %2210 = vmatpush1.msra.mxu0 0.0
    %2211 = vmatprep.subr.mxu0 0.0
    %2212 = vmatpush1.msra.mxu0 0.0
    %2213 = vmatprep.subr.mxu0 0.0
    %2214 = vmatpush1.msra.mxu0 0.0
    %2215 = vmatprep.subr.mxu0 0.0
    %2216 = vmatpush1.msra.mxu0 0.0
    %2217 = vmatprep.subr.mxu0 0.0
    %2218 = vmatpush1.msra.mxu0 0.0
    %2219 = vmatprep.subr.mxu0 0.0
    %2220 = vmatpush1.msra.mxu0 0.0
    %2221 = vmatprep.subr.mxu0 0.0
    %2222 = vmatpush1.msra.mxu0 0.0
    %2223 = vmatprep.subr.mxu0 0.0
    %2224 = vmatpush1.msra.mxu0 0.0
    %2225 = vmatprep.subr.mxu0 0.0
    %2226 = vmatpush1.msra.mxu0 0.0
    %2227 = vmatprep.subr.mxu0 0.0
    %2228 = vmatpush1.msra.mxu0 0.0
    %2229 = vmatprep.subr.mxu0 0.0
    %2230 = vmatpush1.msra.mxu0 0.0
    %2231 = vmatprep.subr.mxu0 0.0
    %2232 = vmatpush1.msra.mxu0 0.0
    %2233 = vmatprep.mubr.f32.mxu0 0.0
    %2234 = vmatmul.mubr.f32.gmra.mrb[0].mxu0 %v1842
    %v2235 = vpop.f32.mrb[0].mxu0
    %v2236 = vadd.f32 %v2165, %v2235
    %v2237 = vpop.f32.mrb[0].mxu0
    %v2238 = vadd.f32 %v2167, %v2237
    %2239 = vdwg.mxu0
    %v2240 = vadd.f32 %v2236, %v114
    %v2241 = vadd.f32 %v2238, %v118
    %v2243 = vsel %vm122, %v2096, 0
    %2245 = vmatprep.subr.mxu0 %v62
    %2246 = vmatpush1.msra.mxu0 %v61
    %2247 = vmatprep.subr.mxu0 %v64
    %2248 = vmatpush1.msra.mxu0 %v63
    %2249 = vmatprep.subr.mxu0 %v66
    %2250 = vmatpush1.msra.mxu0 %v65
    %2251 = vmatprep.subr.mxu0 %v68
    %2252 = vmatpush1.msra.mxu0 %v67
    %2253 = vmatprep.subr.mxu0 %v70
    %2254 = vmatpush1.msra.mxu0 %v69
    %2255 = vmatprep.subr.mxu0 %v72
    %2256 = vmatpush1.msra.mxu0 %v71
    %2257 = vmatprep.subr.mxu0 %v74
    %2258 = vmatpush1.msra.mxu0 %v73
    %2259 = vmatprep.subr.mxu0 %v76
    %2260 = vmatpush1.msra.mxu0 %v75
    %2261 = vmatprep.subr.mxu0 0.0
    %2262 = vmatpush1.msra.mxu0 0.0
    %2263 = vmatprep.subr.mxu0 0.0
    %2264 = vmatpush1.msra.mxu0 0.0
    %2265 = vmatprep.subr.mxu0 0.0
    %2266 = vmatpush1.msra.mxu0 0.0
    %2267 = vmatprep.subr.mxu0 0.0
    %2268 = vmatpush1.msra.mxu0 0.0
    %2269 = vmatprep.subr.mxu0 0.0
    %2270 = vmatpush1.msra.mxu0 0.0
    %2271 = vmatprep.subr.mxu0 0.0
    %2272 = vmatpush1.msra.mxu0 0.0
    %2273 = vmatprep.subr.mxu0 0.0
    %2274 = vmatpush1.msra.mxu0 0.0
    %2275 = vmatprep.subr.mxu0 0.0
    %2276 = vmatpush1.msra.mxu0 0.0
    %2277 = vmatprep.subr.mxu0 0.0
    %2278 = vmatpush1.msra.mxu0 0.0
    %2279 = vmatprep.subr.mxu0 0.0
    %2280 = vmatpush1.msra.mxu0 0.0
    %2281 = vmatprep.subr.mxu0 0.0
    %2282 = vmatpush1.msra.mxu0 0.0
    %2283 = vmatprep.subr.mxu0 0.0
    %2284 = vmatpush1.msra.mxu0 0.0
    %2285 = vmatprep.subr.mxu0 0.0
    %2286 = vmatpush1.msra.mxu0 0.0
    %2287 = vmatprep.subr.mxu0 0.0
    %2288 = vmatpush1.msra.mxu0 0.0
    %2289 = vmatprep.subr.mxu0 0.0
    %2290 = vmatpush1.msra.mxu0 0.0
    %2291 = vmatprep.subr.mxu0 0.0
    %2292 = vmatpush1.msra.mxu0 0.0
    %2293 = vmatprep.subr.mxu0 0.0
    %2294 = vmatpush1.msra.mxu0 0.0
    %2295 = vmatprep.subr.mxu0 0.0
    %2296 = vmatpush1.msra.mxu0 0.0
    %2297 = vmatprep.subr.mxu0 0.0
    %2298 = vmatpush1.msra.mxu0 0.0
    %2299 = vmatprep.subr.mxu0 0.0
    %2300 = vmatpush1.msra.mxu0 0.0
    %2301 = vmatprep.subr.mxu0 0.0
    %2302 = vmatpush1.msra.mxu0 0.0
    %2303 = vmatprep.subr.mxu0 0.0
    %2304 = vmatpush1.msra.mxu0 0.0
    %2305 = vmatprep.subr.mxu0 0.0
    %2306 = vmatpush1.msra.mxu0 0.0
    %2307 = vmatprep.subr.mxu0 0.0
    %2308 = vmatpush1.msra.mxu0 0.0
    %2309 = vmatprep.mubr.f32.mxu0 0.0
    %2310 = vmatmul.mubr.f32.gmra.mrb[0].mxu0 %v2243
    %v2311 = vpop.f32.mrb[0].mxu0
    %v2312 = vadd.f32 0.0, %v2311
    %v2313 = vpop.f32.mrb[0].mxu0
    %v2314 = vadd.f32 0.0, %v2313
    %2315 = vdwg.mxu0
    %v2316 = vadd.f32 %v2240, %v2312
    %v2317 = vadd.f32 %v2241, %v2314
    %v2318 = vxor.u32 %v2316, 2147483648
    %v2319 = vxor.u32 %v2317, 2147483648
    %v2320 = vmul.f32 %v2318, 1.442695
    %v2321 = vpow.pop %v2320
    %v2322 = vmul.f32 %v2319, 1.442695
    %v2323 = vpow.pop %v2322
    %v2324 = vadd.f32 %v2321, 1.0
    %v2325 = vadd.f32 %v2323, 1.0
    %v2326 = vrcp.pop %v2324
    %v2327 = vmul.f32 1.0, %v2326
    %v2328 = vrcp.pop %v2325
    %v2329 = vmul.f32 1.0, %v2328
    %v2330 = vtanh.pop %v2317
    %v2331 = vmul.f32 %v2327, %v2090
    %2333 = vrot.lane.b32.xlu0 %v2330, 64
    %v2334 = vpop.permute.xlu0 %2333
    %v2336 = vmul.f32 %v2327, %v2334
    %2338 = vrot.lane.b32.xlu0 %v2336, 64
    %v2339 = vpop.permute.xlu0 %2338
    %v2341 = vadd.f32 %v2331, %v2339
    %v2342 = vtanh.pop %v2341
    %2344 = vrot.lane.b32.xlu0 %v2342, 64
    %v2345 = vpop.permute.xlu0 %2344
    %v2347 = vmul.f32 %v2329, %v2345
    %v2348 = vadd.f32 %v2097, %v2347
    %2349 = vmatprep.subr.mxu0 %v94
    %2350 = vmatpush1.msra.mxu0 %v93
    %2351 = vmatprep.subr.mxu0 %v96
    %2352 = vmatpush1.msra.mxu0 %v95
    %2353 = vmatprep.subr.mxu0 %v98
    %2354 = vmatpush1.msra.mxu0 %v97
    %2355 = vmatprep.subr.mxu0 %v100
    %2356 = vmatpush1.msra.mxu0 %v99
    %2357 = vmatprep.subr.mxu0 %v102
    %2358 = vmatpush1.msra.mxu0 %v101
    %2359 = vmatprep.subr.mxu0 %v104
    %2360 = vmatpush1.msra.mxu0 %v103
    %2361 = vmatprep.subr.mxu0 %v106
    %2362 = vmatpush1.msra.mxu0 %v105
    %2363 = vmatprep.subr.mxu0 %v108
    %2364 = vmatpush1.msra.mxu0 %v107
    %2365 = vmatprep.subr.mxu0 0.0
    %2366 = vmatpush1.msra.mxu0 0.0
    %2367 = vmatprep.subr.mxu0 0.0
    %2368 = vmatpush1.msra.mxu0 0.0
    %2369 = vmatprep.subr.mxu0 0.0
    %2370 = vmatpush1.msra.mxu0 0.0
    %2371 = vmatprep.subr.mxu0 0.0
    %2372 = vmatpush1.msra.mxu0 0.0
    %2373 = vmatprep.subr.mxu0 0.0
    %2374 = vmatpush1.msra.mxu0 0.0
    %2375 = vmatprep.subr.mxu0 0.0
    %2376 = vmatpush1.msra.mxu0 0.0
    %2377 = vmatprep.subr.mxu0 0.0
    %2378 = vmatpush1.msra.mxu0 0.0
    %2379 = vmatprep.subr.mxu0 0.0
    %2380 = vmatpush1.msra.mxu0 0.0
    %2381 = vmatprep.subr.mxu0 0.0
    %2382 = vmatpush1.msra.mxu0 0.0
    %2383 = vmatprep.subr.mxu0 0.0
    %2384 = vmatpush1.msra.mxu0 0.0
    %2385 = vmatprep.subr.mxu0 0.0
    %2386 = vmatpush1.msra.mxu0 0.0
    %2387 = vmatprep.subr.mxu0 0.0
    %2388 = vmatpush1.msra.mxu0 0.0
    %2389 = vmatprep.subr.mxu0 0.0
    %2390 = vmatpush1.msra.mxu0 0.0
    %2391 = vmatprep.subr.mxu0 0.0
    %2392 = vmatpush1.msra.mxu0 0.0
    %2393 = vmatprep.subr.mxu0 0.0
    %2394 = vmatpush1.msra.mxu0 0.0
    %2395 = vmatprep.subr.mxu0 0.0
    %2396 = vmatpush1.msra.mxu0 0.0
    %2397 = vmatprep.subr.mxu0 0.0
    %2398 = vmatpush1.msra.mxu0 0.0
    %2399 = vmatprep.subr.mxu0 0.0
    %2400 = vmatpush1.msra.mxu0 0.0
    %2401 = vmatprep.subr.mxu0 0.0
    %2402 = vmatpush1.msra.mxu0 0.0
    %2403 = vmatprep.subr.mxu0 0.0
    %2404 = vmatpush1.msra.mxu0 0.0
    %2405 = vmatprep.subr.mxu0 0.0
    %2406 = vmatpush1.msra.mxu0 0.0
    %2407 = vmatprep.subr.mxu0 0.0
    %2408 = vmatpush1.msra.mxu0 0.0
    %2409 = vmatprep.subr.mxu0 0.0
    %2410 = vmatpush1.msra.mxu0 0.0
    %2411 = vmatprep.subr.mxu0 0.0
    %2412 = vmatpush1.msra.mxu0 0.0
    %2413 = vmatprep.mubr.f32.mxu0 0.0
    %2414 = vmatmul.mubr.f32.gmra.mrb[0].mxu0 %v1657
    %v2415 = vpop.f32.mrb[0].mxu0
    %v2416 = vadd.f32 0.0, %v2415
    %v2417 = vpop.f32.mrb[0].mxu0
    %v2418 = vadd.f32 0.0, %v2417
    %2419 = vdwg.mxu0
    %2420 = vmatprep.subr.mxu0 %v78
    %2421 = vmatpush1.msra.mxu0 %v77
    %2422 = vmatprep.subr.mxu0 %v80
    %2423 = vmatpush1.msra.mxu0 %v79
    %2424 = vmatprep.subr.mxu0 %v82
    %2425 = vmatpush1.msra.mxu0 %v81
    %2426 = vmatprep.subr.mxu0 %v84
    %2427 = vmatpush1.msra.mxu0 %v83
    %2428 = vmatprep.subr.mxu0 %v86
    %2429 = vmatpush1.msra.mxu0 %v85
    %2430 = vmatprep.subr.mxu0 %v88
    %2431 = vmatpush1.msra.mxu0 %v87
    %2432 = vmatprep.subr.mxu0 %v90
    %2433 = vmatpush1.msra.mxu0 %v89
    %2434 = vmatprep.subr.mxu0 %v92
    %2435 = vmatpush1.msra.mxu0 %v91
    %2436 = vmatprep.subr.mxu0 0.0
    %2437 = vmatpush1.msra.mxu0 0.0
    %2438 = vmatprep.subr.mxu0 0.0
    %2439 = vmatpush1.msra.mxu0 0.0
    %2440 = vmatprep.subr.mxu0 0.0
    %2441 = vmatpush1.msra.mxu0 0.0
    %2442 = vmatprep.subr.mxu0 0.0
    %2443 = vmatpush1.msra.mxu0 0.0
    %2444 = vmatprep.subr.mxu0 0.0
    %2445 = vmatpush1.msra.mxu0 0.0
    %2446 = vmatprep.subr.mxu0 0.0
    %2447 = vmatpush1.msra.mxu0 0.0
    %2448 = vmatprep.subr.mxu0 0.0
    %2449 = vmatpush1.msra.mxu0 0.0
    %2450 = vmatprep.subr.mxu0 0.0
    %2451 = vmatpush1.msra.mxu0 0.0
    %2452 = vmatprep.subr.mxu0 0.0
    %2453 = vmatpush1.msra.mxu0 0.0
    %2454 = vmatprep.subr.mxu0 0.0
    %2455 = vmatpush1.msra.mxu0 0.0
    %2456 = vmatprep.subr.mxu0 0.0
    %2457 = vmatpush1.msra.mxu0 0.0
    %2458 = vmatprep.subr.mxu0 0.0
    %2459 = vmatpush1.msra.mxu0 0.0
    %2460 = vmatprep.subr.mxu0 0.0
    %2461 = vmatpush1.msra.mxu0 0.0
    %2462 = vmatprep.subr.mxu0 0.0
    %2463 = vmatpush1.msra.mxu0 0.0
    %2464 = vmatprep.subr.mxu0 0.0
    %2465 = vmatpush1.msra.mxu0 0.0
    %2466 = vmatprep.subr.mxu0 0.0
    %2467 = vmatpush1.msra.mxu0 0.0
    %2468 = vmatprep.subr.mxu0 0.0
    %2469 = vmatpush1.msra.mxu0 0.0
    %2470 = vmatprep.subr.mxu0 0.0
    %2471 = vmatpush1.msra.mxu0 0.0
    %2472 = vmatprep.subr.mxu0 0.0
    %2473 = vmatpush1.msra.mxu0 0.0
    %2474 = vmatprep.subr.mxu0 0.0
    %2475 = vmatpush1.msra.mxu0 0.0
    %2476 = vmatprep.subr.mxu0 0.0
    %2477 = vmatpush1.msra.mxu0 0.0
    %2478 = vmatprep.subr.mxu0 0.0
    %2479 = vmatpush1.msra.mxu0 0.0
    %2480 = vmatprep.subr.mxu0 0.0
    %2481 = vmatpush1.msra.mxu0 0.0
    %2482 = vmatprep.subr.mxu0 0.0
    %2483 = vmatpush1.msra.mxu0 0.0
    %2484 = vmatprep.mubr.f32.mxu0 0.0
    %2485 = vmatmul.mubr.f32.gmra.mrb[0].mxu0 %v1583
    %v2486 = vpop.f32.mrb[0].mxu0
    %v2487 = vadd.f32 %v2416, %v2486
    %v2488 = vpop.f32.mrb[0].mxu0
    %v2489 = vadd.f32 %v2418, %v2488
    %2490 = vdwg.mxu0
    %v2491 = vadd.f32 %v2487, %v114
    %v2492 = vadd.f32 %v2489, %v118
    %v2494 = vsel %vm122, %v2347, 0
    %2496 = vmatprep.subr.mxu0 %v62
    %2497 = vmatpush1.msra.mxu0 %v61
    %2498 = vmatprep.subr.mxu0 %v64
    %2499 = vmatpush1.msra.mxu0 %v63
    %2500 = vmatprep.subr.mxu0 %v66
    %2501 = vmatpush1.msra.mxu0 %v65
    %2502 = vmatprep.subr.mxu0 %v68
    %2503 = vmatpush1.msra.mxu0 %v67
    %2504 = vmatprep.subr.mxu0 %v70
    %2505 = vmatpush1.msra.mxu0 %v69
    %2506 = vmatprep.subr.mxu0 %v72
    %2507 = vmatpush1.msra.mxu0 %v71
    %2508 = vmatprep.subr.mxu0 %v74
    %2509 = vmatpush1.msra.mxu0 %v73
    %2510 = vmatprep.subr.mxu0 %v76
    %2511 = vmatpush1.msra.mxu0 %v75
    %2512 = vmatprep.subr.mxu0 0.0
    %2513 = vmatpush1.msra.mxu0 0.0
    %2514 = vmatprep.subr.mxu0 0.0
    %2515 = vmatpush1.msra.mxu0 0.0
    %2516 = vmatprep.subr.mxu0 0.0
    %2517 = vmatpush1.msra.mxu0 0.0
    %2518 = vmatprep.subr.mxu0 0.0
    %2519 = vmatpush1.msra.mxu0 0.0
    %2520 = vmatprep.subr.mxu0 0.0
    %2521 = vmatpush1.msra.mxu0 0.0
    %2522 = vmatprep.subr.mxu0 0.0
    %2523 = vmatpush1.msra.mxu0 0.0
    %2524 = vmatprep.subr.mxu0 0.0
    %2525 = vmatpush1.msra.mxu0 0.0
    %2526 = vmatprep.subr.mxu0 0.0
    %2527 = vmatpush1.msra.mxu0 0.0
    %2528 = vmatprep.subr.mxu0 0.0
    %2529 = vmatpush1.msra.mxu0 0.0
    %2530 = vmatprep.subr.mxu0 0.0
    %2531 = vmatpush1.msra.mxu0 0.0
    %2532 = vmatprep.subr.mxu0 0.0
    %2533 = vmatpush1.msra.mxu0 0.0
    %2534 = vmatprep.subr.mxu0 0.0
    %2535 = vmatpush1.msra.mxu0 0.0
    %2536 = vmatprep.subr.mxu0 0.0
    %2537 = vmatpush1.msra.mxu0 0.0
    %2538 = vmatprep.subr.mxu0 0.0
    %2539 = vmatpush1.msra.mxu0 0.0
    %2540 = vmatprep.subr.mxu0 0.0
    %2541 = vmatpush1.msra.mxu0 0.0
    %2542 = vmatprep.subr.mxu0 0.0
    %2543 = vmatpush1.msra.mxu0 0.0
    %2544 = vmatprep.subr.mxu0 0.0
    %2545 = vmatpush1.msra.mxu0 0.0
    %2546 = vmatprep.subr.mxu0 0.0
    %2547 = vmatpush1.msra.mxu0 0.0
    %2548 = vmatprep.subr.mxu0 0.0
    %2549 = vmatpush1.msra.mxu0 0.0
    %2550 = vmatprep.subr.mxu0 0.0
    %2551 = vmatpush1.msra.mxu0 0.0
    %2552 = vmatprep.subr.mxu0 0.0
    %2553 = vmatpush1.msra.mxu0 0.0
    %2554 = vmatprep.subr.mxu0 0.0
    %2555 = vmatpush1.msra.mxu0 0.0
    %2556 = vmatprep.subr.mxu0 0.0
    %2557 = vmatpush1.msra.mxu0 0.0
    %2558 = vmatprep.subr.mxu0 0.0
    %2559 = vmatpush1.msra.mxu0 0.0
    %2560 = vmatprep.mubr.f32.mxu0 0.0
    %2561 = vmatmul.mubr.f32.gmra.mrb[0].mxu0 %v2494
    %v2562 = vpop.f32.mrb[0].mxu0
    %v2563 = vadd.f32 0.0, %v2562
    %v2564 = vpop.f32.mrb[0].mxu0
    %v2565 = vadd.f32 0.0, %v2564
    %2566 = vdwg.mxu0
    %v2567 = vadd.f32 %v2491, %v2563
    %v2568 = vadd.f32 %v2492, %v2565
    %v2569 = vxor.u32 %v2567, 2147483648
    %v2570 = vxor.u32 %v2568, 2147483648
    %v2571 = vmul.f32 %v2569, 1.442695
    %v2572 = vpow.pop %v2571
    %v2573 = vmul.f32 %v2570, 1.442695
    %v2574 = vpow.pop %v2573
    %v2575 = vadd.f32 %v2572, 1.0
    %v2576 = vadd.f32 %v2574, 1.0
    %v2577 = vrcp.pop %v2575
    %v2578 = vmul.f32 1.0, %v2577
    %v2579 = vrcp.pop %v2576
    %v2580 = vmul.f32 1.0, %v2579
    %v2581 = vtanh.pop %v2568
    %v2582 = vmul.f32 %v2578, %v2341
    %2584 = vrot.lane.b32.xlu0 %v2581, 64
    %v2585 = vpop.permute.xlu0 %2584
    %v2587 = vmul.f32 %v2578, %v2585
    %2589 = vrot.lane.b32.xlu0 %v2587, 64
    %v2590 = vpop.permute.xlu0 %2589
    %v2592 = vadd.f32 %v2582, %v2590
    %v2593 = vtanh.pop %v2592
    %2595 = vrot.lane.b32.xlu0 %v2593, 64
    %v2596 = vpop.permute.xlu0 %2595
    %v2598 = vmul.f32 %v2580, %v2596
    %v2599 = vadd.f32 %v2348, %v2598
    %2600 = vmatprep.subr.mxu0 %v94
    %2601 = vmatpush1.msra.mxu0 %v93
    %2602 = vmatprep.subr.mxu0 %v96
    %2603 = vmatpush1.msra.mxu0 %v95
    %2604 = vmatprep.subr.mxu0 %v98
    %2605 = vmatpush1.msra.mxu0 %v97
    %2606 = vmatprep.subr.mxu0 %v100
    %2607 = vmatpush1.msra.mxu0 %v99
    %2608 = vmatprep.subr.mxu0 %v102
    %2609 = vmatpush1.msra.mxu0 %v101
    %2610 = vmatprep.subr.mxu0 %v104
    %2611 = vmatpush1.msra.mxu0 %v103
    %2612 = vmatprep.subr.mxu0 %v106
    %2613 = vmatpush1.msra.mxu0 %v105
    %2614 = vmatprep.subr.mxu0 %v108
    %2615 = vmatpush1.msra.mxu0 %v107
    %2616 = vmatprep.subr.mxu0 0.0
    %2617 = vmatpush1.msra.mxu0 0.0
    %2618 = vmatprep.subr.mxu0 0.0
    %2619 = vmatpush1.msra.mxu0 0.0
    %2620 = vmatprep.subr.mxu0 0.0
    %2621 = vmatpush1.msra.mxu0 0.0
    %2622 = vmatprep.subr.mxu0 0.0
    %2623 = vmatpush1.msra.mxu0 0.0
    %2624 = vmatprep.subr.mxu0 0.0
    %2625 = vmatpush1.msra.mxu0 0.0
    %2626 = vmatprep.subr.mxu0 0.0
    %2627 = vmatpush1.msra.mxu0 0.0
    %2628 = vmatprep.subr.mxu0 0.0
    %2629 = vmatpush1.msra.mxu0 0.0
    %2630 = vmatprep.subr.mxu0 0.0
    %2631 = vmatpush1.msra.mxu0 0.0
    %2632 = vmatprep.subr.mxu0 0.0
    %2633 = vmatpush1.msra.mxu0 0.0
    %2634 = vmatprep.subr.mxu0 0.0
    %2635 = vmatpush1.msra.mxu0 0.0
    %2636 = vmatprep.subr.mxu0 0.0
    %2637 = vmatpush1.msra.mxu0 0.0
    %2638 = vmatprep.subr.mxu0 0.0
    %2639 = vmatpush1.msra.mxu0 0.0
    %2640 = vmatprep.subr.mxu0 0.0
    %2641 = vmatpush1.msra.mxu0 0.0
    %2642 = vmatprep.subr.mxu0 0.0
    %2643 = vmatpush1.msra.mxu0 0.0
    %2644 = vmatprep.subr.mxu0 0.0
    %2645 = vmatpush1.msra.mxu0 0.0
    %2646 = vmatprep.subr.mxu0 0.0
    %2647 = vmatpush1.msra.mxu0 0.0
    %2648 = vmatprep.subr.mxu0 0.0
    %2649 = vmatpush1.msra.mxu0 0.0
    %2650 = vmatprep.subr.mxu0 0.0
    %2651 = vmatpush1.msra.mxu0 0.0
    %2652 = vmatprep.subr.mxu0 0.0
    %2653 = vmatpush1.msra.mxu0 0.0
    %2654 = vmatprep.subr.mxu0 0.0
    %2655 = vmatpush1.msra.mxu0 0.0
    %2656 = vmatprep.subr.mxu0 0.0
    %2657 = vmatpush1.msra.mxu0 0.0
    %2658 = vmatprep.subr.mxu0 0.0
    %2659 = vmatpush1.msra.mxu0 0.0
    %2660 = vmatprep.subr.mxu0 0.0
    %2661 = vmatpush1.msra.mxu0 0.0
    %2662 = vmatprep.subr.mxu0 0.0
    %2663 = vmatpush1.msra.mxu0 0.0
    %2664 = vmatprep.mubr.f32.mxu0 0.0
    %2665 = vmatmul.mubr.f32.gmra.mrb[0].mxu0 %v1398
    %v2666 = vpop.f32.mrb[0].mxu0
    %v2667 = vadd.f32 0.0, %v2666
    %v2668 = vpop.f32.mrb[0].mxu0
    %v2669 = vadd.f32 0.0, %v2668
    %2670 = vdwg.mxu0
    %2671 = vmatprep.subr.mxu0 %v78
    %2672 = vmatpush1.msra.mxu0 %v77
    %2673 = vmatprep.subr.mxu0 %v80
    %2674 = vmatpush1.msra.mxu0 %v79
    %2675 = vmatprep.subr.mxu0 %v82
    %2676 = vmatpush1.msra.mxu0 %v81
    %2677 = vmatprep.subr.mxu0 %v84
    %2678 = vmatpush1.msra.mxu0 %v83
    %2679 = vmatprep.subr.mxu0 %v86
    %2680 = vmatpush1.msra.mxu0 %v85
    %2681 = vmatprep.subr.mxu0 %v88
    %2682 = vmatpush1.msra.mxu0 %v87
    %2683 = vmatprep.subr.mxu0 %v90
    %2684 = vmatpush1.msra.mxu0 %v89
    %2685 = vmatprep.subr.mxu0 %v92
    %2686 = vmatpush1.msra.mxu0 %v91
    %2687 = vmatprep.subr.mxu0 0.0
    %2688 = vmatpush1.msra.mxu0 0.0
    %2689 = vmatprep.subr.mxu0 0.0
    %2690 = vmatpush1.msra.mxu0 0.0
    %2691 = vmatprep.subr.mxu0 0.0
    %2692 = vmatpush1.msra.mxu0 0.0
    %2693 = vmatprep.subr.mxu0 0.0
    %2694 = vmatpush1.msra.mxu0 0.0
    %2695 = vmatprep.subr.mxu0 0.0
    %2696 = vmatpush1.msra.mxu0 0.0
    %2697 = vmatprep.subr.mxu0 0.0
    %2698 = vmatpush1.msra.mxu0 0.0
    %2699 = vmatprep.subr.mxu0 0.0
    %2700 = vmatpush1.msra.mxu0 0.0
    %2701 = vmatprep.subr.mxu0 0.0
    %2702 = vmatpush1.msra.mxu0 0.0
    %2703 = vmatprep.subr.mxu0 0.0
    %2704 = vmatpush1.msra.mxu0 0.0
    %2705 = vmatprep.subr.mxu0 0.0
    %2706 = vmatpush1.msra.mxu0 0.0
    %2707 = vmatprep.subr.mxu0 0.0
    %2708 = vmatpush1.msra.mxu0 0.0
    %2709 = vmatprep.subr.mxu0 0.0
    %2710 = vmatpush1.msra.mxu0 0.0
    %2711 = vmatprep.subr.mxu0 0.0
    %2712 = vmatpush1.msra.mxu0 0.0
    %2713 = vmatprep.subr.mxu0 0.0
    %2714 = vmatpush1.msra.mxu0 0.0
    %2715 = vmatprep.subr.mxu0 0.0
    %2716 = vmatpush1.msra.mxu0 0.0
    %2717 = vmatprep.subr.mxu0 0.0
    %2718 = vmatpush1.msra.mxu0 0.0
    %2719 = vmatprep.subr.mxu0 0.0
    %2720 = vmatpush1.msra.mxu0 0.0
    %2721 = vmatprep.subr.mxu0 0.0
    %2722 = vmatpush1.msra.mxu0 0.0
    %2723 = vmatprep.subr.mxu0 0.0
    %2724 = vmatpush1.msra.mxu0 0.0
    %2725 = vmatprep.subr.mxu0 0.0
    %2726 = vmatpush1.msra.mxu0 0.0
    %2727 = vmatprep.subr.mxu0 0.0
    %2728 = vmatpush1.msra.mxu0 0.0
    %2729 = vmatprep.subr.mxu0 0.0
    %2730 = vmatpush1.msra.mxu0 0.0
    %2731 = vmatprep.subr.mxu0 0.0
    %2732 = vmatpush1.msra.mxu0 0.0
    %2733 = vmatprep.subr.mxu0 0.0
    %2734 = vmatpush1.msra.mxu0 0.0
    %2735 = vmatprep.mubr.f32.mxu0 0.0
    %2736 = vmatmul.mubr.f32.gmra.mrb[0].mxu0 %v1324
    %v2737 = vpop.f32.mrb[0].mxu0
    %v2738 = vadd.f32 %v2667, %v2737
    %v2739 = vpop.f32.mrb[0].mxu0
    %v2740 = vadd.f32 %v2669, %v2739
    %2741 = vdwg.mxu0
    %v2742 = vadd.f32 %v2738, %v114
    %v2743 = vadd.f32 %v2740, %v118
    %v2745 = vsel %vm122, %v2598, 0
    %2747 = vmatprep.subr.mxu0 %v62
    %2748 = vmatpush1.msra.mxu0 %v61
    %2749 = vmatprep.subr.mxu0 %v64
    %2750 = vmatpush1.msra.mxu0 %v63
    %2751 = vmatprep.subr.mxu0 %v66
    %2752 = vmatpush1.msra.mxu0 %v65
    %2753 = vmatprep.subr.mxu0 %v68
    %2754 = vmatpush1.msra.mxu0 %v67
    %2755 = vmatprep.subr.mxu0 %v70
    %2756 = vmatpush1.msra.mxu0 %v69
    %2757 = vmatprep.subr.mxu0 %v72
    %2758 = vmatpush1.msra.mxu0 %v71
    %2759 = vmatprep.subr.mxu0 %v74
    %2760 = vmatpush1.msra.mxu0 %v73
    %2761 = vmatprep.subr.mxu0 %v76
    %2762 = vmatpush1.msra.mxu0 %v75
    %2763 = vmatprep.subr.mxu0 0.0
    %2764 = vmatpush1.msra.mxu0 0.0
    %2765 = vmatprep.subr.mxu0 0.0
    %2766 = vmatpush1.msra.mxu0 0.0
    %2767 = vmatprep.subr.mxu0 0.0
    %2768 = vmatpush1.msra.mxu0 0.0
    %2769 = vmatprep.subr.mxu0 0.0
    %2770 = vmatpush1.msra.mxu0 0.0
    %2771 = vmatprep.subr.mxu0 0.0
    %2772 = vmatpush1.msra.mxu0 0.0
    %2773 = vmatprep.subr.mxu0 0.0
    %2774 = vmatpush1.msra.mxu0 0.0
    %2775 = vmatprep.subr.mxu0 0.0
    %2776 = vmatpush1.msra.mxu0 0.0
    %2777 = vmatprep.subr.mxu0 0.0
    %2778 = vmatpush1.msra.mxu0 0.0
    %2779 = vmatprep.subr.mxu0 0.0
    %2780 = vmatpush1.msra.mxu0 0.0
    %2781 = vmatprep.subr.mxu0 0.0
    %2782 = vmatpush1.msra.mxu0 0.0
    %2783 = vmatprep.subr.mxu0 0.0
    %2784 = vmatpush1.msra.mxu0 0.0
    %2785 = vmatprep.subr.mxu0 0.0
    %2786 = vmatpush1.msra.mxu0 0.0
    %2787 = vmatprep.subr.mxu0 0.0
    %2788 = vmatpush1.msra.mxu0 0.0
    %2789 = vmatprep.subr.mxu0 0.0
    %2790 = vmatpush1.msra.mxu0 0.0
    %2791 = vmatprep.subr.mxu0 0.0
    %2792 = vmatpush1.msra.mxu0 0.0
    %2793 = vmatprep.subr.mxu0 0.0
    %2794 = vmatpush1.msra.mxu0 0.0
    %2795 = vmatprep.subr.mxu0 0.0
    %2796 = vmatpush1.msra.mxu0 0.0
    %2797 = vmatprep.subr.mxu0 0.0
    %2798 = vmatpush1.msra.mxu0 0.0
    %2799 = vmatprep.subr.mxu0 0.0
    %2800 = vmatpush1.msra.mxu0 0.0
    %2801 = vmatprep.subr.mxu0 0.0
    %2802 = vmatpush1.msra.mxu0 0.0
    %2803 = vmatprep.subr.mxu0 0.0
    %2804 = vmatpush1.msra.mxu0 0.0
    %2805 = vmatprep.subr.mxu0 0.0
    %2806 = vmatpush1.msra.mxu0 0.0
    %2807 = vmatprep.subr.mxu0 0.0
    %2808 = vmatpush1.msra.mxu0 0.0
    %2809 = vmatprep.subr.mxu0 0.0
    %2810 = vmatpush1.msra.mxu0 0.0
    %2811 = vmatprep.mubr.f32.mxu0 0.0
    %2812 = vmatmul.mubr.f32.gmra.mrb[0].mxu0 %v2745
    %v2813 = vpop.f32.mrb[0].mxu0
    %v2814 = vadd.f32 0.0, %v2813
    %v2815 = vpop.f32.mrb[0].mxu0
    %v2816 = vadd.f32 0.0, %v2815
    %2817 = vdwg.mxu0
    %v2818 = vadd.f32 %v2742, %v2814
    %v2819 = vadd.f32 %v2743, %v2816
    %v2820 = vxor.u32 %v2818, 2147483648
    %v2821 = vxor.u32 %v2819, 2147483648
    %v2822 = vmul.f32 %v2820, 1.442695
    %v2823 = vpow.pop %v2822
    %v2824 = vmul.f32 %v2821, 1.442695
    %v2825 = vpow.pop %v2824
    %v2826 = vadd.f32 %v2823, 1.0
    %v2827 = vadd.f32 %v2825, 1.0
    %v2828 = vrcp.pop %v2826
    %v2829 = vmul.f32 1.0, %v2828
    %v2830 = vrcp.pop %v2827
    %v2831 = vmul.f32 1.0, %v2830
    %v2832 = vtanh.pop %v2819
    %v2833 = vmul.f32 %v2829, %v2592
    %2835 = vrot.lane.b32.xlu0 %v2832, 64
    %v2836 = vpop.permute.xlu0 %2835
    %v2838 = vmul.f32 %v2829, %v2836
    %2840 = vrot.lane.b32.xlu0 %v2838, 64
    %v2841 = vpop.permute.xlu0 %2840
    %v2843 = vadd.f32 %v2833, %v2841
    %v2844 = vtanh.pop %v2843
    %2846 = vrot.lane.b32.xlu0 %v2844, 64
    %v2847 = vpop.permute.xlu0 %2846
    %v2849 = vmul.f32 %v2831, %v2847
    %v2850 = vadd.f32 %v2599, %v2849
    %2851 = vmatprep.subr.mxu0 %v94
    %2852 = vmatpush1.msra.mxu0 %v93
    %2853 = vmatprep.subr.mxu0 %v96
    %2854 = vmatpush1.msra.mxu0 %v95
    %2855 = vmatprep.subr.mxu0 %v98
    %2856 = vmatpush1.msra.mxu0 %v97
    %2857 = vmatprep.subr.mxu0 %v100
    %2858 = vmatpush1.msra.mxu0 %v99
    %2859 = vmatprep.subr.mxu0 %v102
    %2860 = vmatpush1.msra.mxu0 %v101
    %2861 = vmatprep.subr.mxu0 %v104
    %2862 = vmatpush1.msra.mxu0 %v103
    %2863 = vmatprep.subr.mxu0 %v106
    %2864 = vmatpush1.msra.mxu0 %v105
    %2865 = vmatprep.subr.mxu0 %v108
    %2866 = vmatpush1.msra.mxu0 %v107
    %2867 = vmatprep.subr.mxu0 0.0
    %2868 = vmatpush1.msra.mxu0 0.0
    %2869 = vmatprep.subr.mxu0 0.0
    %2870 = vmatpush1.msra.mxu0 0.0
    %2871 = vmatprep.subr.mxu0 0.0
    %2872 = vmatpush1.msra.mxu0 0.0
    %2873 = vmatprep.subr.mxu0 0.0
    %2874 = vmatpush1.msra.mxu0 0.0
    %2875 = vmatprep.subr.mxu0 0.0
    %2876 = vmatpush1.msra.mxu0 0.0
    %2877 = vmatprep.subr.mxu0 0.0
    %2878 = vmatpush1.msra.mxu0 0.0
    %2879 = vmatprep.subr.mxu0 0.0
    %2880 = vmatpush1.msra.mxu0 0.0
    %2881 = vmatprep.subr.mxu0 0.0
    %2882 = vmatpush1.msra.mxu0 0.0
    %2883 = vmatprep.subr.mxu0 0.0
    %2884 = vmatpush1.msra.mxu0 0.0
    %2885 = vmatprep.subr.mxu0 0.0
    %2886 = vmatpush1.msra.mxu0 0.0
    %2887 = vmatprep.subr.mxu0 0.0
    %2888 = vmatpush1.msra.mxu0 0.0
    %2889 = vmatprep.subr.mxu0 0.0
    %2890 = vmatpush1.msra.mxu0 0.0
    %2891 = vmatprep.subr.mxu0 0.0
    %2892 = vmatpush1.msra.mxu0 0.0
    %2893 = vmatprep.subr.mxu0 0.0
    %2894 = vmatpush1.msra.mxu0 0.0
    %2895 = vmatprep.subr.mxu0 0.0
    %2896 = vmatpush1.msra.mxu0 0.0
    %2897 = vmatprep.subr.mxu0 0.0
    %2898 = vmatpush1.msra.mxu0 0.0
    %2899 = vmatprep.subr.mxu0 0.0
    %2900 = vmatpush1.msra.mxu0 0.0
    %2901 = vmatprep.subr.mxu0 0.0
    %2902 = vmatpush1.msra.mxu0 0.0
    %2903 = vmatprep.subr.mxu0 0.0
    %2904 = vmatpush1.msra.mxu0 0.0
    %2905 = vmatprep.subr.mxu0 0.0
    %2906 = vmatpush1.msra.mxu0 0.0
    %2907 = vmatprep.subr.mxu0 0.0
    %2908 = vmatpush1.msra.mxu0 0.0
    %2909 = vmatprep.subr.mxu0 0.0
    %2910 = vmatpush1.msra.mxu0 0.0
    %2911 = vmatprep.subr.mxu0 0.0
    %2912 = vmatpush1.msra.mxu0 0.0
    %2913 = vmatprep.subr.mxu0 0.0
    %2914 = vmatpush1.msra.mxu0 0.0
    %2915 = vmatprep.mubr.f32.mxu0 0.0
    %2916 = vmatmul.mubr.f32.gmra.mrb[0].mxu0 %v1142
    %v2917 = vpop.f32.mrb[0].mxu0
    %v2918 = vadd.f32 0.0, %v2917
    %v2919 = vpop.f32.mrb[0].mxu0
    %v2920 = vadd.f32 0.0, %v2919
    %2921 = vdwg.mxu0
    %2922 = vmatprep.subr.mxu0 %v78
    %2923 = vmatpush1.msra.mxu0 %v77
    %2924 = vmatprep.subr.mxu0 %v80
    %2925 = vmatpush1.msra.mxu0 %v79
    %2926 = vmatprep.subr.mxu0 %v82
    %2927 = vmatpush1.msra.mxu0 %v81
    %2928 = vmatprep.subr.mxu0 %v84
    %2929 = vmatpush1.msra.mxu0 %v83
    %2930 = vmatprep.subr.mxu0 %v86
    %2931 = vmatpush1.msra.mxu0 %v85
    %2932 = vmatprep.subr.mxu0 %v88
    %2933 = vmatpush1.msra.mxu0 %v87
    %2934 = vmatprep.subr.mxu0 %v90
    %2935 = vmatpush1.msra.mxu0 %v89
    %2936 = vmatprep.subr.mxu0 %v92
    %2937 = vmatpush1.msra.mxu0 %v91
    %2938 = vmatprep.subr.mxu0 0.0
    %2939 = vmatpush1.msra.mxu0 0.0
    %2940 = vmatprep.subr.mxu0 0.0
    %2941 = vmatpush1.msra.mxu0 0.0
    %2942 = vmatprep.subr.mxu0 0.0
    %2943 = vmatpush1.msra.mxu0 0.0
    %2944 = vmatprep.subr.mxu0 0.0
    %2945 = vmatpush1.msra.mxu0 0.0
    %2946 = vmatprep.subr.mxu0 0.0
    %2947 = vmatpush1.msra.mxu0 0.0
    %2948 = vmatprep.subr.mxu0 0.0
    %2949 = vmatpush1.msra.mxu0 0.0
    %2950 = vmatprep.subr.mxu0 0.0
    %2951 = vmatpush1.msra.mxu0 0.0
    %2952 = vmatprep.subr.mxu0 0.0
    %2953 = vmatpush1.msra.mxu0 0.0
    %2954 = vmatprep.subr.mxu0 0.0
    %2955 = vmatpush1.msra.mxu0 0.0
    %2956 = vmatprep.subr.mxu0 0.0
    %2957 = vmatpush1.msra.mxu0 0.0
    %2958 = vmatprep.subr.mxu0 0.0
    %2959 = vmatpush1.msra.mxu0 0.0
    %2960 = vmatprep.subr.mxu0 0.0
    %2961 = vmatpush1.msra.mxu0 0.0
    %2962 = vmatprep.subr.mxu0 0.0
    %2963 = vmatpush1.msra.mxu0 0.0
    %2964 = vmatprep.subr.mxu0 0.0
    %2965 = vmatpush1.msra.mxu0 0.0
    %2966 = vmatprep.subr.mxu0 0.0
    %2967 = vmatpush1.msra.mxu0 0.0
    %2968 = vmatprep.subr.mxu0 0.0
    %2969 = vmatpush1.msra.mxu0 0.0
    %2970 = vmatprep.subr.mxu0 0.0
    %2971 = vmatpush1.msra.mxu0 0.0
    %2972 = vmatprep.subr.mxu0 0.0
    %2973 = vmatpush1.msra.mxu0 0.0
    %2974 = vmatprep.subr.mxu0 0.0
    %2975 = vmatpush1.msra.mxu0 0.0
    %2976 = vmatprep.subr.mxu0 0.0
    %2977 = vmatpush1.msra.mxu0 0.0
    %2978 = vmatprep.subr.mxu0 0.0
    %2979 = vmatpush1.msra.mxu0 0.0
    %2980 = vmatprep.subr.mxu0 0.0
    %2981 = vmatpush1.msra.mxu0 0.0
    %2982 = vmatprep.subr.mxu0 0.0
    %2983 = vmatpush1.msra.mxu0 0.0
    %2984 = vmatprep.subr.mxu0 0.0
    %2985 = vmatpush1.msra.mxu0 0.0
    %2986 = vmatprep.mubr.f32.mxu0 0.0
    %2987 = vmatmul.mubr.f32.gmra.mrb[0].mxu0 %v1068
    %v2988 = vpop.f32.mrb[0].mxu0
    %v2989 = vadd.f32 %v2918, %v2988
    %v2990 = vpop.f32.mrb[0].mxu0
    %v2991 = vadd.f32 %v2920, %v2990
    %2992 = vdwg.mxu0
    %v2993 = vadd.f32 %v2989, %v114
    %v2994 = vadd.f32 %v2991, %v118
    %v2996 = vsel %vm122, %v2849, 0
    %2998 = vmatprep.subr.mxu0 %v62
    %2999 = vmatpush1.msra.mxu0 %v61
    %3000 = vmatprep.subr.mxu0 %v64
    %3001 = vmatpush1.msra.mxu0 %v63
    %3002 = vmatprep.subr.mxu0 %v66
    %3003 = vmatpush1.msra.mxu0 %v65
    %3004 = vmatprep.subr.mxu0 %v68
    %3005 = vmatpush1.msra.mxu0 %v67
    %3006 = vmatprep.subr.mxu0 %v70
    %3007 = vmatpush1.msra.mxu0 %v69
    %3008 = vmatprep.subr.mxu0 %v72
    %3009 = vmatpush1.msra.mxu0 %v71
    %3010 = vmatprep.subr.mxu0 %v74
    %3011 = vmatpush1.msra.mxu0 %v73
    %3012 = vmatprep.subr.mxu0 %v76
    %3013 = vmatpush1.msra.mxu0 %v75
    %3014 = vmatprep.subr.mxu0 0.0
    %3015 = vmatpush1.msra.mxu0 0.0
    %3016 = vmatprep.subr.mxu0 0.0
    %3017 = vmatpush1.msra.mxu0 0.0
    %3018 = vmatprep.subr.mxu0 0.0
    %3019 = vmatpush1.msra.mxu0 0.0
    %3020 = vmatprep.subr.mxu0 0.0
    %3021 = vmatpush1.msra.mxu0 0.0
    %3022 = vmatprep.subr.mxu0 0.0
    %3023 = vmatpush1.msra.mxu0 0.0
    %3024 = vmatprep.subr.mxu0 0.0
    %3025 = vmatpush1.msra.mxu0 0.0
    %3026 = vmatprep.subr.mxu0 0.0
    %3027 = vmatpush1.msra.mxu0 0.0
    %3028 = vmatprep.subr.mxu0 0.0
    %3029 = vmatpush1.msra.mxu0 0.0
    %3030 = vmatprep.subr.mxu0 0.0
    %3031 = vmatpush1.msra.mxu0 0.0
    %3032 = vmatprep.subr.mxu0 0.0
    %3033 = vmatpush1.msra.mxu0 0.0
    %3034 = vmatprep.subr.mxu0 0.0
    %3035 = vmatpush1.msra.mxu0 0.0
    %3036 = vmatprep.subr.mxu0 0.0
    %3037 = vmatpush1.msra.mxu0 0.0
    %3038 = vmatprep.subr.mxu0 0.0
    %3039 = vmatpush1.msra.mxu0 0.0
    %3040 = vmatprep.subr.mxu0 0.0
    %3041 = vmatpush1.msra.mxu0 0.0
    %3042 = vmatprep.subr.mxu0 0.0
    %3043 = vmatpush1.msra.mxu0 0.0
    %3044 = vmatprep.subr.mxu0 0.0
    %3045 = vmatpush1.msra.mxu0 0.0
    %3046 = vmatprep.subr.mxu0 0.0
    %3047 = vmatpush1.msra.mxu0 0.0
    %3048 = vmatprep.subr.mxu0 0.0
    %3049 = vmatpush1.msra.mxu0 0.0
    %3050 = vmatprep.subr.mxu0 0.0
    %3051 = vmatpush1.msra.mxu0 0.0
    %3052 = vmatprep.subr.mxu0 0.0
    %3053 = vmatpush1.msra.mxu0 0.0
    %3054 = vmatprep.subr.mxu0 0.0
    %3055 = vmatpush1.msra.mxu0 0.0
    %3056 = vmatprep.subr.mxu0 0.0
    %3057 = vmatpush1.msra.mxu0 0.0
    %3058 = vmatprep.subr.mxu0 0.0
    %3059 = vmatpush1.msra.mxu0 0.0
    %3060 = vmatprep.subr.mxu0 0.0
    %3061 = vmatpush1.msra.mxu0 0.0
    %3062 = vmatprep.mubr.f32.mxu0 0.0
    %3063 = vmatmul.mubr.f32.gmra.mrb[0].mxu0 %v2996
    %v3064 = vpop.f32.mrb[0].mxu0
    %v3065 = vadd.f32 0.0, %v3064
    %v3066 = vpop.f32.mrb[0].mxu0
    %v3067 = vadd.f32 0.0, %v3066
    %3068 = vdwg.mxu0
    %v3069 = vadd.f32 %v2993, %v3065
    %v3070 = vadd.f32 %v2994, %v3067
    %v3071 = vxor.u32 %v3069, 2147483648
    %v3072 = vxor.u32 %v3070, 2147483648
    %v3073 = vmul.f32 %v3071, 1.442695
    %v3074 = vpow.pop %v3073
    %v3075 = vmul.f32 %v3072, 1.442695
    %v3076 = vpow.pop %v3075
    %v3077 = vadd.f32 %v3074, 1.0
    %v3078 = vadd.f32 %v3076, 1.0
    %v3079 = vrcp.pop %v3077
    %v3080 = vmul.f32 1.0, %v3079
    %v3081 = vrcp.pop %v3078
    %v3082 = vmul.f32 1.0, %v3081
    %v3083 = vtanh.pop %v3070
    %v3084 = vmul.f32 %v3080, %v2843
    %3086 = vrot.lane.b32.xlu0 %v3083, 64
    %v3087 = vpop.permute.xlu0 %3086
    %v3089 = vmul.f32 %v3080, %v3087
    %3091 = vrot.lane.b32.xlu0 %v3089, 64
    %v3092 = vpop.permute.xlu0 %3091
    %v3094 = vadd.f32 %v3084, %v3092
    %v3095 = vtanh.pop %v3094
    %3097 = vrot.lane.b32.xlu0 %v3095, 64
    %v3098 = vpop.permute.xlu0 %3097
    %v3100 = vmul.f32 %v3082, %v3098
    %v3101 = vadd.f32 %v2850, %v3100
    %v3102 = vld [vmem:[%s1] sm:$0xff]
    %v3103 = vld [vmem:[%s1 + $0x8] sm:$0xff]
    %v3104 = vsel %vm122, %v3102, 0.0
    %v3105 = vrot.slane %v3104, 4
    %v3106 = vadd.f32 %v3104, %v3105
    %v3107 = vrot.slane %v3106, 2
    %v3108 = vadd.f32 %v3106, %v3107
    %v3109 = vrot.slane %v3108, 1
    %v3110 = vadd.f32 %v3108, %v3109
    %v3111 = vsel %vm122, %v3103, 0.0
    %v3112 = vrot.slane %v3111, 4
    %v3113 = vadd.f32 %v3111, %v3112
    %v3114 = vrot.slane %v3113, 2
    %v3115 = vadd.f32 %v3113, %v3114
    %v3116 = vrot.slane %v3115, 1
    %v3117 = vadd.f32 %v3115, %v3116
    %vm3120 = vcmask 1041409
    %v3121 = vsel %vm3120, %v3117, %v3110
    %3122 = vrot.lane.b32.xlu0 %v3121, 64
    %v3123 = vpop.permute.xlu0 %3122
    %v3125 = vsel %vm122, %v3101, %v3123
    %v3126 = vld [vmem:[%s7] sm:$0xff]
    %v3127 = vld [vmem:[%s7 + $0x8] sm:$0xff]
    %v3128 = vld [vmem:[%s7 + $0x10] sm:$0xff]
    %v3129 = vld [vmem:[%s7 + $0x18] sm:$0xff]
    %v3130 = vld [vmem:[%s7 + $0x20] sm:$0xff]
    %v3131 = vld [vmem:[%s7 + $0x28] sm:$0xff]
    %v3132 = vld [vmem:[%s7 + $0x30] sm:$0xff]
    %v3133 = vld [vmem:[%s7 + $0x38] sm:$0xff]
    %v3134 = vld [vmem:[%s7 + $0x40] sm:$0xff]
    %v3135 = vld [vmem:[%s7 + $0x48] sm:$0xff]
    %v3136 = vld [vmem:[%s7 + $0x50] sm:$0xff]
    %v3137 = vld [vmem:[%s7 + $0x58] sm:$0xff]
    %v3138 = vld [vmem:[%s7 + $0x60] sm:$0xff]
    %v3139 = vld [vmem:[%s7 + $0x68] sm:$0xff]
    %v3140 = vld [vmem:[%s7 + $0x70] sm:$0xff]
    %v3141 = vld [vmem:[%s7 + $0x78] sm:$0xff]
    %v3142 = vld [vmem:[%s8] sm:$0x1]
    %v3144 = vlaneseq
    %v3145 = vshrl.u32 %v3144, 7
    %v3146 = vsub.s32 0, %v3145
    %v3147 = vrot.slane %v3142, %v3146
    %3149 = vmatprep.subr.mxu0 0.0
    %3150 = vmatpush1.msra.mxu0 %v3126
    %3151 = vmatprep.subr.mxu0 0.0
    %3152 = vmatpush1.msra.mxu0 %v3127
    %3153 = vmatprep.subr.mxu0 0.0
    %3154 = vmatpush1.msra.mxu0 %v3128
    %3155 = vmatprep.subr.mxu0 0.0
    %3156 = vmatpush1.msra.mxu0 %v3129
    %3157 = vmatprep.subr.mxu0 0.0
    %3158 = vmatpush1.msra.mxu0 %v3130
    %3159 = vmatprep.subr.mxu0 0.0
    %3160 = vmatpush1.msra.mxu0 %v3131
    %3161 = vmatprep.subr.mxu0 0.0
    %3162 = vmatpush1.msra.mxu0 %v3132
    %3163 = vmatprep.subr.mxu0 0.0
    %3164 = vmatpush1.msra.mxu0 %v3133
    %3165 = vmatprep.subr.mxu0 0.0
    %3166 = vmatpush1.msra.mxu0 %v3134
    %3167 = vmatprep.subr.mxu0 0.0
    %3168 = vmatpush1.msra.mxu0 %v3135
    %3169 = vmatprep.subr.mxu0 0.0
    %3170 = vmatpush1.msra.mxu0 %v3136
    %3171 = vmatprep.subr.mxu0 0.0
    %3172 = vmatpush1.msra.mxu0 %v3137
    %3173 = vmatprep.subr.mxu0 0.0
    %3174 = vmatpush1.msra.mxu0 %v3138
    %3175 = vmatprep.subr.mxu0 0.0
    %3176 = vmatpush1.msra.mxu0 %v3139
    %3177 = vmatprep.subr.mxu0 0.0
    %3178 = vmatpush1.msra.mxu0 %v3140
    %3179 = vmatprep.subr.mxu0 0.0
    %3180 = vmatpush1.msra.mxu0 %v3141
    %3181 = vmatprep.subr.mxu0 0.0
    %3182 = vmatpush1.msra.mxu0 0.0
    %3183 = vmatprep.subr.mxu0 0.0
    %3184 = vmatpush1.msra.mxu0 0.0
    %3185 = vmatprep.subr.mxu0 0.0
    %3186 = vmatpush1.msra.mxu0 0.0
    %3187 = vmatprep.subr.mxu0 0.0
    %3188 = vmatpush1.msra.mxu0 0.0
    %3189 = vmatprep.subr.mxu0 0.0
    %3190 = vmatpush1.msra.mxu0 0.0
    %3191 = vmatprep.subr.mxu0 0.0
    %3192 = vmatpush1.msra.mxu0 0.0
    %3193 = vmatprep.subr.mxu0 0.0
    %3194 = vmatpush1.msra.mxu0 0.0
    %3195 = vmatprep.subr.mxu0 0.0
    %3196 = vmatpush1.msra.mxu0 0.0
    %3197 = vmatprep.subr.mxu0 0.0
    %3198 = vmatpush1.msra.mxu0 0.0
    %3199 = vmatprep.subr.mxu0 0.0
    %3200 = vmatpush1.msra.mxu0 0.0
    %3201 = vmatprep.subr.mxu0 0.0
    %3202 = vmatpush1.msra.mxu0 0.0
    %3203 = vmatprep.subr.mxu0 0.0
    %3204 = vmatpush1.msra.mxu0 0.0
    %3205 = vmatprep.subr.mxu0 0.0
    %3206 = vmatpush1.msra.mxu0 0.0
    %3207 = vmatprep.subr.mxu0 0.0
    %3208 = vmatpush1.msra.mxu0 0.0
    %3209 = vmatprep.subr.mxu0 0.0
    %3210 = vmatpush1.msra.mxu0 0.0
    %3211 = vmatprep.subr.mxu0 0.0
    %3212 = vmatpush1.msra.mxu0 0.0
    %3213 = vmatprep.mubr.f32.mxu0 0.0
    %3214 = vmatmul.mubr.f32.gmra.mrb[0].mxu0 %v3125
    %v3215 = vpop.f32.mrb[0].mxu0
    %v3216 = vadd.f32 %v3147, %v3215
    %v3217 = vpop.f32.mrb[0].mxu0
    %3218 = vdwg.mxu0
    %v3219 = vld [vmem:[%s9] sm:$0xff]
    %v3220 = vld [vmem:[%s9 + $0x8] sm:$0xff]
    %v3221 = vld [vmem:[%s9 + $0x10] sm:$0xff]
    %v3222 = vld [vmem:[%s9 + $0x18] sm:$0xff]
    %v3223 = vld [vmem:[%s9 + $0x20] sm:$0xff]
    %v3224 = vld [vmem:[%s9 + $0x28] sm:$0xff]
    %v3225 = vld [vmem:[%s9 + $0x30] sm:$0xff]
    %v3226 = vld [vmem:[%s9 + $0x38] sm:$0xff]
    %v3227 = vld [vmem:[%s10] sm:$0x1]
    %v3229 = vlaneseq
    %v3230 = vshrl.u32 %v3229, 7
    %v3231 = vsub.s32 0, %v3230
    %v3232 = vrot.slane %v3227, %v3231
    %v3235 = vsel %vm122, %v3216, 0
    %3237 = vmatprep.subr.mxu0 0.0
    %3238 = vmatpush1.msra.mxu0 %v3219
    %3239 = vmatprep.subr.mxu0 0.0
    %3240 = vmatpush1.msra.mxu0 %v3220
    %3241 = vmatprep.subr.mxu0 0.0
    %3242 = vmatpush1.msra.mxu0 %v3221
    %3243 = vmatprep.subr.mxu0 0.0
    %3244 = vmatpush1.msra.mxu0 %v3222
    %3245 = vmatprep.subr.mxu0 0.0
    %3246 = vmatpush1.msra.mxu0 %v3223
    %3247 = vmatprep.subr.mxu0 0.0
    %3248 = vmatpush1.msra.mxu0 %v3224
    %3249 = vmatprep.subr.mxu0 0.0
    %3250 = vmatpush1.msra.mxu0 %v3225
    %3251 = vmatprep.subr.mxu0 0.0
    %3252 = vmatpush1.msra.mxu0 %v3226
    %3253 = vmatprep.subr.mxu0 0.0
    %3254 = vmatpush1.msra.mxu0 0.0
    %3255 = vmatprep.subr.mxu0 0.0
    %3256 = vmatpush1.msra.mxu0 0.0
    %3257 = vmatprep.subr.mxu0 0.0
    %3258 = vmatpush1.msra.mxu0 0.0
    %3259 = vmatprep.subr.mxu0 0.0
    %3260 = vmatpush1.msra.mxu0 0.0
    %3261 = vmatprep.subr.mxu0 0.0
    %3262 = vmatpush1.msra.mxu0 0.0
    %3263 = vmatprep.subr.mxu0 0.0
    %3264 = vmatpush1.msra.mxu0 0.0
    %3265 = vmatprep.subr.mxu0 0.0
    %3266 = vmatpush1.msra.mxu0 0.0
    %3267 = vmatprep.subr.mxu0 0.0
    %3268 = vmatpush1.msra.mxu0 0.0
    %3269 = vmatprep.subr.mxu0 0.0
    %3270 = vmatpush1.msra.mxu0 0.0
    %3271 = vmatprep.subr.mxu0 0.0
    %3272 = vmatpush1.msra.mxu0 0.0
    %3273 = vmatprep.subr.mxu0 0.0
    %3274 = vmatpush1.msra.mxu0 0.0
    %3275 = vmatprep.subr.mxu0 0.0
    %3276 = vmatpush1.msra.mxu0 0.0
    %3277 = vmatprep.subr.mxu0 0.0
    %3278 = vmatpush1.msra.mxu0 0.0
    %3279 = vmatprep.subr.mxu0 0.0
    %3280 = vmatpush1.msra.mxu0 0.0
    %3281 = vmatprep.subr.mxu0 0.0
    %3282 = vmatpush1.msra.mxu0 0.0
    %3283 = vmatprep.subr.mxu0 0.0
    %3284 = vmatpush1.msra.mxu0 0.0
    %3285 = vmatprep.subr.mxu0 0.0
    %3286 = vmatpush1.msra.mxu0 0.0
    %3287 = vmatprep.subr.mxu0 0.0
    %3288 = vmatpush1.msra.mxu0 0.0
    %3289 = vmatprep.subr.mxu0 0.0
    %3290 = vmatpush1.msra.mxu0 0.0
    %3291 = vmatprep.subr.mxu0 0.0
    %3292 = vmatpush1.msra.mxu0 0.0
    %3293 = vmatprep.subr.mxu0 0.0
    %3294 = vmatpush1.msra.mxu0 0.0
    %3295 = vmatprep.subr.mxu0 0.0
    %3296 = vmatpush1.msra.mxu0 0.0
    %3297 = vmatprep.subr.mxu0 0.0
    %3298 = vmatpush1.msra.mxu0 0.0
    %3299 = vmatprep.subr.mxu0 0.0
    %3300 = vmatpush1.msra.mxu0 0.0
    %3301 = vmatprep.mubr.f32.mxu0 0.0
    %3302 = vmatmul.mubr.f32.gmra.mrb[0].mxu0 %v3235
    %v3303 = vpop.f32.mrb[0].mxu0
    %v3304 = vadd.f32 %v3232, %v3303
    %v3305 = vpop.f32.mrb[0].mxu0
    %3306 = vdwg.mxu0
    %v3307 = vmax.f32 %v3304, 0.0
    %v3308 = vld [vmem:[%s11] sm:$0xff]
    %v3309 = vld [vmem:[%s11 + $0x8] sm:$0xff]
    %v3310 = vld [vmem:[%s11 + $0x10] sm:$0xff]
    %v3311 = vld [vmem:[%s11 + $0x18] sm:$0xff]
    %v3312 = vld [vmem:[%s12] sm:$0x1]
    %v3314 = vlaneseq
    %v3315 = vshrl.u32 %v3314, 7
    %v3316 = vsub.s32 0, %v3315
    %v3317 = vrot.slane %v3312, %v3316
    %vm3319 = vcmask 261120
    %v3321 = vsel %vm3319, %v3307, 0
    %3323 = vmatprep.subr.mxu0 0.0
    %3324 = vmatpush1.msra.mxu0 %v3308
    %3325 = vmatprep.subr.mxu0 0.0
    %3326 = vmatpush1.msra.mxu0 %v3309
    %3327 = vmatprep.subr.mxu0 0.0
    %3328 = vmatpush1.msra.mxu0 %v3310
    %3329 = vmatprep.subr.mxu0 0.0
    %3330 = vmatpush1.msra.mxu0 %v3311
    %3331 = vmatprep.subr.mxu0 0.0
    %3332 = vmatpush1.msra.mxu0 0.0
    %3333 = vmatprep.subr.mxu0 0.0
    %3334 = vmatpush1.msra.mxu0 0.0
    %3335 = vmatprep.subr.mxu0 0.0
    %3336 = vmatpush1.msra.mxu0 0.0
    %3337 = vmatprep.subr.mxu0 0.0
    %3338 = vmatpush1.msra.mxu0 0.0
    %3339 = vmatprep.subr.mxu0 0.0
    %3340 = vmatpush1.msra.mxu0 0.0
    %3341 = vmatprep.subr.mxu0 0.0
    %3342 = vmatpush1.msra.mxu0 0.0
    %3343 = vmatprep.subr.mxu0 0.0
    %3344 = vmatpush1.msra.mxu0 0.0
    %3345 = vmatprep.subr.mxu0 0.0
    %3346 = vmatpush1.msra.mxu0 0.0
    %3347 = vmatprep.subr.mxu0 0.0
    %3348 = vmatpush1.msra.mxu0 0.0
    %3349 = vmatprep.subr.mxu0 0.0
    %3350 = vmatpush1.msra.mxu0 0.0
    %3351 = vmatprep.subr.mxu0 0.0
    %3352 = vmatpush1.msra.mxu0 0.0
    %3353 = vmatprep.subr.mxu0 0.0
    %3354 = vmatpush1.msra.mxu0 0.0
    %3355 = vmatprep.subr.mxu0 0.0
    %3356 = vmatpush1.msra.mxu0 0.0
    %3357 = vmatprep.subr.mxu0 0.0
    %3358 = vmatpush1.msra.mxu0 0.0
    %3359 = vmatprep.subr.mxu0 0.0
    %3360 = vmatpush1.msra.mxu0 0.0
    %3361 = vmatprep.subr.mxu0 0.0
    %3362 = vmatpush1.msra.mxu0 0.0
    %3363 = vmatprep.subr.mxu0 0.0
    %3364 = vmatpush1.msra.mxu0 0.0
    %3365 = vmatprep.subr.mxu0 0.0
    %3366 = vmatpush1.msra.mxu0 0.0
    %3367 = vmatprep.subr.mxu0 0.0
    %3368 = vmatpush1.msra.mxu0 0.0
    %3369 = vmatprep.subr.mxu0 0.0
    %3370 = vmatpush1.msra.mxu0 0.0
    %3371 = vmatprep.subr.mxu0 0.0
    %3372 = vmatpush1.msra.mxu0 0.0
    %3373 = vmatprep.subr.mxu0 0.0
    %3374 = vmatpush1.msra.mxu0 0.0
    %3375 = vmatprep.subr.mxu0 0.0
    %3376 = vmatpush1.msra.mxu0 0.0
    %3377 = vmatprep.subr.mxu0 0.0
    %3378 = vmatpush1.msra.mxu0 0.0
    %3379 = vmatprep.subr.mxu0 0.0
    %3380 = vmatpush1.msra.mxu0 0.0
    %3381 = vmatprep.subr.mxu0 0.0
    %3382 = vmatpush1.msra.mxu0 0.0
    %3383 = vmatprep.subr.mxu0 0.0
    %3384 = vmatpush1.msra.mxu0 0.0
    %3385 = vmatprep.subr.mxu0 0.0
    %3386 = vmatpush1.msra.mxu0 0.0
    %3387 = vmatprep.mubr.f32.mxu0 0.0
    %3388 = vmatmul.mubr.f32.gmra.mrb[0].mxu0 %v3321
    %v3389 = vpop.f32.mrb[0].mxu0
    %v3390 = vadd.f32 %v3317, %v3389
    %v3391 = vpop.f32.mrb[0].mxu0
    %3392 = vdwg.mxu0
    %vm3393 = vcmask 25600
    %3394 = vst.msk [vmem:[#allocation3] sm:$0x3] %vm3393, %v3390
    // Predicated region
    $region54: #{wordlevel_encoder.1} parent=1 // pred_check
      _
    $region55: #{wordlevel_encoder.1} parent=1 // pred_check_branch
      %3396 = sbr.rel (0) target = $region57
    $region56: #{wordlevel_encoder.1} parent=1 // pred_region
      %s3398 = ssub.s32 32, 32
      %3399 = vsyncadd [#allocation4], %s3398
      %s3401 = sshll.u32 [#allocation3], 4
      %s3402 = int_to_ptr.vmem [resolvable:$true] %s3401
      %3404 = dma.vmem_to_hbm [thread:$0]  %s3402, 32, %s13, [#allocation4]
    $region57: #{wordlevel_encoder.1} parent=1 // pred_fallthru
      _
    // Predicated region
    $region58: #{wordlevel_encoder.1} parent=1 // pred_check
      _
    $region59: #{wordlevel_encoder.1} parent=1 // pred_check_branch
      %3406 = sbr.rel (0) target = $region61
    $region60: #{wordlevel_encoder.1} parent=1 // pred_region
      %3407 = dma.done [#allocation4], 32
    $region61: #{wordlevel_encoder.1} parent=1 // pred_fallthru
      _
    %3408 = vsyncpa [#allocation4], 1

</llo_original>
